<compile_context>
chip_gen: v5e
topology: v5e:2x2
jax: 0.10.0
libtpu: 0.0.40
codegen_flags: <defaults>
</compile_context>

<pallas_src>
import functools
import math

import numpy as np

import jax
import jax.numpy as jnp
from jax import lax
from jax.experimental import pallas as pl
from jax.experimental.pallas import tpu as pltpu


# ----------------------------------------------------------------------------
# Fused kernel
# ----------------------------------------------------------------------------

def _qco_kernel(x_ref, pool_ref, up_ref, e_ref, fA_ref, maskB_ref,
                repql_ref, repq_ref, expA_ref, expB_ref, selq_ref,
                coefql_ref, coefr_ref,
                w1_ref, w2t_ref, wxt_ref, wyt_ref, wo2t_ref, bias_ref,
                o_ref, *, level_num, size_w, batch_block):
    f32 = jnp.float32
    bf16 = jnp.bfloat16
    L = level_num
    LL = L * L
    Q = pool_ref.shape[0]
    P = fA_ref.shape[1]
    QL = Q * L
    R = Q * LL
    shift = size_w + 1

    w1 = w1_ref[...]                       # (3, 64)  f1 weights (VPU stage)
    coefr = coefr_ref[...]                 # (R, 2)   (2*l1+1)/(2L), (2*l2+1)/(2L)
    bias = bias_ref[...]                   # (2, 128) folded BN biases
    b1 = bias[0:1, :]
    b2 = bias[1:2, :]

    y_rows = []                            # per-sample f1 outputs, each (R, 64)
    xbe_rows = []                          # per-sample x_ave out-branch, each (R, 128)

    for bi in range(batch_block):
        x = x_ref[bi]                                                    # (HW, C) f32

        # --- adaptive_avg_pool2d(x, (scale, scale)) ---
        x_ave = jnp.dot(pool_ref[...], x, preferred_element_type=f32)    # (Q, C)

        # --- cosine similarity WITHOUT materializing x_ave_up (HW, C) ---
        # dot every pixel with every block average, then select its own block.
        dots = lax.dot_general(x, x_ave, (((1,), (1,)), ((), ())),
                               preferred_element_type=f32)               # (HW, Q)
        dot_xy = jnp.sum(dots * up_ref[...], axis=-1, keepdims=True)     # (HW, 1)
        nx = jnp.sum(x * x, axis=-1, keepdims=True)                      # (HW, 1)
        navg = jnp.sum(x_ave * x_ave, axis=-1, keepdims=True)            # (Q, 1)
        ny = jnp.dot(up_ref[...], navg, preferred_element_type=f32)      # (HW, 1)
        inv = lax.rsqrt(jnp.maximum(nx, 1e-24)) * lax.rsqrt(jnp.maximum(ny, 1e-24))
        cos_col = dot_xy * inv                                           # (HW, 1)

        # --- gather cos into the (group, position) layout ---
        # TODO(synk): for large H*W replace this O(HW*P) selection gather with a
        # strided re-layout; at these shapes it is negligible.
        cosA = jnp.dot(e_ref[...], cos_col * fA_ref[...],
                       preferred_element_type=f32)                       # (Q, P)

        # --- quantization levels / threshold per group ---
        cmin = jnp.min(cosA, axis=-1, keepdims=True)                     # (Q, 1)
        cmax = jnp.max(cosA, axis=-1, keepdims=True)
        rng = cmax - cmin
        # q_levels_inter == rng / L
        # TODO(synk): level_num == 1 is undefined (reference indexes q_levels[:, :, 1]).
        th = 1.0 - rng * (1.0 / L)                                       # (Q, 1)

        # --- soft quantization at (Q*L, P) (not the full Q*L*L expansion) ---
        cosA2 = jnp.dot(repql_ref[...], cosA, preferred_element_type=f32)   # (QL, P)
        cmin2 = jnp.dot(repql_ref[...], cmin, preferred_element_type=f32)   # (QL, 1)
        rng2 = jnp.dot(repql_ref[...], rng, preferred_element_type=f32)
        th2 = jnp.dot(repql_ref[...], th, preferred_element_type=f32)
        qlev = cmin2 + coefql_ref[...] * rng2                               # (QL, 1)
        dA = 1.0 - jnp.abs(qlev - cosA2)
        qA = jnp.where(dA > th2, dA, 0.0)                                   # (QL, P)

        # --- co-occurrence partner: spatial (+1,+1) shift == lane shift by size_w+1 ---
        qB = jnp.concatenate(
            [qA[:, shift:], jnp.zeros((QL, shift), f32)], axis=-1) * maskB_ref[...]

        # --- expand to (q, l1, l2) rows only for the final product, contract over P ---
        qA_e = jnp.dot(expA_ref[...], qA, preferred_element_type=f32)       # (R, P)
        qB_e = jnp.dot(expB_ref[...], qB, preferred_element_type=f32)       # (R, P)
        sta = jnp.sum(qA_e * qB_e, axis=-1, keepdims=True)                  # (R, 1)
        denom = jnp.dot(selq_ref[...], sta, preferred_element_type=f32)     # (Q, 1)
        sta = sta / (jnp.dot(repq_ref[...], denom, preferred_element_type=f32) + 1e-6)

        # --- per-row quantization levels via precomputed affine coefficients ---
        cmin_e = jnp.dot(repq_ref[...], cmin, preferred_element_type=f32)   # (R, 1)
        rng_e = jnp.dot(repq_ref[...], rng, preferred_element_type=f32)
        qw = cmin_e + coefr[:, 0:1] * rng_e        # q_levels_w  (level l1) -> f1 ch 1
        qh = cmin_e + coefr[:, 1:2] * rng_e        # q_levels_h  (level l2) -> f1 ch 0

        # --- f1: 1x1 conv 3->64 on the VPU + LeakyReLU(0.01) ---
        y = qh * w1[0:1, :] + qw * w1[1:2, :] + sta * w1[2:3, :]            # (R, 64)
        y = jnp.where(y >= 0.0, y, 0.01 * y)
        y_rows.append(y)

        # --- x_ave branch of out[0] (384->128 split), once per pooled cell ---
        xb = jnp.dot(x_ave.astype(bf16), wxt_ref[...], preferred_element_type=f32)  # (Q, 128)
        xbe_rows.append(jnp.dot(repq_ref[...], xb, preferred_element_type=f32))     # (R, 128)

    # ---- stack the per-step batch block so the MXU matmuls see batch*R rows ----
    y_all = jnp.concatenate(y_rows, axis=0)                      # (B*R, 64)
    xbe_all = jnp.concatenate(xbe_rows, axis=0)                  # (B*R, 128)

    # f2: 1x1 conv 64->128 + ReLU (bf16 operands, f32 accumulation)
    y2 = jnp.dot(y_all.astype(bf16), w2t_ref[...], preferred_element_type=f32)
    y2 = jnp.maximum(y2, 0.0)                                    # (B*R, 128)

    # out[0] y-branch + folded BN + ReLU
    yb = jnp.dot(y2.astype(bf16), wyt_ref[...], preferred_element_type=f32)
    z = jnp.maximum(xbe_all + yb + b1, 0.0)                      # (B*R, 128)

    # mean over L*L BEFORE out[1] (legal: out[1]+BN is linear, no ReLU after it)
    zm_rows = [jnp.dot(selq_ref[...], z[bi * R:(bi + 1) * R, :],
                       preferred_element_type=f32) for bi in range(batch_block)]
    zm = jnp.concatenate(zm_rows, axis=0) * (1.0 / LL)           # (B*Q, 128)

    # out[1]: 128->128 + folded BN
    z2 = jnp.dot(zm.astype(bf16), wo2t_ref[...], preferred_element_type=f32) + b2

    for bi in range(batch_block):
        o_ref[bi] = z2[bi * Q:(bi + 1) * Q, :]


# ----------------------------------------------------------------------------
# Constant selection / pooling matrices (trace-time numpy)
# ----------------------------------------------------------------------------

def _build_constants(H, W, scale, level_num):
    size_h, size_w = H // scale, W // scale
    P = size_h * size_w
    Q = scale * scale
    L = level_num
    LL = L * L
    HW = H * W
    QL = Q * L
    R = Q * LL

    h = np.arange(HW) // W
    w = np.arange(HW) % W
    blk = (h // size_h) * scale + (w // size_w)          # pooling-block id (x_ave)
    grp = (h % scale) * scale + (w % scale)              # quantization group q
    pos = (h // scale) * size_w + (w // scale)           # position p inside group

    qs = np.arange(Q)
    pool = (blk[None, :] == qs[:, None]).astype(np.float32) / float(P)   # (Q, HW)
    up = (blk[:, None] == qs[None, :]).astype(np.float32)                # (HW, Q)
    e = (grp[None, :] == qs[:, None]).astype(np.float32)                 # (Q, HW)

    p_ids = np.arange(P)
    fA = (pos[:, None] == p_ids[None, :]).astype(np.float32)             # (HW, P)
    a_of_p = p_ids // size_w
    c_of_p = p_ids % size_w
    maskB = ((a_of_p < size_h - 1) &
             (c_of_p < size_w - 1)).astype(np.float32)[None, :]          # (1, P)

    i_ql = np.arange(QL)
    repql = ((i_ql // L)[:, None] == qs[None, :]).astype(np.float32)     # (QL, Q)
    r_ids = np.arange(R)
    repq = ((r_ids // LL)[:, None] == qs[None, :]).astype(np.float32)    # (R, Q)
    selq = np.ascontiguousarray(repq.T)                                  # (Q, R)
    cols = np.arange(QL)
    l1 = (r_ids // L) % L
    l2 = r_ids % L
    expA = (((r_ids // LL) * L + l1)[:, None] == cols[None, :]).astype(np.float32)  # (R, QL)
    expB = (((r_ids // LL) * L + l2)[:, None] == cols[None, :]).astype(np.float32)  # (R, QL)

    coefql = ((2.0 * (i_ql % L) + 1.0) / (2.0 * L)).astype(np.float32)[:, None]      # (QL, 1)
    coefr = np.stack([(2.0 * l1 + 1.0) / (2.0 * L),
                      (2.0 * l2 + 1.0) / (2.0 * L)], axis=1).astype(np.float32)      # (R, 2)

    return dict(pool=pool, up=up, e=e, fA=fA, maskB=maskB,
                repql=repql, repq=repq, expA=expA, expB=expB, selq=selq,
                coefql=coefql, coefr=coefr,
                P=P, Q=Q, QL=QL, R=R, HW=HW, size_w=size_w)


# ----------------------------------------------------------------------------
# QCO_2d forward
# ----------------------------------------------------------------------------

def qco_2d_forward(x, params, scale, level_num, batch_block=2):
    """x: (N, C, H, W) float32 (PyTorch NCHW). Returns (N, 128, scale, scale)."""
    N, C, H, W = x.shape
    # The module's first adaptive_avg_pool2d is an identity when H, W are
    # multiples of level_num (our chosen shapes guarantee that).
    # TODO(synk): general adaptive_avg_pool2d with uneven bins is not implemented.
    assert H % level_num == 0 and W % level_num == 0
    assert H % scale == 0 and W % scale == 0
    assert N % batch_block == 0
    L = level_num
    cout = 128
    assert C + cout == params["out1_w"].shape[1], "channel count must match out-conv"

    cs = _build_constants(H, W, scale, L)
    P, Q, QL, R, HW = cs["P"], cs["Q"], cs["QL"], cs["R"], cs["HW"]

    x_flat = jnp.transpose(x, (0, 2, 3, 1)).reshape(N, HW, C).astype(jnp.float32)

    # Fold BatchNorm scales into the out-conv weights; biases stay as adds.
    s1 = params["out1_scale"].astype(jnp.float32)
    b1 = params["out1_bias"].astype(jnp.float32)
    s2 = params["out2_scale"].astype(jnp.float32)
    b2 = params["out2_bias"].astype(jnp.float32)

    w1t = params["f1_w"].T.astype(jnp.float32)                               # (3, 64)
    w2t = params["f2_w"].T.astype(jnp.bfloat16)                              # (64, 128)
    wxt = (params["out1_w"][:, :C].T * s1[None, :]).astype(jnp.bfloat16)     # (C, 128)
    wyt = (params["out1_w"][:, C:].T * s1[None, :]).astype(jnp.bfloat16)     # (128, 128)
    wo2t = (params["out2_w"].T * s2[None, :]).astype(jnp.bfloat16)           # (128, 128)
    bias = jnp.stack([b1, b2], axis=0)                                       # (2, 128)

    def full(shape):
        return pl.BlockSpec(shape, lambda n, _s=shape: (0,) * len(_s))

    kern = functools.partial(_qco_kernel, level_num=L, size_w=cs["size_w"],
                             batch_block=batch_block)
    out = pl.pallas_call(
        kern,
        grid=(N // batch_block,),
        in_specs=[
            pl.BlockSpec((batch_block, HW, C), lambda n: (n, 0, 0)),   # x
            full((Q, HW)), full((HW, Q)), full((Q, HW)),               # pool, up, e
            full((HW, P)), full((1, P)),                               # fA, maskB
            full((QL, Q)), full((R, Q)),                               # repql, repq
            full((R, QL)), full((R, QL)), full((Q, R)),                # expA, expB, selq
            full((QL, 1)), full((R, 2)),                               # coefql, coefr
            full((3, 64)), full((64, cout)), full((C, cout)),
            full((cout, cout)), full((cout, cout)), full((2, cout)),
        ],
        out_specs=pl.BlockSpec((batch_block, Q, cout), lambda n: (n, 0, 0)),
        out_shape=jax.ShapeDtypeStruct((N, Q, cout), jnp.float32),
        compiler_params=pltpu.CompilerParams(
            dimension_semantics=("parallel",),
            vmem_limit_bytes=32 * 1024 * 1024),
    )(x_flat,
      cs["pool"], cs["up"], cs["e"], cs["fA"], cs["maskB"],
      cs["repql"], cs["repq"], cs["expA"], cs["expB"], cs["selq"],
      cs["coefql"], cs["coefr"],
      w1t, w2t, wxt, wyt, wo2t, bias)

    return jnp.transpose(out, (0, 2, 1)).reshape(N, cout, scale, scale)


# ----------------------------------------------------------------------------
# Deterministic parameter init (shapes from QCO_2d.__init__)
# ----------------------------------------------------------------------------

def init_params(key):
    ks = jax.random.split(key, 12)

    def conv_w(k, cout, cin):
        bound = 1.0 / math.sqrt(cin)
        return jax.random.uniform(k, (cout, cin), jnp.float32, -bound, bound)

    def bn_fold(kg, kb, km, kv, c, eps=1e-5):
        gamma = 1.0 + 0.1 * jax.random.normal(kg, (c,), jnp.float32)
        beta = 0.1 * jax.random.normal(kb, (c,), jnp.float32)
        rmean = 0.1 * jax.random.normal(km, (c,), jnp.float32)
        rvar = jax.random.uniform(kv, (c,), jnp.float32, 0.5, 1.5)
        s = gamma / jnp.sqrt(rvar + eps)
        b = beta - rmean * s
        return s, b

    params = {
        "f1_w": conv_w(ks[0], 64, 3),
        "f2_w": conv_w(ks[1], 128, 64),
        "out1_w": conv_w(ks[2], 128, 384),
        "out2_w": conv_w(ks[3], 128, 128),
    }
    params["out1_scale"], params["out1_bias"] = bn_fold(ks[4], ks[5], ks[6], ks[7], 128)
    params["out2_scale"], params["out2_bias"] = bn_fold(ks[8], ks[9], ks[10], ks[11], 128)
    return params


# ----------------------------------------------------------------------------

if __name__ == "__main__":
    key = jax.random.PRNGKey(0)
    k_x, k_p = jax.random.split(key)

    # Channel count must be 256 so that cat([x_ave, f2(sta)]) has 384 channels,
    # matching the module's out-conv definition.  N=8 gives the 1-D grid enough
    # steps (4 with batch_block=2) for pipelining on both v7x TensorCores.
    N, C, H, W = 8, 256, 8, 8
    scale, level_num = 2, 4

    x = jax.random.normal(k_x, (N, C, H, W), jnp.float32)
    params = init_params(k_p)

    out = qco_2d_forward(x, params, scale, level_num, batch_block=2)
    out = jax.block_until_ready(out)

    assert out.shape == (N, 128, scale, scale), out.shape
    assert bool(jnp.all(jnp.isfinite(out)))
    print("KERNEL_OK")
</pallas_src>

<mosaic_0001>
module attributes {stable_mosaic.version = 11 : i64} {
  func.func @_qco_kernel(%arg0: i32, %arg1: memref<2x64x256xf32, #tpu.memory_space<vmem>>, %arg2: memref<4x64xf32, #tpu.memory_space<vmem>>, %arg3: memref<64x4xf32, #tpu.memory_space<vmem>>, %arg4: memref<4x64xf32, #tpu.memory_space<vmem>>, %arg5: memref<64x16xf32, #tpu.memory_space<vmem>>, %arg6: memref<1x16xf32, #tpu.memory_space<vmem>>, %arg7: memref<16x4xf32, #tpu.memory_space<vmem>>, %arg8: memref<64x4xf32, #tpu.memory_space<vmem>>, %arg9: memref<64x16xf32, #tpu.memory_space<vmem>>, %arg10: memref<64x16xf32, #tpu.memory_space<vmem>>, %arg11: memref<4x64xf32, #tpu.memory_space<vmem>>, %arg12: memref<16x1xf32, #tpu.memory_space<vmem>>, %arg13: memref<64x2xf32, #tpu.memory_space<vmem>>, %arg14: memref<3x64xf32, #tpu.memory_space<vmem>>, %arg15: memref<64x128xbf16, #tpu.memory_space<vmem>>, %arg16: memref<256x128xbf16, #tpu.memory_space<vmem>>, %arg17: memref<128x128xbf16, #tpu.memory_space<vmem>>, %arg18: memref<128x128xbf16, #tpu.memory_space<vmem>>, %arg19: memref<2x128xf32, #tpu.memory_space<vmem>>, %arg20: memref<2x4x128xf32, #tpu.memory_space<vmem>>) attributes {dimension_semantics = [#tpu.dimension_semantics<parallel>], iteration_bounds = array<i64: 4>, scalar_prefetch = 0 : i64, scratch_operands = 0 : i64, tpu.core_type = #tpu.core_type<tc>, window_params = [{transform_indices = @transform_0, window_bounds = array<i64: 2, 64, 256>}, {pipeline_mode = #tpu.pipeline_mode<synchronous>, transform_indices = @transform_1, window_bounds = array<i64: 4, 64>}, {pipeline_mode = #tpu.pipeline_mode<synchronous>, transform_indices = @transform_2, window_bounds = array<i64: 64, 4>}, {pipeline_mode = #tpu.pipeline_mode<synchronous>, transform_indices = @transform_3, window_bounds = array<i64: 4, 64>}, {pipeline_mode = #tpu.pipeline_mode<synchronous>, transform_indices = @transform_4, window_bounds = array<i64: 64, 16>}, {pipeline_mode = #tpu.pipeline_mode<synchronous>, transform_indices = @transform_5, window_bounds = array<i64: 1, 16>}, {pipeline_mode = #tpu.pipeline_mode<synchronous>, transform_indices = @transform_6, window_bounds = array<i64: 16, 4>}, {pipeline_mode = #tpu.pipeline_mode<synchronous>, transform_indices = @transform_7, window_bounds = array<i64: 64, 4>}, {pipeline_mode = #tpu.pipeline_mode<synchronous>, transform_indices = @transform_8, window_bounds = array<i64: 64, 16>}, {pipeline_mode = #tpu.pipeline_mode<synchronous>, transform_indices = @transform_9, window_bounds = array<i64: 64, 16>}, {pipeline_mode = #tpu.pipeline_mode<synchronous>, transform_indices = @transform_10, window_bounds = array<i64: 4, 64>}, {pipeline_mode = #tpu.pipeline_mode<synchronous>, transform_indices = @transform_11, window_bounds = array<i64: 16, 1>}, {pipeline_mode = #tpu.pipeline_mode<synchronous>, transform_indices = @transform_12, window_bounds = array<i64: 64, 2>}, {pipeline_mode = #tpu.pipeline_mode<synchronous>, transform_indices = @transform_13, window_bounds = array<i64: 3, 64>}, {pipeline_mode = #tpu.pipeline_mode<synchronous>, transform_indices = @transform_14, window_bounds = array<i64: 64, 128>}, {pipeline_mode = #tpu.pipeline_mode<synchronous>, transform_indices = @transform_15, window_bounds = array<i64: 256, 128>}, {pipeline_mode = #tpu.pipeline_mode<synchronous>, transform_indices = @transform_16, window_bounds = array<i64: 128, 128>}, {pipeline_mode = #tpu.pipeline_mode<synchronous>, transform_indices = @transform_17, window_bounds = array<i64: 128, 128>}, {pipeline_mode = #tpu.pipeline_mode<synchronous>, transform_indices = @transform_18, window_bounds = array<i64: 2, 128>}, {transform_indices = @transform_19, window_bounds = array<i64: 2, 4, 128>}]} {
    %c0 = arith.constant 0 : index
    %c0_0 = arith.constant 0 : index
    %0 = vector.load %arg14[%c0, %c0_0] : memref<3x64xf32, #tpu.memory_space<vmem>>, vector<3x64xf32>
    %c0_1 = arith.constant 0 : index
    %c0_2 = arith.constant 0 : index
    %1 = vector.load %arg13[%c0_1, %c0_2] : memref<64x2xf32, #tpu.memory_space<vmem>>, vector<64x2xf32>
    %c0_3 = arith.constant 0 : index
    %c0_4 = arith.constant 0 : index
    %2 = vector.load %arg19[%c0_3, %c0_4] : memref<2x128xf32, #tpu.memory_space<vmem>>, vector<2x128xf32>
    %3 = vector.extract_strided_slice %2 {offsets = [0, 0], sizes = [1, 128], strides = [1, 1]} : vector<2x128xf32> to vector<1x128xf32>
    %4 = vector.extract_strided_slice %2 {offsets = [1, 0], sizes = [1, 128], strides = [1, 1]} : vector<2x128xf32> to vector<1x128xf32>
    %c0_5 = arith.constant 0 : index
    %c0_6 = arith.constant 0 : index
    %c0_7 = arith.constant 0 : index
    %5 = vector.load %arg1[%c0_5, %c0_6, %c0_7] : memref<2x64x256xf32, #tpu.memory_space<vmem>>, vector<1x64x256xf32>
    %6 = vector.shape_cast %5 : vector<1x64x256xf32> to vector<64x256xf32>
    %c0_8 = arith.constant 0 : index
    %c0_9 = arith.constant 0 : index
    %7 = vector.load %arg2[%c0_8, %c0_9] : memref<4x64xf32, #tpu.memory_space<vmem>>, vector<4x64xf32>
    %cst = arith.constant dense<0.000000e+00> : vector<4x256xf32>
    %8 = tpu.matmul %7, %6, %cst {dimension_numbers = #tpu.dot_dimension_numbers<[1], [0], [0], [1], [0, 0, 1, 1], [], []>} : vector<4x64xf32>, vector<64x256xf32>, vector<4x256xf32> -> vector<4x256xf32>
    %cst_10 = arith.constant dense<0.000000e+00> : vector<64x4xf32>
    %9 = tpu.matmul %6, %8, %cst_10 {dimension_numbers = #tpu.dot_dimension_numbers<[1], [1], [0], [0], [0, 0, 1, 0], [], []>} : vector<64x256xf32>, vector<4x256xf32>, vector<64x4xf32> -> vector<64x4xf32>
    %c0_11 = arith.constant 0 : index
    %c0_12 = arith.constant 0 : index
    %10 = vector.load %arg3[%c0_11, %c0_12] : memref<64x4xf32, #tpu.memory_space<vmem>>, vector<64x4xf32>
    %11 = arith.mulf %9, %10 : vector<64x4xf32>
    %cst_13 = arith.constant dense<0.000000e+00> : vector<64xf32>
    %12 = vector.multi_reduction <add>, %11, %cst_13 [1] : vector<64x4xf32> to vector<64xf32>
    %13 = vector.shape_cast %12 : vector<64xf32> to vector<64x1xf32>
    %14 = arith.mulf %6, %6 : vector<64x256xf32>
    %cst_14 = arith.constant dense<0.000000e+00> : vector<64xf32>
    %15 = vector.multi_reduction <add>, %14, %cst_14 [1] : vector<64x256xf32> to vector<64xf32>
    %16 = vector.shape_cast %15 : vector<64xf32> to vector<64x1xf32>
    %17 = arith.mulf %8, %8 : vector<4x256xf32>
    %cst_15 = arith.constant dense<0.000000e+00> : vector<4xf32>
    %18 = vector.multi_reduction <add>, %17, %cst_15 [1] : vector<4x256xf32> to vector<4xf32>
    %19 = vector.shape_cast %18 : vector<4xf32> to vector<4x1xf32>
    %c0_16 = arith.constant 0 : index
    %c0_17 = arith.constant 0 : index
    %20 = vector.load %arg3[%c0_16, %c0_17] : memref<64x4xf32, #tpu.memory_space<vmem>>, vector<64x4xf32>
    %cst_18 = arith.constant dense<0.000000e+00> : vector<64x1xf32>
    %21 = tpu.matmul %20, %19, %cst_18 {dimension_numbers = #tpu.dot_dimension_numbers<[1], [0], [0], [1], [0, 0, 1, 1], [], []>} : vector<64x4xf32>, vector<4x1xf32>, vector<64x1xf32> -> vector<64x1xf32>
    %cst_19 = arith.constant 1.000000e-24 : f32
    %22 = vector.broadcast %cst_19 : f32 to vector<64x1xf32>
    %23 = arith.maximumf %16, %22 : vector<64x1xf32>
    %24 = math.rsqrt %23 : vector<64x1xf32>
    %cst_20 = arith.constant 1.000000e-24 : f32
    %25 = vector.broadcast %cst_20 : f32 to vector<64x1xf32>
    %26 = arith.maximumf %21, %25 : vector<64x1xf32>
    %27 = math.rsqrt %26 : vector<64x1xf32>
    %28 = arith.mulf %24, %27 : vector<64x1xf32>
    %29 = arith.mulf %13, %28 : vector<64x1xf32>
    %c0_21 = arith.constant 0 : index
    %c0_22 = arith.constant 0 : index
    %30 = vector.load %arg4[%c0_21, %c0_22] : memref<4x64xf32, #tpu.memory_space<vmem>>, vector<4x64xf32>
    %c0_23 = arith.constant 0 : index
    %c0_24 = arith.constant 0 : index
    %31 = vector.load %arg5[%c0_23, %c0_24] : memref<64x16xf32, #tpu.memory_space<vmem>>, vector<64x16xf32>
    %32 = vector.broadcast %29 : vector<64x1xf32> to vector<64x16xf32>
    %33 = arith.mulf %32, %31 : vector<64x16xf32>
    %cst_25 = arith.constant dense<0.000000e+00> : vector<4x16xf32>
    %34 = tpu.matmul %30, %33, %cst_25 {dimension_numbers = #tpu.dot_dimension_numbers<[1], [0], [0], [1], [0, 0, 1, 1], [], []>} : vector<4x64xf32>, vector<64x16xf32>, vector<4x16xf32> -> vector<4x16xf32>
    %cst_26 = arith.constant dense<0x7F800000> : vector<4xf32>
    %35 = vector.multi_reduction <minimumf>, %34, %cst_26 [1] : vector<4x16xf32> to vector<4xf32>
    %36 = vector.shape_cast %35 : vector<4xf32> to vector<4x1xf32>
    %cst_27 = arith.constant dense<0xFF800000> : vector<4xf32>
    %37 = vector.multi_reduction <maximumf>, %34, %cst_27 [1] : vector<4x16xf32> to vector<4xf32>
    %38 = vector.shape_cast %37 : vector<4xf32> to vector<4x1xf32>
    %39 = arith.subf %38, %36 : vector<4x1xf32>
    %cst_28 = arith.constant 2.500000e-01 : f32
    %40 = vector.broadcast %cst_28 : f32 to vector<4x1xf32>
    %41 = arith.mulf %39, %40 : vector<4x1xf32>
    %cst_29 = arith.constant 1.000000e+00 : f32
    %42 = vector.broadcast %cst_29 : f32 to vector<4x1xf32>
    %43 = arith.subf %42, %41 : vector<4x1xf32>
    %c0_30 = arith.constant 0 : index
    %c0_31 = arith.constant 0 : index
    %44 = vector.load %arg7[%c0_30, %c0_31] : memref<16x4xf32, #tpu.memory_space<vmem>>, vector<16x4xf32>
    %cst_32 = arith.constant dense<0.000000e+00> : vector<16x16xf32>
    %45 = tpu.matmul %44, %34, %cst_32 {dimension_numbers = #tpu.dot_dimension_numbers<[1], [0], [0], [1], [0, 0, 1, 1], [], []>} : vector<16x4xf32>, vector<4x16xf32>, vector<16x16xf32> -> vector<16x16xf32>
    %c0_33 = arith.constant 0 : index
    %c0_34 = arith.constant 0 : index
    %46 = vector.load %arg7[%c0_33, %c0_34] : memref<16x4xf32, #tpu.memory_space<vmem>>, vector<16x4xf32>
    %cst_35 = arith.constant dense<0.000000e+00> : vector<16x1xf32>
    %47 = tpu.matmul %46, %36, %cst_35 {dimension_numbers = #tpu.dot_dimension_numbers<[1], [0], [0], [1], [0, 0, 1, 1], [], []>} : vector<16x4xf32>, vector<4x1xf32>, vector<16x1xf32> -> vector<16x1xf32>
    %c0_36 = arith.constant 0 : index
    %c0_37 = arith.constant 0 : index
    %48 = vector.load %arg7[%c0_36, %c0_37] : memref<16x4xf32, #tpu.memory_space<vmem>>, vector<16x4xf32>
    %cst_38 = arith.constant dense<0.000000e+00> : vector<16x1xf32>
    %49 = tpu.matmul %48, %39, %cst_38 {dimension_numbers = #tpu.dot_dimension_numbers<[1], [0], [0], [1], [0, 0, 1, 1], [], []>} : vector<16x4xf32>, vector<4x1xf32>, vector<16x1xf32> -> vector<16x1xf32>
    %c0_39 = arith.constant 0 : index
    %c0_40 = arith.constant 0 : index
    %50 = vector.load %arg7[%c0_39, %c0_40] : memref<16x4xf32, #tpu.memory_space<vmem>>, vector<16x4xf32>
    %cst_41 = arith.constant dense<0.000000e+00> : vector<16x1xf32>
    %51 = tpu.matmul %50, %43, %cst_41 {dimension_numbers = #tpu.dot_dimension_numbers<[1], [0], [0], [1], [0, 0, 1, 1], [], []>} : vector<16x4xf32>, vector<4x1xf32>, vector<16x1xf32> -> vector<16x1xf32>
    %c0_42 = arith.constant 0 : index
    %c0_43 = arith.constant 0 : index
    %52 = vector.load %arg12[%c0_42, %c0_43] : memref<16x1xf32, #tpu.memory_space<vmem>>, vector<16x1xf32>
    %53 = arith.mulf %52, %49 : vector<16x1xf32>
    %54 = arith.addf %47, %53 : vector<16x1xf32>
    %55 = vector.broadcast %54 : vector<16x1xf32> to vector<16x16xf32>
    %56 = arith.subf %55, %45 : vector<16x16xf32>
    %57 = math.absf %56 : vector<16x16xf32>
    %cst_44 = arith.constant 1.000000e+00 : f32
    %58 = vector.broadcast %cst_44 : f32 to vector<16x16xf32>
    %59 = arith.subf %58, %57 : vector<16x16xf32>
    %60 = vector.broadcast %51 : vector<16x1xf32> to vector<16x16xf32>
    %61 = arith.cmpf ogt, %59, %60 : vector<16x16xf32>
    %cst_45 = arith.constant 0.000000e+00 : f32
    %62 = vector.broadcast %cst_45 : f32 to vector<16x16xf32>
    %63 = arith.select %61, %59, %62 : vector<16x16xi1>, vector<16x16xf32>
    %64 = vector.extract_strided_slice %63 {offsets = [0, 5], sizes = [16, 11], strides = [1, 1]} : vector<16x16xf32> to vector<16x11xf32>
    %cst_46 = arith.constant 0.000000e+00 : f32
    %65 = vector.broadcast %cst_46 : f32 to vector<16x5xf32>
    %66 = tpu.concatenate %64, %65 in 1 : vector<16x11xf32>, vector<16x5xf32> -> vector<16x16xf32>
    %c0_47 = arith.constant 0 : index
    %c0_48 = arith.constant 0 : index
    %67 = vector.load %arg6[%c0_47, %c0_48] : memref<1x16xf32, #tpu.memory_space<vmem>>, vector<1x16xf32>
    %68 = vector.broadcast %67 : vector<1x16xf32> to vector<16x16xf32>
    %69 = arith.mulf %66, %68 : vector<16x16xf32>
    %c0_49 = arith.constant 0 : index
    %c0_50 = arith.constant 0 : index
    %70 = vector.load %arg9[%c0_49, %c0_50] : memref<64x16xf32, #tpu.memory_space<vmem>>, vector<64x16xf32>
    %cst_51 = arith.constant dense<0.000000e+00> : vector<64x16xf32>
    %71 = tpu.matmul %70, %63, %cst_51 {dimension_numbers = #tpu.dot_dimension_numbers<[1], [0], [0], [1], [0, 0, 1, 1], [], []>} : vector<64x16xf32>, vector<16x16xf32>, vector<64x16xf32> -> vector<64x16xf32>
    %c0_52 = arith.constant 0 : index
    %c0_53 = arith.constant 0 : index
    %72 = vector.load %arg10[%c0_52, %c0_53] : memref<64x16xf32, #tpu.memory_space<vmem>>, vector<64x16xf32>
    %cst_54 = arith.constant dense<0.000000e+00> : vector<64x16xf32>
    %73 = tpu.matmul %72, %69, %cst_54 {dimension_numbers = #tpu.dot_dimension_numbers<[1], [0], [0], [1], [0, 0, 1, 1], [], []>} : vector<64x16xf32>, vector<16x16xf32>, vector<64x16xf32> -> vector<64x16xf32>
    %74 = arith.mulf %71, %73 : vector<64x16xf32>
    %cst_55 = arith.constant dense<0.000000e+00> : vector<64xf32>
    %75 = vector.multi_reduction <add>, %74, %cst_55 [1] : vector<64x16xf32> to vector<64xf32>
    %76 = vector.shape_cast %75 : vector<64xf32> to vector<64x1xf32>
    %c0_56 = arith.constant 0 : index
    %c0_57 = arith.constant 0 : index
    %77 = vector.load %arg11[%c0_56, %c0_57] : memref<4x64xf32, #tpu.memory_space<vmem>>, vector<4x64xf32>
    %cst_58 = arith.constant dense<0.000000e+00> : vector<4x1xf32>
    %78 = tpu.matmul %77, %76, %cst_58 {dimension_numbers = #tpu.dot_dimension_numbers<[1], [0], [0], [1], [0, 0, 1, 1], [], []>} : vector<4x64xf32>, vector<64x1xf32>, vector<4x1xf32> -> vector<4x1xf32>
    %c0_59 = arith.constant 0 : index
    %c0_60 = arith.constant 0 : index
    %79 = vector.load %arg8[%c0_59, %c0_60] : memref<64x4xf32, #tpu.memory_space<vmem>>, vector<64x4xf32>
    %cst_61 = arith.constant dense<0.000000e+00> : vector<64x1xf32>
    %80 = tpu.matmul %79, %78, %cst_61 {dimension_numbers = #tpu.dot_dimension_numbers<[1], [0], [0], [1], [0, 0, 1, 1], [], []>} : vector<64x4xf32>, vector<4x1xf32>, vector<64x1xf32> -> vector<64x1xf32>
    %cst_62 = arith.constant 9.99999997E-7 : f32
    %81 = vector.broadcast %cst_62 : f32 to vector<64x1xf32>
    %82 = arith.addf %80, %81 : vector<64x1xf32>
    %83 = arith.divf %76, %82 : vector<64x1xf32>
    %c0_63 = arith.constant 0 : index
    %c0_64 = arith.constant 0 : index
    %84 = vector.load %arg8[%c0_63, %c0_64] : memref<64x4xf32, #tpu.memory_space<vmem>>, vector<64x4xf32>
    %cst_65 = arith.constant dense<0.000000e+00> : vector<64x1xf32>
    %85 = tpu.matmul %84, %36, %cst_65 {dimension_numbers = #tpu.dot_dimension_numbers<[1], [0], [0], [1], [0, 0, 1, 1], [], []>} : vector<64x4xf32>, vector<4x1xf32>, vector<64x1xf32> -> vector<64x1xf32>
    %c0_66 = arith.constant 0 : index
    %c0_67 = arith.constant 0 : index
    %86 = vector.load %arg8[%c0_66, %c0_67] : memref<64x4xf32, #tpu.memory_space<vmem>>, vector<64x4xf32>
    %cst_68 = arith.constant dense<0.000000e+00> : vector<64x1xf32>
    %87 = tpu.matmul %86, %39, %cst_68 {dimension_numbers = #tpu.dot_dimension_numbers<[1], [0], [0], [1], [0, 0, 1, 1], [], []>} : vector<64x4xf32>, vector<4x1xf32>, vector<64x1xf32> -> vector<64x1xf32>
    %88 = vector.extract_strided_slice %1 {offsets = [0, 0], sizes = [64, 1], strides = [1, 1]} : vector<64x2xf32> to vector<64x1xf32>
    %89 = arith.mulf %88, %87 : vector<64x1xf32>
    %90 = arith.addf %85, %89 : vector<64x1xf32>
    %91 = vector.extract_strided_slice %1 {offsets = [0, 1], sizes = [64, 1], strides = [1, 1]} : vector<64x2xf32> to vector<64x1xf32>
    %92 = arith.mulf %91, %87 : vector<64x1xf32>
    %93 = arith.addf %85, %92 : vector<64x1xf32>
    %94 = vector.extract_strided_slice %0 {offsets = [0, 0], sizes = [1, 64], strides = [1, 1]} : vector<3x64xf32> to vector<1x64xf32>
    %95 = vector.broadcast %93 : vector<64x1xf32> to vector<64x64xf32>
    %96 = vector.broadcast %94 : vector<1x64xf32> to vector<64x64xf32>
    %97 = arith.mulf %95, %96 : vector<64x64xf32>
    %98 = vector.extract_strided_slice %0 {offsets = [1, 0], sizes = [1, 64], strides = [1, 1]} : vector<3x64xf32> to vector<1x64xf32>
    %99 = vector.broadcast %90 : vector<64x1xf32> to vector<64x64xf32>
    %100 = vector.broadcast %98 : vector<1x64xf32> to vector<64x64xf32>
    %101 = arith.mulf %99, %100 : vector<64x64xf32>
    %102 = arith.addf %97, %101 : vector<64x64xf32>
    %103 = vector.extract_strided_slice %0 {offsets = [2, 0], sizes = [1, 64], strides = [1, 1]} : vector<3x64xf32> to vector<1x64xf32>
    %104 = vector.broadcast %83 : vector<64x1xf32> to vector<64x64xf32>
    %105 = vector.broadcast %103 : vector<1x64xf32> to vector<64x64xf32>
    %106 = arith.mulf %104, %105 : vector<64x64xf32>
    %107 = arith.addf %102, %106 : vector<64x64xf32>
    %cst_69 = arith.constant 0.000000e+00 : f32
    %108 = vector.broadcast %cst_69 : f32 to vector<64x64xf32>
    %109 = arith.cmpf oge, %107, %108 : vector<64x64xf32>
    %cst_70 = arith.constant 0.00999999977 : f32
    %110 = vector.broadcast %cst_70 : f32 to vector<64x64xf32>
    %111 = arith.mulf %110, %107 : vector<64x64xf32>
    %112 = arith.select %109, %107, %111 : vector<64x64xi1>, vector<64x64xf32>
    %113 = arith.truncf %8 : vector<4x256xf32> to vector<4x256xbf16>
    %c0_71 = arith.constant 0 : index
    %c0_72 = arith.constant 0 : index
    %114 = vector.load %arg16[%c0_71, %c0_72] : memref<256x128xbf16, #tpu.memory_space<vmem>>, vector<256x128xbf16>
    %cst_73 = arith.constant dense<0.000000e+00> : vector<4x128xf32>
    %115 = tpu.matmul %113, %114, %cst_73 {dimension_numbers = #tpu.dot_dimension_numbers<[1], [0], [0], [1], [0, 0, 1, 1], [], []>} : vector<4x256xbf16>, vector<256x128xbf16>, vector<4x128xf32> -> vector<4x128xf32>
    %c0_74 = arith.constant 0 : index
    %c0_75 = arith.constant 0 : index
    %116 = vector.load %arg8[%c0_74, %c0_75] : memref<64x4xf32, #tpu.memory_space<vmem>>, vector<64x4xf32>
    %cst_76 = arith.constant dense<0.000000e+00> : vector<64x128xf32>
    %117 = tpu.matmul %116, %115, %cst_76 {dimension_numbers = #tpu.dot_dimension_numbers<[1], [0], [0], [1], [0, 0, 1, 1], [], []>} : vector<64x4xf32>, vector<4x128xf32>, vector<64x128xf32> -> vector<64x128xf32>
    %c1 = arith.constant 1 : index
    %c0_77 = arith.constant 0 : index
    %c0_78 = arith.constant 0 : index
    %118 = vector.load %arg1[%c1, %c0_77, %c0_78] : memref<2x64x256xf32, #tpu.memory_space<vmem>>, vector<1x64x256xf32>
    %119 = vector.shape_cast %118 : vector<1x64x256xf32> to vector<64x256xf32>
    %c0_79 = arith.constant 0 : index
    %c0_80 = arith.constant 0 : index
    %120 = vector.load %arg2[%c0_79, %c0_80] : memref<4x64xf32, #tpu.memory_space<vmem>>, vector<4x64xf32>
    %cst_81 = arith.constant dense<0.000000e+00> : vector<4x256xf32>
    %121 = tpu.matmul %120, %119, %cst_81 {dimension_numbers = #tpu.dot_dimension_numbers<[1], [0], [0], [1], [0, 0, 1, 1], [], []>} : vector<4x64xf32>, vector<64x256xf32>, vector<4x256xf32> -> vector<4x256xf32>
    %cst_82 = arith.constant dense<0.000000e+00> : vector<64x4xf32>
    %122 = tpu.matmul %119, %121, %cst_82 {dimension_numbers = #tpu.dot_dimension_numbers<[1], [1], [0], [0], [0, 0, 1, 0], [], []>} : vector<64x256xf32>, vector<4x256xf32>, vector<64x4xf32> -> vector<64x4xf32>
    %c0_83 = arith.constant 0 : index
    %c0_84 = arith.constant 0 : index
    %123 = vector.load %arg3[%c0_83, %c0_84] : memref<64x4xf32, #tpu.memory_space<vmem>>, vector<64x4xf32>
    %124 = arith.mulf %122, %123 : vector<64x4xf32>
    %cst_85 = arith.constant dense<0.000000e+00> : vector<64xf32>
    %125 = vector.multi_reduction <add>, %124, %cst_85 [1] : vector<64x4xf32> to vector<64xf32>
    %126 = vector.shape_cast %125 : vector<64xf32> to vector<64x1xf32>
    %127 = arith.mulf %119, %119 : vector<64x256xf32>
    %cst_86 = arith.constant dense<0.000000e+00> : vector<64xf32>
    %128 = vector.multi_reduction <add>, %127, %cst_86 [1] : vector<64x256xf32> to vector<64xf32>
    %129 = vector.shape_cast %128 : vector<64xf32> to vector<64x1xf32>
    %130 = arith.mulf %121, %121 : vector<4x256xf32>
    %cst_87 = arith.constant dense<0.000000e+00> : vector<4xf32>
    %131 = vector.multi_reduction <add>, %130, %cst_87 [1] : vector<4x256xf32> to vector<4xf32>
    %132 = vector.shape_cast %131 : vector<4xf32> to vector<4x1xf32>
    %c0_88 = arith.constant 0 : index
    %c0_89 = arith.constant 0 : index
    %133 = vector.load %arg3[%c0_88, %c0_89] : memref<64x4xf32, #tpu.memory_space<vmem>>, vector<64x4xf32>
    %cst_90 = arith.constant dense<0.000000e+00> : vector<64x1xf32>
    %134 = tpu.matmul %133, %132, %cst_90 {dimension_numbers = #tpu.dot_dimension_numbers<[1], [0], [0], [1], [0, 0, 1, 1], [], []>} : vector<64x4xf32>, vector<4x1xf32>, vector<64x1xf32> -> vector<64x1xf32>
    %cst_91 = arith.constant 1.000000e-24 : f32
    %135 = vector.broadcast %cst_91 : f32 to vector<64x1xf32>
    %136 = arith.maximumf %129, %135 : vector<64x1xf32>
    %137 = math.rsqrt %136 : vector<64x1xf32>
    %cst_92 = arith.constant 1.000000e-24 : f32
    %138 = vector.broadcast %cst_92 : f32 to vector<64x1xf32>
    %139 = arith.maximumf %134, %138 : vector<64x1xf32>
    %140 = math.rsqrt %139 : vector<64x1xf32>
    %141 = arith.mulf %137, %140 : vector<64x1xf32>
    %142 = arith.mulf %126, %141 : vector<64x1xf32>
    %c0_93 = arith.constant 0 : index
    %c0_94 = arith.constant 0 : index
    %143 = vector.load %arg4[%c0_93, %c0_94] : memref<4x64xf32, #tpu.memory_space<vmem>>, vector<4x64xf32>
    %c0_95 = arith.constant 0 : index
    %c0_96 = arith.constant 0 : index
    %144 = vector.load %arg5[%c0_95, %c0_96] : memref<64x16xf32, #tpu.memory_space<vmem>>, vector<64x16xf32>
    %145 = vector.broadcast %142 : vector<64x1xf32> to vector<64x16xf32>
    %146 = arith.mulf %145, %144 : vector<64x16xf32>
    %cst_97 = arith.constant dense<0.000000e+00> : vector<4x16xf32>
    %147 = tpu.matmul %143, %146, %cst_97 {dimension_numbers = #tpu.dot_dimension_numbers<[1], [0], [0], [1], [0, 0, 1, 1], [], []>} : vector<4x64xf32>, vector<64x16xf32>, vector<4x16xf32> -> vector<4x16xf32>
    %cst_98 = arith.constant dense<0x7F800000> : vector<4xf32>
    %148 = vector.multi_reduction <minimumf>, %147, %cst_98 [1] : vector<4x16xf32> to vector<4xf32>
    %149 = vector.shape_cast %148 : vector<4xf32> to vector<4x1xf32>
    %cst_99 = arith.constant dense<0xFF800000> : vector<4xf32>
    %150 = vector.multi_reduction <maximumf>, %147, %cst_99 [1] : vector<4x16xf32> to vector<4xf32>
    %151 = vector.shape_cast %150 : vector<4xf32> to vector<4x1xf32>
    %152 = arith.subf %151, %149 : vector<4x1xf32>
    %cst_100 = arith.constant 2.500000e-01 : f32
    %153 = vector.broadcast %cst_100 : f32 to vector<4x1xf32>
    %154 = arith.mulf %152, %153 : vector<4x1xf32>
    %cst_101 = arith.constant 1.000000e+00 : f32
    %155 = vector.broadcast %cst_101 : f32 to vector<4x1xf32>
    %156 = arith.subf %155, %154 : vector<4x1xf32>
    %c0_102 = arith.constant 0 : index
    %c0_103 = arith.constant 0 : index
    %157 = vector.load %arg7[%c0_102, %c0_103] : memref<16x4xf32, #tpu.memory_space<vmem>>, vector<16x4xf32>
    %cst_104 = arith.constant dense<0.000000e+00> : vector<16x16xf32>
    %158 = tpu.matmul %157, %147, %cst_104 {dimension_numbers = #tpu.dot_dimension_numbers<[1], [0], [0], [1], [0, 0, 1, 1], [], []>} : vector<16x4xf32>, vector<4x16xf32>, vector<16x16xf32> -> vector<16x16xf32>
    %c0_105 = arith.constant 0 : index
    %c0_106 = arith.constant 0 : index
    %159 = vector.load %arg7[%c0_105, %c0_106] : memref<16x4xf32, #tpu.memory_space<vmem>>, vector<16x4xf32>
    %cst_107 = arith.constant dense<0.000000e+00> : vector<16x1xf32>
    %160 = tpu.matmul %159, %149, %cst_107 {dimension_numbers = #tpu.dot_dimension_numbers<[1], [0], [0], [1], [0, 0, 1, 1], [], []>} : vector<16x4xf32>, vector<4x1xf32>, vector<16x1xf32> -> vector<16x1xf32>
    %c0_108 = arith.constant 0 : index
    %c0_109 = arith.constant 0 : index
    %161 = vector.load %arg7[%c0_108, %c0_109] : memref<16x4xf32, #tpu.memory_space<vmem>>, vector<16x4xf32>
    %cst_110 = arith.constant dense<0.000000e+00> : vector<16x1xf32>
    %162 = tpu.matmul %161, %152, %cst_110 {dimension_numbers = #tpu.dot_dimension_numbers<[1], [0], [0], [1], [0, 0, 1, 1], [], []>} : vector<16x4xf32>, vector<4x1xf32>, vector<16x1xf32> -> vector<16x1xf32>
    %c0_111 = arith.constant 0 : index
    %c0_112 = arith.constant 0 : index
    %163 = vector.load %arg7[%c0_111, %c0_112] : memref<16x4xf32, #tpu.memory_space<vmem>>, vector<16x4xf32>
    %cst_113 = arith.constant dense<0.000000e+00> : vector<16x1xf32>
    %164 = tpu.matmul %163, %156, %cst_113 {dimension_numbers = #tpu.dot_dimension_numbers<[1], [0], [0], [1], [0, 0, 1, 1], [], []>} : vector<16x4xf32>, vector<4x1xf32>, vector<16x1xf32> -> vector<16x1xf32>
    %c0_114 = arith.constant 0 : index
    %c0_115 = arith.constant 0 : index
    %165 = vector.load %arg12[%c0_114, %c0_115] : memref<16x1xf32, #tpu.memory_space<vmem>>, vector<16x1xf32>
    %166 = arith.mulf %165, %162 : vector<16x1xf32>
    %167 = arith.addf %160, %166 : vector<16x1xf32>
    %168 = vector.broadcast %167 : vector<16x1xf32> to vector<16x16xf32>
    %169 = arith.subf %168, %158 : vector<16x16xf32>
    %170 = math.absf %169 : vector<16x16xf32>
    %cst_116 = arith.constant 1.000000e+00 : f32
    %171 = vector.broadcast %cst_116 : f32 to vector<16x16xf32>
    %172 = arith.subf %171, %170 : vector<16x16xf32>
    %173 = vector.broadcast %164 : vector<16x1xf32> to vector<16x16xf32>
    %174 = arith.cmpf ogt, %172, %173 : vector<16x16xf32>
    %cst_117 = arith.constant 0.000000e+00 : f32
    %175 = vector.broadcast %cst_117 : f32 to vector<16x16xf32>
    %176 = arith.select %174, %172, %175 : vector<16x16xi1>, vector<16x16xf32>
    %177 = vector.extract_strided_slice %176 {offsets = [0, 5], sizes = [16, 11], strides = [1, 1]} : vector<16x16xf32> to vector<16x11xf32>
    %cst_118 = arith.constant 0.000000e+00 : f32
    %178 = vector.broadcast %cst_118 : f32 to vector<16x5xf32>
    %179 = tpu.concatenate %177, %178 in 1 : vector<16x11xf32>, vector<16x5xf32> -> vector<16x16xf32>
    %c0_119 = arith.constant 0 : index
    %c0_120 = arith.constant 0 : index
    %180 = vector.load %arg6[%c0_119, %c0_120] : memref<1x16xf32, #tpu.memory_space<vmem>>, vector<1x16xf32>
    %181 = vector.broadcast %180 : vector<1x16xf32> to vector<16x16xf32>
    %182 = arith.mulf %179, %181 : vector<16x16xf32>
    %c0_121 = arith.constant 0 : index
    %c0_122 = arith.constant 0 : index
    %183 = vector.load %arg9[%c0_121, %c0_122] : memref<64x16xf32, #tpu.memory_space<vmem>>, vector<64x16xf32>
    %cst_123 = arith.constant dense<0.000000e+00> : vector<64x16xf32>
    %184 = tpu.matmul %183, %176, %cst_123 {dimension_numbers = #tpu.dot_dimension_numbers<[1], [0], [0], [1], [0, 0, 1, 1], [], []>} : vector<64x16xf32>, vector<16x16xf32>, vector<64x16xf32> -> vector<64x16xf32>
    %c0_124 = arith.constant 0 : index
    %c0_125 = arith.constant 0 : index
    %185 = vector.load %arg10[%c0_124, %c0_125] : memref<64x16xf32, #tpu.memory_space<vmem>>, vector<64x16xf32>
    %cst_126 = arith.constant dense<0.000000e+00> : vector<64x16xf32>
    %186 = tpu.matmul %185, %182, %cst_126 {dimension_numbers = #tpu.dot_dimension_numbers<[1], [0], [0], [1], [0, 0, 1, 1], [], []>} : vector<64x16xf32>, vector<16x16xf32>, vector<64x16xf32> -> vector<64x16xf32>
    %187 = arith.mulf %184, %186 : vector<64x16xf32>
    %cst_127 = arith.constant dense<0.000000e+00> : vector<64xf32>
    %188 = vector.multi_reduction <add>, %187, %cst_127 [1] : vector<64x16xf32> to vector<64xf32>
    %189 = vector.shape_cast %188 : vector<64xf32> to vector<64x1xf32>
    %c0_128 = arith.constant 0 : index
    %c0_129 = arith.constant 0 : index
    %190 = vector.load %arg11[%c0_128, %c0_129] : memref<4x64xf32, #tpu.memory_space<vmem>>, vector<4x64xf32>
    %cst_130 = arith.constant dense<0.000000e+00> : vector<4x1xf32>
    %191 = tpu.matmul %190, %189, %cst_130 {dimension_numbers = #tpu.dot_dimension_numbers<[1], [0], [0], [1], [0, 0, 1, 1], [], []>} : vector<4x64xf32>, vector<64x1xf32>, vector<4x1xf32> -> vector<4x1xf32>
    %c0_131 = arith.constant 0 : index
    %c0_132 = arith.constant 0 : index
    %192 = vector.load %arg8[%c0_131, %c0_132] : memref<64x4xf32, #tpu.memory_space<vmem>>, vector<64x4xf32>
    %cst_133 = arith.constant dense<0.000000e+00> : vector<64x1xf32>
    %193 = tpu.matmul %192, %191, %cst_133 {dimension_numbers = #tpu.dot_dimension_numbers<[1], [0], [0], [1], [0, 0, 1, 1], [], []>} : vector<64x4xf32>, vector<4x1xf32>, vector<64x1xf32> -> vector<64x1xf32>
    %cst_134 = arith.constant 9.99999997E-7 : f32
    %194 = vector.broadcast %cst_134 : f32 to vector<64x1xf32>
    %195 = arith.addf %193, %194 : vector<64x1xf32>
    %196 = arith.divf %189, %195 : vector<64x1xf32>
    %c0_135 = arith.constant 0 : index
    %c0_136 = arith.constant 0 : index
    %197 = vector.load %arg8[%c0_135, %c0_136] : memref<64x4xf32, #tpu.memory_space<vmem>>, vector<64x4xf32>
    %cst_137 = arith.constant dense<0.000000e+00> : vector<64x1xf32>
    %198 = tpu.matmul %197, %149, %cst_137 {dimension_numbers = #tpu.dot_dimension_numbers<[1], [0], [0], [1], [0, 0, 1, 1], [], []>} : vector<64x4xf32>, vector<4x1xf32>, vector<64x1xf32> -> vector<64x1xf32>
    %c0_138 = arith.constant 0 : index
    %c0_139 = arith.constant 0 : index
    %199 = vector.load %arg8[%c0_138, %c0_139] : memref<64x4xf32, #tpu.memory_space<vmem>>, vector<64x4xf32>
    %cst_140 = arith.constant dense<0.000000e+00> : vector<64x1xf32>
    %200 = tpu.matmul %199, %152, %cst_140 {dimension_numbers = #tpu.dot_dimension_numbers<[1], [0], [0], [1], [0, 0, 1, 1], [], []>} : vector<64x4xf32>, vector<4x1xf32>, vector<64x1xf32> -> vector<64x1xf32>
    %201 = vector.extract_strided_slice %1 {offsets = [0, 0], sizes = [64, 1], strides = [1, 1]} : vector<64x2xf32> to vector<64x1xf32>
    %202 = arith.mulf %201, %200 : vector<64x1xf32>
    %203 = arith.addf %198, %202 : vector<64x1xf32>
    %204 = vector.extract_strided_slice %1 {offsets = [0, 1], sizes = [64, 1], strides = [1, 1]} : vector<64x2xf32> to vector<64x1xf32>
    %205 = arith.mulf %204, %200 : vector<64x1xf32>
    %206 = arith.addf %198, %205 : vector<64x1xf32>
    %207 = vector.extract_strided_slice %0 {offsets = [0, 0], sizes = [1, 64], strides = [1, 1]} : vector<3x64xf32> to vector<1x64xf32>
    %208 = vector.broadcast %206 : vector<64x1xf32> to vector<64x64xf32>
    %209 = vector.broadcast %207 : vector<1x64xf32> to vector<64x64xf32>
    %210 = arith.mulf %208, %209 : vector<64x64xf32>
    %211 = vector.extract_strided_slice %0 {offsets = [1, 0], sizes = [1, 64], strides = [1, 1]} : vector<3x64xf32> to vector<1x64xf32>
    %212 = vector.broadcast %203 : vector<64x1xf32> to vector<64x64xf32>
    %213 = vector.broadcast %211 : vector<1x64xf32> to vector<64x64xf32>
    %214 = arith.mulf %212, %213 : vector<64x64xf32>
    %215 = arith.addf %210, %214 : vector<64x64xf32>
    %216 = vector.extract_strided_slice %0 {offsets = [2, 0], sizes = [1, 64], strides = [1, 1]} : vector<3x64xf32> to vector<1x64xf32>
    %217 = vector.broadcast %196 : vector<64x1xf32> to vector<64x64xf32>
    %218 = vector.broadcast %216 : vector<1x64xf32> to vector<64x64xf32>
    %219 = arith.mulf %217, %218 : vector<64x64xf32>
    %220 = arith.addf %215, %219 : vector<64x64xf32>
    %cst_141 = arith.constant 0.000000e+00 : f32
    %221 = vector.broadcast %cst_141 : f32 to vector<64x64xf32>
    %222 = arith.cmpf oge, %220, %221 : vector<64x64xf32>
    %cst_142 = arith.constant 0.00999999977 : f32
    %223 = vector.broadcast %cst_142 : f32 to vector<64x64xf32>
    %224 = arith.mulf %223, %220 : vector<64x64xf32>
    %225 = arith.select %222, %220, %224 : vector<64x64xi1>, vector<64x64xf32>
    %226 = arith.truncf %121 : vector<4x256xf32> to vector<4x256xbf16>
    %c0_143 = arith.constant 0 : index
    %c0_144 = arith.constant 0 : index
    %227 = vector.load %arg16[%c0_143, %c0_144] : memref<256x128xbf16, #tpu.memory_space<vmem>>, vector<256x128xbf16>
    %cst_145 = arith.constant dense<0.000000e+00> : vector<4x128xf32>
    %228 = tpu.matmul %226, %227, %cst_145 {dimension_numbers = #tpu.dot_dimension_numbers<[1], [0], [0], [1], [0, 0, 1, 1], [], []>} : vector<4x256xbf16>, vector<256x128xbf16>, vector<4x128xf32> -> vector<4x128xf32>
    %c0_146 = arith.constant 0 : index
    %c0_147 = arith.constant 0 : index
    %229 = vector.load %arg8[%c0_146, %c0_147] : memref<64x4xf32, #tpu.memory_space<vmem>>, vector<64x4xf32>
    %cst_148 = arith.constant dense<0.000000e+00> : vector<64x128xf32>
    %230 = tpu.matmul %229, %228, %cst_148 {dimension_numbers = #tpu.dot_dimension_numbers<[1], [0], [0], [1], [0, 0, 1, 1], [], []>} : vector<64x4xf32>, vector<4x128xf32>, vector<64x128xf32> -> vector<64x128xf32>
    %231 = tpu.concatenate %112, %225 in 0 : vector<64x64xf32>, vector<64x64xf32> -> vector<128x64xf32>
    %232 = tpu.concatenate %117, %230 in 0 : vector<64x128xf32>, vector<64x128xf32> -> vector<128x128xf32>
    %233 = arith.truncf %231 : vector<128x64xf32> to vector<128x64xbf16>
    %c0_149 = arith.constant 0 : index
    %c0_150 = arith.constant 0 : index
    %234 = vector.load %arg15[%c0_149, %c0_150] : memref<64x128xbf16, #tpu.memory_space<vmem>>, vector<64x128xbf16>
    %cst_151 = arith.constant dense<0.000000e+00> : vector<128x128xf32>
    %235 = tpu.matmul %233, %234, %cst_151 {dimension_numbers = #tpu.dot_dimension_numbers<[1], [0], [0], [1], [0, 0, 1, 1], [], []>} : vector<128x64xbf16>, vector<64x128xbf16>, vector<128x128xf32> -> vector<128x128xf32>
    %cst_152 = arith.constant 0.000000e+00 : f32
    %236 = vector.broadcast %cst_152 : f32 to vector<128x128xf32>
    %237 = arith.maximumf %235, %236 : vector<128x128xf32>
    %238 = arith.truncf %237 : vector<128x128xf32> to vector<128x128xbf16>
    %c0_153 = arith.constant 0 : index
    %c0_154 = arith.constant 0 : index
    %239 = vector.load %arg17[%c0_153, %c0_154] : memref<128x128xbf16, #tpu.memory_space<vmem>>, vector<128x128xbf16>
    %cst_155 = arith.constant dense<0.000000e+00> : vector<128x128xf32>
    %240 = tpu.matmul %238, %239, %cst_155 {dimension_numbers = #tpu.dot_dimension_numbers<[1], [0], [0], [1], [0, 0, 1, 1], [], []>} : vector<128x128xbf16>, vector<128x128xbf16>, vector<128x128xf32> -> vector<128x128xf32>
    %241 = arith.addf %232, %240 : vector<128x128xf32>
    %242 = vector.broadcast %3 : vector<1x128xf32> to vector<128x128xf32>
    %243 = arith.addf %241, %242 : vector<128x128xf32>
    %cst_156 = arith.constant 0.000000e+00 : f32
    %244 = vector.broadcast %cst_156 : f32 to vector<128x128xf32>
    %245 = arith.maximumf %243, %244 : vector<128x128xf32>
    %c0_157 = arith.constant 0 : index
    %c0_158 = arith.constant 0 : index
    %246 = vector.load %arg11[%c0_157, %c0_158] : memref<4x64xf32, #tpu.memory_space<vmem>>, vector<4x64xf32>
    %247 = vector.extract_strided_slice %245 {offsets = [0, 0], sizes = [64, 128], strides = [1, 1]} : vector<128x128xf32> to vector<64x128xf32>
    %cst_159 = arith.constant dense<0.000000e+00> : vector<4x128xf32>
    %248 = tpu.matmul %246, %247, %cst_159 {dimension_numbers = #tpu.dot_dimension_numbers<[1], [0], [0], [1], [0, 0, 1, 1], [], []>} : vector<4x64xf32>, vector<64x128xf32>, vector<4x128xf32> -> vector<4x128xf32>
    %c0_160 = arith.constant 0 : index
    %c0_161 = arith.constant 0 : index
    %249 = vector.load %arg11[%c0_160, %c0_161] : memref<4x64xf32, #tpu.memory_space<vmem>>, vector<4x64xf32>
    %250 = vector.extract_strided_slice %245 {offsets = [64, 0], sizes = [64, 128], strides = [1, 1]} : vector<128x128xf32> to vector<64x128xf32>
    %cst_162 = arith.constant dense<0.000000e+00> : vector<4x128xf32>
    %251 = tpu.matmul %249, %250, %cst_162 {dimension_numbers = #tpu.dot_dimension_numbers<[1], [0], [0], [1], [0, 0, 1, 1], [], []>} : vector<4x64xf32>, vector<64x128xf32>, vector<4x128xf32> -> vector<4x128xf32>
    %252 = tpu.concatenate %248, %251 in 0 : vector<4x128xf32>, vector<4x128xf32> -> vector<8x128xf32>
    %cst_163 = arith.constant 6.250000e-02 : f32
    %253 = vector.broadcast %cst_163 : f32 to vector<8x128xf32>
    %254 = arith.mulf %252, %253 : vector<8x128xf32>
    %255 = arith.truncf %254 : vector<8x128xf32> to vector<8x128xbf16>
    %c0_164 = arith.constant 0 : index
    %c0_165 = arith.constant 0 : index
    %256 = vector.load %arg18[%c0_164, %c0_165] : memref<128x128xbf16, #tpu.memory_space<vmem>>, vector<128x128xbf16>
    %cst_166 = arith.constant dense<0.000000e+00> : vector<8x128xf32>
    %257 = tpu.matmul %255, %256, %cst_166 {dimension_numbers = #tpu.dot_dimension_numbers<[1], [0], [0], [1], [0, 0, 1, 1], [], []>} : vector<8x128xbf16>, vector<128x128xbf16>, vector<8x128xf32> -> vector<8x128xf32>
    %258 = vector.broadcast %4 : vector<1x128xf32> to vector<8x128xf32>
    %259 = arith.addf %257, %258 : vector<8x128xf32>
    %260 = vector.extract_strided_slice %259 {offsets = [0, 0], sizes = [4, 128], strides = [1, 1]} : vector<8x128xf32> to vector<4x128xf32>
    %c0_167 = arith.constant 0 : index
    %c0_168 = arith.constant 0 : index
    %c0_169 = arith.constant 0 : index
    %261 = vector.load %arg20[%c0_167, %c0_168, %c0_169] : memref<2x4x128xf32, #tpu.memory_space<vmem>>, vector<1x4x128xf32>
    %262 = vector.shape_cast %261 : vector<1x4x128xf32> to vector<4x128xf32>
    %263 = vector.shape_cast %260 : vector<4x128xf32> to vector<1x4x128xf32>
    tpu.vector_store %arg20[%c0_167, %c0_168, %c0_169], %263 {strides = array<i32>} : memref<2x4x128xf32, #tpu.memory_space<vmem>>, vector<1x4x128xf32>,
    %264 = vector.extract_strided_slice %259 {offsets = [4, 0], sizes = [4, 128], strides = [1, 1]} : vector<8x128xf32> to vector<4x128xf32>
    %c1_170 = arith.constant 1 : index
    %c0_171 = arith.constant 0 : index
    %c0_172 = arith.constant 0 : index
    %265 = vector.load %arg20[%c1_170, %c0_171, %c0_172] : memref<2x4x128xf32, #tpu.memory_space<vmem>>, vector<1x4x128xf32>
    %266 = vector.shape_cast %265 : vector<1x4x128xf32> to vector<4x128xf32>
    %267 = vector.shape_cast %264 : vector<4x128xf32> to vector<1x4x128xf32>
    tpu.vector_store %arg20[%c1_170, %c0_171, %c0_172], %267 {strides = array<i32>} : memref<2x4x128xf32, #tpu.memory_space<vmem>>, vector<1x4x128xf32>,
    return
  }
  func.func @transform_0(%arg0: i32) -> (i32, i32, i32) {
    %c0_i32 = arith.constant 0 : i32
    %c0_i32_0 = arith.constant 0 : i32
    %c0_i32_1 = arith.constant 0 : i32
    return %arg0, %c0_i32, %c0_i32_0 : i32, i32, i32
  }
  func.func @transform_1(%arg0: i32) -> (i32, i32) {
    %c0_i32 = arith.constant 0 : i32
    %c0_i32_0 = arith.constant 0 : i32
    %c0_i32_1 = arith.constant 0 : i32
    return %c0_i32, %c0_i32_0 : i32, i32
  }
  func.func @transform_2(%arg0: i32) -> (i32, i32) {
    %c0_i32 = arith.constant 0 : i32
    %c0_i32_0 = arith.constant 0 : i32
    %c0_i32_1 = arith.constant 0 : i32
    return %c0_i32, %c0_i32_0 : i32, i32
  }
  func.func @transform_3(%arg0: i32) -> (i32, i32) {
    %c0_i32 = arith.constant 0 : i32
    %c0_i32_0 = arith.constant 0 : i32
    %c0_i32_1 = arith.constant 0 : i32
    return %c0_i32, %c0_i32_0 : i32, i32
  }
  func.func @transform_4(%arg0: i32) -> (i32, i32) {
    %c0_i32 = arith.constant 0 : i32
    %c0_i32_0 = arith.constant 0 : i32
    %c0_i32_1 = arith.constant 0 : i32
    return %c0_i32, %c0_i32_0 : i32, i32
  }
  func.func @transform_5(%arg0: i32) -> (i32, i32) {
    %c0_i32 = arith.constant 0 : i32
    %c0_i32_0 = arith.constant 0 : i32
    %c0_i32_1 = arith.constant 0 : i32
    return %c0_i32, %c0_i32_0 : i32, i32
  }
  func.func @transform_6(%arg0: i32) -> (i32, i32) {
    %c0_i32 = arith.constant 0 : i32
    %c0_i32_0 = arith.constant 0 : i32
    %c0_i32_1 = arith.constant 0 : i32
    return %c0_i32, %c0_i32_0 : i32, i32
  }
  func.func @transform_7(%arg0: i32) -> (i32, i32) {
    %c0_i32 = arith.constant 0 : i32
    %c0_i32_0 = arith.constant 0 : i32
    %c0_i32_1 = arith.constant 0 : i32
    return %c0_i32, %c0_i32_0 : i32, i32
  }
  func.func @transform_8(%arg0: i32) -> (i32, i32) {
    %c0_i32 = arith.constant 0 : i32
    %c0_i32_0 = arith.constant 0 : i32
    %c0_i32_1 = arith.constant 0 : i32
    return %c0_i32, %c0_i32_0 : i32, i32
  }
  func.func @transform_9(%arg0: i32) -> (i32, i32) {
    %c0_i32 = arith.constant 0 : i32
    %c0_i32_0 = arith.constant 0 : i32
    %c0_i32_1 = arith.constant 0 : i32
    return %c0_i32, %c0_i32_0 : i32, i32
  }
  func.func @transform_10(%arg0: i32) -> (i32, i32) {
    %c0_i32 = arith.constant 0 : i32
    %c0_i32_0 = arith.constant 0 : i32
    %c0_i32_1 = arith.constant 0 : i32
    return %c0_i32, %c0_i32_0 : i32, i32
  }
  func.func @transform_11(%arg0: i32) -> (i32, i32) {
    %c0_i32 = arith.constant 0 : i32
    %c0_i32_0 = arith.constant 0 : i32
    %c0_i32_1 = arith.constant 0 : i32
    return %c0_i32, %c0_i32_0 : i32, i32
  }
  func.func @transform_12(%arg0: i32) -> (i32, i32) {
    %c0_i32 = arith.constant 0 : i32
    %c0_i32_0 = arith.constant 0 : i32
    %c0_i32_1 = arith.constant 0 : i32
    return %c0_i32, %c0_i32_0 : i32, i32
  }
  func.func @transform_13(%arg0: i32) -> (i32, i32) {
    %c0_i32 = arith.constant 0 : i32
    %c0_i32_0 = arith.constant 0 : i32
    %c0_i32_1 = arith.constant 0 : i32
    return %c0_i32, %c0_i32_0 : i32, i32
  }
  func.func @transform_14(%arg0: i32) -> (i32, i32) {
    %c0_i32 = arith.constant 0 : i32
    %c0_i32_0 = arith.constant 0 : i32
    %c0_i32_1 = arith.constant 0 : i32
    return %c0_i32, %c0_i32_0 : i32, i32
  }
  func.func @transform_15(%arg0: i32) -> (i32, i32) {
    %c0_i32 = arith.constant 0 : i32
    %c0_i32_0 = arith.constant 0 : i32
    %c0_i32_1 = arith.constant 0 : i32
    return %c0_i32, %c0_i32_0 : i32, i32
  }
  func.func @transform_16(%arg0: i32) -> (i32, i32) {
    %c0_i32 = arith.constant 0 : i32
    %c0_i32_0 = arith.constant 0 : i32
    %c0_i32_1 = arith.constant 0 : i32
    return %c0_i32, %c0_i32_0 : i32, i32
  }
  func.func @transform_17(%arg0: i32) -> (i32, i32) {
    %c0_i32 = arith.constant 0 : i32
    %c0_i32_0 = arith.constant 0 : i32
    %c0_i32_1 = arith.constant 0 : i32
    return %c0_i32, %c0_i32_0 : i32, i32
  }
  func.func @transform_18(%arg0: i32) -> (i32, i32) {
    %c0_i32 = arith.constant 0 : i32
    %c0_i32_0 = arith.constant 0 : i32
    %c0_i32_1 = arith.constant 0 : i32
    return %c0_i32, %c0_i32_0 : i32, i32
  }
  func.func @transform_19(%arg0: i32) -> (i32, i32, i32) {
    %c0_i32 = arith.constant 0 : i32
    %c0_i32_0 = arith.constant 0 : i32
    %c0_i32_1 = arith.constant 0 : i32
    return %arg0, %c0_i32, %c0_i32_0 : i32, i32, i32
  }
}

</mosaic_0001>

<llo_original>
// kernel: tpu_custom_call.1
$region0: #{tpu_custom_call.1}
  #allocation0 [shape = 'u32[]', space=smem, size = 0x4, offset = 0x4, fixed_abs, tag = 'smem constant byte address 0x4 - core index']
  #allocation1 [shape = 'u32[72,128]{1,0:T(1,128)}', space=vmem, size = 0x9000, scoped, tag = 'internal scratch']
  %s0 = inlined_call_operand.hbm [shape: f32[8,64,256], index: 0, kind: input, shape index: {}]
  %s1 = inlined_call_operand.vmem [shape: f32[4,64], index: 1, kind: input, shape index: {}]
  %s2 = inlined_call_operand.vmem [shape: f32[64,4], index: 2, kind: input, shape index: {}]
  %s3 = inlined_call_operand.vmem [shape: f32[4,64], index: 3, kind: input, shape index: {}]
  %s4 = inlined_call_operand.vmem [shape: f32[64,16], index: 4, kind: input, shape index: {}]
  %s5 = inlined_call_operand.vmem [shape: f32[1,16], index: 5, kind: input, shape index: {}]
  %s6 = inlined_call_operand.vmem [shape: f32[16,4], index: 6, kind: input, shape index: {}]
  %s7 = inlined_call_operand.vmem [shape: f32[64,4], index: 7, kind: input, shape index: {}]
  %s8 = inlined_call_operand.vmem [shape: f32[64,16], index: 8, kind: input, shape index: {}]
  %s9 = inlined_call_operand.vmem [shape: f32[64,16], index: 9, kind: input, shape index: {}]
  %s10 = inlined_call_operand.vmem [shape: f32[4,64], index: 10, kind: input, shape index: {}]
  %s11 = inlined_call_operand.vmem [shape: f32[16,1], index: 11, kind: input, shape index: {}]
  %s12 = inlined_call_operand.vmem [shape: f32[64,2], index: 12, kind: input, shape index: {}]
  %s13 = inlined_call_operand.vmem [shape: f32[3,64], index: 13, kind: input, shape index: {}]
  %s14 = inlined_call_operand.vmem [shape: bf16[64,128], index: 14, kind: input, shape index: {}]
  %s15 = inlined_call_operand.vmem [shape: bf16[256,128], index: 15, kind: input, shape index: {}]
  %s16 = inlined_call_operand.vmem [shape: bf16[128,128], index: 16, kind: input, shape index: {}]
  %s17 = inlined_call_operand.vmem [shape: bf16[128,128], index: 17, kind: input, shape index: {}]
  %s18 = inlined_call_operand.vmem [shape: f32[2,128], index: 18, kind: input, shape index: {}]
  %s19 = inlined_call_operand.hbm [shape: f32[8,4,128], index: 19, kind: output, shape index: {}]
  %s20 = sld [smem:[#allocation0]]
  $region113: #{tpu_custom_call.1} parent=0
    _
  %s22 = ssub.s32 1, %s20
  %s23 = scalar_select 0, %s22, %s20
  $region1: #{tpu_custom_call.1} parent=0
    #allocation2 [shape = 'u8[262144]{0}', space=vmem, size = 0x40000, scoped, tag = 'input window, operand 0']
    #allocation3 [shape = 's32[2]{0}', space=sflag, size = 0x8, scoped, tag = 'scoped memory for tpu_custom_call.1']
    #allocation4 [shape = 's32[2]{0}', space=sflag, size = 0x8, scoped, tag = 'scoped memory for tpu_custom_call.1']
    #allocation5 [shape = 'u8[8192]{0}', space=vmem, size = 0x2000, scoped, tag = 'output window, operand 0']
    %24 = vsyncpa [#allocation3], 0
    %s25 = scalar_lea.sflag [#allocation3], 1
    %26 = vsyncpa %s25, 0
    %27 = vsyncpa [#allocation4], 0
    %s28 = scalar_lea.sflag [#allocation4], 1
    %29 = vsyncpa %s28, 0
    loop: start=0, step=1, limit=6
    $region2: #{tpu_custom_call.1} parent=1 // loop_pre_header
      _
    $region3: #{tpu_custom_call.1} parent=1 // loop_header
      %s31 = sphi 0, %s35
      %p32 = scmp.ge.s32.totalorder %s31, 6
      %s41 = sphi 0, %s43
      %s44 = sphi 0, %s41
      %s45 = sphi 0, %s44
      %s61 = sphi 0, %s45
      %s65 = sphi 0, %s65
      %s67 = sphi 0, %s65
      %s68 = sphi 0, %s67
      %s82 = sphi 0, %s68
      %s86 = sphi 0, %s86
      %s88 = sphi 0, %s86
      %s89 = sphi 0, %s88
      %s103 = sphi 0, %s89
      %s107 = sphi 0, %s107
      %s109 = sphi 0, %s107
      %s110 = sphi 0, %s109
      %s124 = sphi 0, %s110
      %s128 = sphi 0, %s128
      %s130 = sphi 0, %s128
      %s131 = sphi 0, %s130
      %s145 = sphi 0, %s131
      %s149 = sphi 0, %s149
      %s151 = sphi 0, %s149
      %s152 = sphi 0, %s151
      %s166 = sphi 0, %s152
      %s170 = sphi 0, %s170
      %s172 = sphi 0, %s170
      %s173 = sphi 0, %s172
      %s187 = sphi 0, %s173
      %s191 = sphi 0, %s191
      %s193 = sphi 0, %s191
      %s194 = sphi 0, %s193
      %s208 = sphi 0, %s194
      %s212 = sphi 0, %s212
      %s214 = sphi 0, %s212
      %s215 = sphi 0, %s214
      %s229 = sphi 0, %s215
      %s233 = sphi 0, %s233
      %s235 = sphi 0, %s233
      %s236 = sphi 0, %s235
      %s250 = sphi 0, %s236
      %s254 = sphi 0, %s254
      %s256 = sphi 0, %s254
      %s257 = sphi 0, %s256
      %s271 = sphi 0, %s257
      %s275 = sphi 0, %s275
      %s277 = sphi 0, %s275
      %s278 = sphi 0, %s277
      %s292 = sphi 0, %s278
      %s296 = sphi 0, %s296
      %s298 = sphi 0, %s296
      %s299 = sphi 0, %s298
      %s313 = sphi 0, %s299
      %s317 = sphi 0, %s317
      %s319 = sphi 0, %s317
      %s320 = sphi 0, %s319
      %s334 = sphi 0, %s320
      %s338 = sphi 0, %s338
      %s340 = sphi 0, %s338
      %s341 = sphi 0, %s340
      %s355 = sphi 0, %s341
      %s359 = sphi 0, %s359
      %s361 = sphi 0, %s359
      %s362 = sphi 0, %s361
      %s376 = sphi 0, %s362
      %s380 = sphi 0, %s380
      %s382 = sphi 0, %s380
      %s383 = sphi 0, %s382
      %s397 = sphi 0, %s383
      %s401 = sphi 0, %s401
      %s403 = sphi 0, %s401
      %s404 = sphi 0, %s403
      %s418 = sphi 0, %s404
      %s422 = sphi 0, %s422
      %s424 = sphi 0, %s422
      %s425 = sphi 0, %s424
      %s439 = sphi 0, %s425
      %s445 = sphi 0, %s447
      %s448 = sphi 0, %s445
      %s449 = sphi 0, %s448
      %s465 = sphi 0, %s449
    $region4: #{tpu_custom_call.1} parent=1 // loop_header_branch
      %34 = sbr.rel (%p32) target = $region8
    $region5: #{tpu_custom_call.1} parent=1 // loop_body
      %s36 = ssub.s32 %s31, 1
      %s37 = ssub.s32 %s31, 2
      %s38 = sadd.s32 %s31, 1
      %s39 = ssub.s32 %s31, %s38
      %p40 = scmp.eq.s32.totalorder %s39, 0
      %s42 = sadd.s32 %s41, 1
      %s43 = scalar_select %p40, %s41, %s42
      %p46 = pneg %p40
      %p47 = scmp.eq.s32.totalorder %s31, 3
      %p48 = por %p46, %p47
      %p49 = scmp.ne.s32.totalorder %s41, %s44
      %p50 = scmp.eq.s32.totalorder %s31, 0
      %p51 = por %p49, %p50
      %p52 = scmp.ne.s32.totalorder %s41, %s44
      %p53 = scmp.eq.s32.totalorder %s36, 3
      %p54 = por %p52, %p53
      %p55 = scmp.ne.s32.totalorder %s44, %s45
      %p56 = scmp.eq.s32.totalorder %s36, 0
      %p57 = por %p55, %p56
      %p58 = scmp.ne.s32.totalorder %s44, %s45
      %p59 = scmp.eq.s32.totalorder %s37, 3
      %p60 = por %p58, %p59
      %p62 = scmp.ne.s32.totalorder %s45, %s61
      %p63 = scmp.eq.s32.totalorder %s37, 0
      %p64 = por %p62, %p63
      %s66 = sadd.s32 %s65, 1
      %p69 = scmp.eq.s32.totalorder %s31, 3
      %p70 = scmp.ne.s32.totalorder %s65, %s67
      %p71 = scmp.eq.s32.totalorder %s31, 0
      %p72 = por %p70, %p71
      %p73 = scmp.ne.s32.totalorder %s65, %s67
      %p74 = scmp.eq.s32.totalorder %s36, 3
      %p75 = por %p73, %p74
      %p76 = scmp.ne.s32.totalorder %s67, %s68
      %p77 = scmp.eq.s32.totalorder %s36, 0
      %p78 = por %p76, %p77
      %p79 = scmp.ne.s32.totalorder %s67, %s68
      %p80 = scmp.eq.s32.totalorder %s37, 3
      %p81 = por %p79, %p80
      %p83 = scmp.ne.s32.totalorder %s68, %s82
      %p84 = scmp.eq.s32.totalorder %s37, 0
      %p85 = por %p83, %p84
      %s87 = sadd.s32 %s86, 1
      %p90 = scmp.eq.s32.totalorder %s31, 3
      %p91 = scmp.ne.s32.totalorder %s86, %s88
      %p92 = scmp.eq.s32.totalorder %s31, 0
      %p93 = por %p91, %p92
      %p94 = scmp.ne.s32.totalorder %s86, %s88
      %p95 = scmp.eq.s32.totalorder %s36, 3
      %p96 = por %p94, %p95
      %p97 = scmp.ne.s32.totalorder %s88, %s89
      %p98 = scmp.eq.s32.totalorder %s36, 0
      %p99 = por %p97, %p98
      %p100 = scmp.ne.s32.totalorder %s88, %s89
      %p101 = scmp.eq.s32.totalorder %s37, 3
      %p102 = por %p100, %p101
      %p104 = scmp.ne.s32.totalorder %s89, %s103
      %p105 = scmp.eq.s32.totalorder %s37, 0
      %p106 = por %p104, %p105
      %s108 = sadd.s32 %s107, 1
      %p111 = scmp.eq.s32.totalorder %s31, 3
      %p112 = scmp.ne.s32.totalorder %s107, %s109
      %p113 = scmp.eq.s32.totalorder %s31, 0
      %p114 = por %p112, %p113
      %p115 = scmp.ne.s32.totalorder %s107, %s109
      %p116 = scmp.eq.s32.totalorder %s36, 3
      %p117 = por %p115, %p116
      %p118 = scmp.ne.s32.totalorder %s109, %s110
      %p119 = scmp.eq.s32.totalorder %s36, 0
      %p120 = por %p118, %p119
      %p121 = scmp.ne.s32.totalorder %s109, %s110
      %p122 = scmp.eq.s32.totalorder %s37, 3
      %p123 = por %p121, %p122
      %p125 = scmp.ne.s32.totalorder %s110, %s124
      %p126 = scmp.eq.s32.totalorder %s37, 0
      %p127 = por %p125, %p126
      %s129 = sadd.s32 %s128, 1
      %p132 = scmp.eq.s32.totalorder %s31, 3
      %p133 = scmp.ne.s32.totalorder %s128, %s130
      %p134 = scmp.eq.s32.totalorder %s31, 0
      %p135 = por %p133, %p134
      %p136 = scmp.ne.s32.totalorder %s128, %s130
      %p137 = scmp.eq.s32.totalorder %s36, 3
      %p138 = por %p136, %p137
      %p139 = scmp.ne.s32.totalorder %s130, %s131
      %p140 = scmp.eq.s32.totalorder %s36, 0
      %p141 = por %p139, %p140
      %p142 = scmp.ne.s32.totalorder %s130, %s131
      %p143 = scmp.eq.s32.totalorder %s37, 3
      %p144 = por %p142, %p143
      %p146 = scmp.ne.s32.totalorder %s131, %s145
      %p147 = scmp.eq.s32.totalorder %s37, 0
      %p148 = por %p146, %p147
      %s150 = sadd.s32 %s149, 1
      %p153 = scmp.eq.s32.totalorder %s31, 3
      %p154 = scmp.ne.s32.totalorder %s149, %s151
      %p155 = scmp.eq.s32.totalorder %s31, 0
      %p156 = por %p154, %p155
      %p157 = scmp.ne.s32.totalorder %s149, %s151
      %p158 = scmp.eq.s32.totalorder %s36, 3
      %p159 = por %p157, %p158
      %p160 = scmp.ne.s32.totalorder %s151, %s152
      %p161 = scmp.eq.s32.totalorder %s36, 0
      %p162 = por %p160, %p161
      %p163 = scmp.ne.s32.totalorder %s151, %s152
      %p164 = scmp.eq.s32.totalorder %s37, 3
      %p165 = por %p163, %p164
      %p167 = scmp.ne.s32.totalorder %s152, %s166
      %p168 = scmp.eq.s32.totalorder %s37, 0
      %p169 = por %p167, %p168
      %s171 = sadd.s32 %s170, 1
      %p174 = scmp.eq.s32.totalorder %s31, 3
      %p175 = scmp.ne.s32.totalorder %s170, %s172
      %p176 = scmp.eq.s32.totalorder %s31, 0
      %p177 = por %p175, %p176
      %p178 = scmp.ne.s32.totalorder %s170, %s172
      %p179 = scmp.eq.s32.totalorder %s36, 3
      %p180 = por %p178, %p179
      %p181 = scmp.ne.s32.totalorder %s172, %s173
      %p182 = scmp.eq.s32.totalorder %s36, 0
      %p183 = por %p181, %p182
      %p184 = scmp.ne.s32.totalorder %s172, %s173
      %p185 = scmp.eq.s32.totalorder %s37, 3
      %p186 = por %p184, %p185
      %p188 = scmp.ne.s32.totalorder %s173, %s187
      %p189 = scmp.eq.s32.totalorder %s37, 0
      %p190 = por %p188, %p189
      %s192 = sadd.s32 %s191, 1
      %p195 = scmp.eq.s32.totalorder %s31, 3
      %p196 = scmp.ne.s32.totalorder %s191, %s193
      %p197 = scmp.eq.s32.totalorder %s31, 0
      %p198 = por %p196, %p197
      %p199 = scmp.ne.s32.totalorder %s191, %s193
      %p200 = scmp.eq.s32.totalorder %s36, 3
      %p201 = por %p199, %p200
      %p202 = scmp.ne.s32.totalorder %s193, %s194
      %p203 = scmp.eq.s32.totalorder %s36, 0
      %p204 = por %p202, %p203
      %p205 = scmp.ne.s32.totalorder %s193, %s194
      %p206 = scmp.eq.s32.totalorder %s37, 3
      %p207 = por %p205, %p206
      %p209 = scmp.ne.s32.totalorder %s194, %s208
      %p210 = scmp.eq.s32.totalorder %s37, 0
      %p211 = por %p209, %p210
      %s213 = sadd.s32 %s212, 1
      %p216 = scmp.eq.s32.totalorder %s31, 3
      %p217 = scmp.ne.s32.totalorder %s212, %s214
      %p218 = scmp.eq.s32.totalorder %s31, 0
      %p219 = por %p217, %p218
      %p220 = scmp.ne.s32.totalorder %s212, %s214
      %p221 = scmp.eq.s32.totalorder %s36, 3
      %p222 = por %p220, %p221
      %p223 = scmp.ne.s32.totalorder %s214, %s215
      %p224 = scmp.eq.s32.totalorder %s36, 0
      %p225 = por %p223, %p224
      %p226 = scmp.ne.s32.totalorder %s214, %s215
      %p227 = scmp.eq.s32.totalorder %s37, 3
      %p228 = por %p226, %p227
      %p230 = scmp.ne.s32.totalorder %s215, %s229
      %p231 = scmp.eq.s32.totalorder %s37, 0
      %p232 = por %p230, %p231
      %s234 = sadd.s32 %s233, 1
      %p237 = scmp.eq.s32.totalorder %s31, 3
      %p238 = scmp.ne.s32.totalorder %s233, %s235
      %p239 = scmp.eq.s32.totalorder %s31, 0
      %p240 = por %p238, %p239
      %p241 = scmp.ne.s32.totalorder %s233, %s235
      %p242 = scmp.eq.s32.totalorder %s36, 3
      %p243 = por %p241, %p242
      %p244 = scmp.ne.s32.totalorder %s235, %s236
      %p245 = scmp.eq.s32.totalorder %s36, 0
      %p246 = por %p244, %p245
      %p247 = scmp.ne.s32.totalorder %s235, %s236
      %p248 = scmp.eq.s32.totalorder %s37, 3
      %p249 = por %p247, %p248
      %p251 = scmp.ne.s32.totalorder %s236, %s250
      %p252 = scmp.eq.s32.totalorder %s37, 0
      %p253 = por %p251, %p252
      %s255 = sadd.s32 %s254, 1
      %p258 = scmp.eq.s32.totalorder %s31, 3
      %p259 = scmp.ne.s32.totalorder %s254, %s256
      %p260 = scmp.eq.s32.totalorder %s31, 0
      %p261 = por %p259, %p260
      %p262 = scmp.ne.s32.totalorder %s254, %s256
      %p263 = scmp.eq.s32.totalorder %s36, 3
      %p264 = por %p262, %p263
      %p265 = scmp.ne.s32.totalorder %s256, %s257
      %p266 = scmp.eq.s32.totalorder %s36, 0
      %p267 = por %p265, %p266
      %p268 = scmp.ne.s32.totalorder %s256, %s257
      %p269 = scmp.eq.s32.totalorder %s37, 3
      %p270 = por %p268, %p269
      %p272 = scmp.ne.s32.totalorder %s257, %s271
      %p273 = scmp.eq.s32.totalorder %s37, 0
      %p274 = por %p272, %p273
      %s276 = sadd.s32 %s275, 1
      %p279 = scmp.eq.s32.totalorder %s31, 3
      %p280 = scmp.ne.s32.totalorder %s275, %s277
      %p281 = scmp.eq.s32.totalorder %s31, 0
      %p282 = por %p280, %p281
      %p283 = scmp.ne.s32.totalorder %s275, %s277
      %p284 = scmp.eq.s32.totalorder %s36, 3
      %p285 = por %p283, %p284
      %p286 = scmp.ne.s32.totalorder %s277, %s278
      %p287 = scmp.eq.s32.totalorder %s36, 0
      %p288 = por %p286, %p287
      %p289 = scmp.ne.s32.totalorder %s277, %s278
      %p290 = scmp.eq.s32.totalorder %s37, 3
      %p291 = por %p289, %p290
      %p293 = scmp.ne.s32.totalorder %s278, %s292
      %p294 = scmp.eq.s32.totalorder %s37, 0
      %p295 = por %p293, %p294
      %s297 = sadd.s32 %s296, 1
      %p300 = scmp.eq.s32.totalorder %s31, 3
      %p301 = scmp.ne.s32.totalorder %s296, %s298
      %p302 = scmp.eq.s32.totalorder %s31, 0
      %p303 = por %p301, %p302
      %p304 = scmp.ne.s32.totalorder %s296, %s298
      %p305 = scmp.eq.s32.totalorder %s36, 3
      %p306 = por %p304, %p305
      %p307 = scmp.ne.s32.totalorder %s298, %s299
      %p308 = scmp.eq.s32.totalorder %s36, 0
      %p309 = por %p307, %p308
      %p310 = scmp.ne.s32.totalorder %s298, %s299
      %p311 = scmp.eq.s32.totalorder %s37, 3
      %p312 = por %p310, %p311
      %p314 = scmp.ne.s32.totalorder %s299, %s313
      %p315 = scmp.eq.s32.totalorder %s37, 0
      %p316 = por %p314, %p315
      %s318 = sadd.s32 %s317, 1
      %p321 = scmp.eq.s32.totalorder %s31, 3
      %p322 = scmp.ne.s32.totalorder %s317, %s319
      %p323 = scmp.eq.s32.totalorder %s31, 0
      %p324 = por %p322, %p323
      %p325 = scmp.ne.s32.totalorder %s317, %s319
      %p326 = scmp.eq.s32.totalorder %s36, 3
      %p327 = por %p325, %p326
      %p328 = scmp.ne.s32.totalorder %s319, %s320
      %p329 = scmp.eq.s32.totalorder %s36, 0
      %p330 = por %p328, %p329
      %p331 = scmp.ne.s32.totalorder %s319, %s320
      %p332 = scmp.eq.s32.totalorder %s37, 3
      %p333 = por %p331, %p332
      %p335 = scmp.ne.s32.totalorder %s320, %s334
      %p336 = scmp.eq.s32.totalorder %s37, 0
      %p337 = por %p335, %p336
      %s339 = sadd.s32 %s338, 1
      %p342 = scmp.eq.s32.totalorder %s31, 3
      %p343 = scmp.ne.s32.totalorder %s338, %s340
      %p344 = scmp.eq.s32.totalorder %s31, 0
      %p345 = por %p343, %p344
      %p346 = scmp.ne.s32.totalorder %s338, %s340
      %p347 = scmp.eq.s32.totalorder %s36, 3
      %p348 = por %p346, %p347
      %p349 = scmp.ne.s32.totalorder %s340, %s341
      %p350 = scmp.eq.s32.totalorder %s36, 0
      %p351 = por %p349, %p350
      %p352 = scmp.ne.s32.totalorder %s340, %s341
      %p353 = scmp.eq.s32.totalorder %s37, 3
      %p354 = por %p352, %p353
      %p356 = scmp.ne.s32.totalorder %s341, %s355
      %p357 = scmp.eq.s32.totalorder %s37, 0
      %p358 = por %p356, %p357
      %s360 = sadd.s32 %s359, 1
      %p363 = scmp.eq.s32.totalorder %s31, 3
      %p364 = scmp.ne.s32.totalorder %s359, %s361
      %p365 = scmp.eq.s32.totalorder %s31, 0
      %p366 = por %p364, %p365
      %p367 = scmp.ne.s32.totalorder %s359, %s361
      %p368 = scmp.eq.s32.totalorder %s36, 3
      %p369 = por %p367, %p368
      %p370 = scmp.ne.s32.totalorder %s361, %s362
      %p371 = scmp.eq.s32.totalorder %s36, 0
      %p372 = por %p370, %p371
      %p373 = scmp.ne.s32.totalorder %s361, %s362
      %p374 = scmp.eq.s32.totalorder %s37, 3
      %p375 = por %p373, %p374
      %p377 = scmp.ne.s32.totalorder %s362, %s376
      %p378 = scmp.eq.s32.totalorder %s37, 0
      %p379 = por %p377, %p378
      %s381 = sadd.s32 %s380, 1
      %p384 = scmp.eq.s32.totalorder %s31, 3
      %p385 = scmp.ne.s32.totalorder %s380, %s382
      %p386 = scmp.eq.s32.totalorder %s31, 0
      %p387 = por %p385, %p386
      %p388 = scmp.ne.s32.totalorder %s380, %s382
      %p389 = scmp.eq.s32.totalorder %s36, 3
      %p390 = por %p388, %p389
      %p391 = scmp.ne.s32.totalorder %s382, %s383
      %p392 = scmp.eq.s32.totalorder %s36, 0
      %p393 = por %p391, %p392
      %p394 = scmp.ne.s32.totalorder %s382, %s383
      %p395 = scmp.eq.s32.totalorder %s37, 3
      %p396 = por %p394, %p395
      %p398 = scmp.ne.s32.totalorder %s383, %s397
      %p399 = scmp.eq.s32.totalorder %s37, 0
      %p400 = por %p398, %p399
      %s402 = sadd.s32 %s401, 1
      %p405 = scmp.eq.s32.totalorder %s31, 3
      %p406 = scmp.ne.s32.totalorder %s401, %s403
      %p407 = scmp.eq.s32.totalorder %s31, 0
      %p408 = por %p406, %p407
      %p409 = scmp.ne.s32.totalorder %s401, %s403
      %p410 = scmp.eq.s32.totalorder %s36, 3
      %p411 = por %p409, %p410
      %p412 = scmp.ne.s32.totalorder %s403, %s404
      %p413 = scmp.eq.s32.totalorder %s36, 0
      %p414 = por %p412, %p413
      %p415 = scmp.ne.s32.totalorder %s403, %s404
      %p416 = scmp.eq.s32.totalorder %s37, 3
      %p417 = por %p415, %p416
      %p419 = scmp.ne.s32.totalorder %s404, %s418
      %p420 = scmp.eq.s32.totalorder %s37, 0
      %p421 = por %p419, %p420
      %s423 = sadd.s32 %s422, 1
      %p426 = scmp.eq.s32.totalorder %s31, 3
      %p427 = scmp.ne.s32.totalorder %s422, %s424
      %p428 = scmp.eq.s32.totalorder %s31, 0
      %p429 = por %p427, %p428
      %p430 = scmp.ne.s32.totalorder %s422, %s424
      %p431 = scmp.eq.s32.totalorder %s36, 3
      %p432 = por %p430, %p431
      %p433 = scmp.ne.s32.totalorder %s424, %s425
      %p434 = scmp.eq.s32.totalorder %s36, 0
      %p435 = por %p433, %p434
      %p436 = scmp.ne.s32.totalorder %s424, %s425
      %p437 = scmp.eq.s32.totalorder %s37, 3
      %p438 = por %p436, %p437
      %p440 = scmp.ne.s32.totalorder %s425, %s439
      %p441 = scmp.eq.s32.totalorder %s37, 0
      %p442 = por %p440, %p441
      %s443 = ssub.s32 %s31, %s38
      %p444 = scmp.eq.s32.totalorder %s443, 0
      %s446 = sadd.s32 %s445, 1
      %s447 = scalar_select %p444, %s445, %s446
      %p450 = pneg %p444
      %p451 = scmp.eq.s32.totalorder %s31, 3
      %p452 = por %p450, %p451
      %p453 = scmp.ne.s32.totalorder %s445, %s448
      %p454 = scmp.eq.s32.totalorder %s31, 0
      %p455 = por %p453, %p454
      %p456 = scmp.ne.s32.totalorder %s445, %s448
      %p457 = scmp.eq.s32.totalorder %s36, 3
      %p458 = por %p456, %p457
      %p459 = scmp.ne.s32.totalorder %s448, %s449
      %p460 = scmp.eq.s32.totalorder %s36, 0
      %p461 = por %p459, %p460
      %p462 = scmp.ne.s32.totalorder %s448, %s449
      %p463 = scmp.eq.s32.totalorder %s37, 3
      %p464 = por %p462, %p463
      %p466 = scmp.ne.s32.totalorder %s449, %s465
      %p467 = scmp.eq.s32.totalorder %s37, 0
      %p468 = por %p466, %p467
      %p469 = scmp.le.s32.totalorder 1, %s31
      %p470 = scmp.lt.s32.totalorder %s31, 5
      %p471 = pnand %p469, %p470
      %p472 = pneg %p471
      // Predicated region
      $region9: #{tpu_custom_call.1} parent=5 // pred_check
        _
      $region10: #{tpu_custom_call.1} parent=5 // pred_check_branch
        %474 = sbr.rel (%p471) target = $region12
      $region11: #{tpu_custom_call.1} parent=5 // pred_region
        %s475 = ssub.s32 %s31, 1
        // Predicated region
        $region13: #{tpu_custom_call.1} parent=11 // pred_check
          %p476 = pneg %p78
        $region14: #{tpu_custom_call.1} parent=11 // pred_check_branch
          %478 = sbr.rel (%p476) target = $region16
        $region15: #{tpu_custom_call.1} parent=11 // pred_region
          _
        $region16: #{tpu_custom_call.1} parent=11 // pred_fallthru
          _
        // Predicated region
        $region17: #{tpu_custom_call.1} parent=11 // pred_check
          %p479 = pneg %p99
        $region18: #{tpu_custom_call.1} parent=11 // pred_check_branch
          %481 = sbr.rel (%p479) target = $region20
        $region19: #{tpu_custom_call.1} parent=11 // pred_region
          _
        $region20: #{tpu_custom_call.1} parent=11 // pred_fallthru
          _
        // Predicated region
        $region21: #{tpu_custom_call.1} parent=11 // pred_check
          %p482 = pneg %p120
        $region22: #{tpu_custom_call.1} parent=11 // pred_check_branch
          %484 = sbr.rel (%p482) target = $region24
        $region23: #{tpu_custom_call.1} parent=11 // pred_region
          _
        $region24: #{tpu_custom_call.1} parent=11 // pred_fallthru
          _
        // Predicated region
        $region25: #{tpu_custom_call.1} parent=11 // pred_check
          %p485 = pneg %p141
        $region26: #{tpu_custom_call.1} parent=11 // pred_check_branch
          %487 = sbr.rel (%p485) target = $region28
        $region27: #{tpu_custom_call.1} parent=11 // pred_region
          _
        $region28: #{tpu_custom_call.1} parent=11 // pred_fallthru
          _
        // Predicated region
        $region29: #{tpu_custom_call.1} parent=11 // pred_check
          %p488 = pneg %p162
        $region30: #{tpu_custom_call.1} parent=11 // pred_check_branch
          %490 = sbr.rel (%p488) target = $region32
        $region31: #{tpu_custom_call.1} parent=11 // pred_region
          _
        $region32: #{tpu_custom_call.1} parent=11 // pred_fallthru
          _
        // Predicated region
        $region33: #{tpu_custom_call.1} parent=11 // pred_check
          %p491 = pneg %p183
        $region34: #{tpu_custom_call.1} parent=11 // pred_check_branch
          %493 = sbr.rel (%p491) target = $region36
        $region35: #{tpu_custom_call.1} parent=11 // pred_region
          _
        $region36: #{tpu_custom_call.1} parent=11 // pred_fallthru
          _
        // Predicated region
        $region37: #{tpu_custom_call.1} parent=11 // pred_check
          %p494 = pneg %p204
        $region38: #{tpu_custom_call.1} parent=11 // pred_check_branch
          %496 = sbr.rel (%p494) target = $region40
        $region39: #{tpu_custom_call.1} parent=11 // pred_region
          _
        $region40: #{tpu_custom_call.1} parent=11 // pred_fallthru
          _
        // Predicated region
        $region41: #{tpu_custom_call.1} parent=11 // pred_check
          %p497 = pneg %p225
        $region42: #{tpu_custom_call.1} parent=11 // pred_check_branch
          %499 = sbr.rel (%p497) target = $region44
        $region43: #{tpu_custom_call.1} parent=11 // pred_region
          _
        $region44: #{tpu_custom_call.1} parent=11 // pred_fallthru
          _
        // Predicated region
        $region45: #{tpu_custom_call.1} parent=11 // pred_check
          %p500 = pneg %p246
        $region46: #{tpu_custom_call.1} parent=11 // pred_check_branch
          %502 = sbr.rel (%p500) target = $region48
        $region47: #{tpu_custom_call.1} parent=11 // pred_region
          _
        $region48: #{tpu_custom_call.1} parent=11 // pred_fallthru
          _
        // Predicated region
        $region49: #{tpu_custom_call.1} parent=11 // pred_check
          %p503 = pneg %p267
        $region50: #{tpu_custom_call.1} parent=11 // pred_check_branch
          %505 = sbr.rel (%p503) target = $region52
        $region51: #{tpu_custom_call.1} parent=11 // pred_region
          _
        $region52: #{tpu_custom_call.1} parent=11 // pred_fallthru
          _
        // Predicated region
        $region53: #{tpu_custom_call.1} parent=11 // pred_check
          %p506 = pneg %p288
        $region54: #{tpu_custom_call.1} parent=11 // pred_check_branch
          %508 = sbr.rel (%p506) target = $region56
        $region55: #{tpu_custom_call.1} parent=11 // pred_region
          _
        $region56: #{tpu_custom_call.1} parent=11 // pred_fallthru
          _
        // Predicated region
        $region57: #{tpu_custom_call.1} parent=11 // pred_check
          %p509 = pneg %p309
        $region58: #{tpu_custom_call.1} parent=11 // pred_check_branch
          %511 = sbr.rel (%p509) target = $region60
        $region59: #{tpu_custom_call.1} parent=11 // pred_region
          _
        $region60: #{tpu_custom_call.1} parent=11 // pred_fallthru
          _
        // Predicated region
        $region61: #{tpu_custom_call.1} parent=11 // pred_check
          %p512 = pneg %p330
        $region62: #{tpu_custom_call.1} parent=11 // pred_check_branch
          %514 = sbr.rel (%p512) target = $region64
        $region63: #{tpu_custom_call.1} parent=11 // pred_region
          _
        $region64: #{tpu_custom_call.1} parent=11 // pred_fallthru
          _
        // Predicated region
        $region65: #{tpu_custom_call.1} parent=11 // pred_check
          %p515 = pneg %p351
        $region66: #{tpu_custom_call.1} parent=11 // pred_check_branch
          %517 = sbr.rel (%p515) target = $region68
        $region67: #{tpu_custom_call.1} parent=11 // pred_region
          _
        $region68: #{tpu_custom_call.1} parent=11 // pred_fallthru
          _
        // Predicated region
        $region69: #{tpu_custom_call.1} parent=11 // pred_check
          %p518 = pneg %p372
        $region70: #{tpu_custom_call.1} parent=11 // pred_check_branch
          %520 = sbr.rel (%p518) target = $region72
        $region71: #{tpu_custom_call.1} parent=11 // pred_region
          _
        $region72: #{tpu_custom_call.1} parent=11 // pred_fallthru
          _
        // Predicated region
        $region73: #{tpu_custom_call.1} parent=11 // pred_check
          %p521 = pneg %p393
        $region74: #{tpu_custom_call.1} parent=11 // pred_check_branch
          %523 = sbr.rel (%p521) target = $region76
        $region75: #{tpu_custom_call.1} parent=11 // pred_region
          _
        $region76: #{tpu_custom_call.1} parent=11 // pred_fallthru
          _
        // Predicated region
        $region77: #{tpu_custom_call.1} parent=11 // pred_check
          %p524 = pneg %p414
        $region78: #{tpu_custom_call.1} parent=11 // pred_check_branch
          %526 = sbr.rel (%p524) target = $region80
        $region79: #{tpu_custom_call.1} parent=11 // pred_region
          _
        $region80: #{tpu_custom_call.1} parent=11 // pred_fallthru
          _
        // Predicated region
        $region81: #{tpu_custom_call.1} parent=11 // pred_check
          %p527 = pneg %p435
        $region82: #{tpu_custom_call.1} parent=11 // pred_check_branch
          %529 = sbr.rel (%p527) target = $region84
        $region83: #{tpu_custom_call.1} parent=11 // pred_region
          _
        $region84: #{tpu_custom_call.1} parent=11 // pred_fallthru
          _
      $region12: #{tpu_custom_call.1} parent=5 // pred_fallthru
        _
      %p530 = scmp.lt.s32.totalorder %s31, 4
      // Predicated region
      $region85: #{tpu_custom_call.1} parent=5 // pred_check
        %p531 = pneg %p530
      $region86: #{tpu_custom_call.1} parent=5 // pred_check_branch
        %533 = sbr.rel (%p531) target = $region88
      $region87: #{tpu_custom_call.1} parent=5 // pred_region
        // Predicated region
        $region89: #{tpu_custom_call.1} parent=87 // pred_check
          %p534 = pneg %p51
        $region90: #{tpu_custom_call.1} parent=87 // pred_check_branch
          %536 = sbr.rel (%p534) target = $region92
        $region91: #{tpu_custom_call.1} parent=87 // pred_region
          %s537 = sand.u32 %s41, 1
          %s538 = scalar_lea.sflag [#allocation3], %s537
          %s539 = sand.u32 %s41, 1
          %s540 = smul.addr %s539, 256
          %s541 = scalar_lea.vmem [#allocation2], %s540
          %s542 = smul.u32 2, %s31
          %544 = vsyncadd %s538, 0
          %s545 = smul.addr %s542, 16
          %s546 = smul.addr %s545, 8
          %s547 = scalar_lea.hbm %s0, %s546
          %s548 = sshll.u32 %s547, 4
          %s549 = int_to_ptr.hbm [resolvable:$true] %s548
          %s550 = sshll.u32 %s541, 4
          %s551 = int_to_ptr.vmem [resolvable:$true] %s550
          %556 = dma.hbm_to_vmem [thread:$0]  %s549, 4096, %s551, %s538, 256, 256, 16
        $region92: #{tpu_custom_call.1} parent=87 // pred_fallthru
          _
      $region88: #{tpu_custom_call.1} parent=5 // pred_fallthru
        _
      %p557 = scmp.le.s32.totalorder 1, %s31
      %p558 = scmp.lt.s32.totalorder %s31, 5
      %p559 = pnand %p557, %p558
      %p560 = pneg %p559
      // Predicated region
      $region93: #{tpu_custom_call.1} parent=5 // pred_check
        _
      $region94: #{tpu_custom_call.1} parent=5 // pred_check_branch
        %562 = sbr.rel (%p559) target = $region96
      $region95: #{tpu_custom_call.1} parent=5 // pred_region
        %s563 = ssub.s32 %s31, 1
        %s564 = sand.u32 %s44, 1
        %s565 = scalar_lea.sflag [#allocation3], %s564
        %s566 = sand.u32 %s44, 1
        %s567 = smul.addr %s566, 256
        %s568 = scalar_lea.vmem [#allocation2], %s567
        // Predicated region
        $region97: #{tpu_custom_call.1} parent=95 // pred_check
          %p569 = pneg %p57
        $region98: #{tpu_custom_call.1} parent=95 // pred_check_branch
          %571 = sbr.rel (%p569) target = $region100
        $region99: #{tpu_custom_call.1} parent=95 // pred_region
          %573 = dma.done %s565, 4096
        $region100: #{tpu_custom_call.1} parent=95 // pred_fallthru
          _
        %s574 = sand.u32 %s44, 1
        %s575 = scalar_lea.sflag [#allocation3], %s574
        %s576 = sand.u32 %s44, 1
        %s577 = smul.addr %s576, 256
        %s578 = scalar_lea.vmem [#allocation2], %s577
        %p579 = pneg %p57
        %p580 = pneg %p54
        %p581 = pneg %p78
        %p582 = pneg %p75
        %p583 = pneg %p99
        %p584 = pneg %p96
        %p585 = pneg %p120
        %p586 = pneg %p117
        %p587 = pneg %p141
        %p588 = pneg %p138
        %p589 = pneg %p162
        %p590 = pneg %p159
        %p591 = pneg %p183
        %p592 = pneg %p180
        %p593 = pneg %p204
        %p594 = pneg %p201
        %p595 = pneg %p225
        %p596 = pneg %p222
        %p597 = pneg %p246
        %p598 = pneg %p243
        %p599 = pneg %p267
        %p600 = pneg %p264
        %p601 = pneg %p288
        %p602 = pneg %p285
        %p603 = pneg %p309
        %p604 = pneg %p306
        %p605 = pneg %p330
        %p606 = pneg %p327
        %p607 = pneg %p351
        %p608 = pneg %p348
        %p609 = pneg %p372
        %p610 = pneg %p369
        %p611 = pneg %p393
        %p612 = pneg %p390
        %p613 = pneg %p414
        %p614 = pneg %p411
        %p615 = pneg %p435
        %p616 = pneg %p432
        %p617 = pneg %p461
        %p618 = pneg %p458
        %s619 = sand.u32 %s448, 1
        %s620 = scalar_lea.sflag [#allocation4], %s619
        %s621 = sand.u32 %s448, 1
        %s622 = smul.addr %s621, 8
        %s623 = scalar_lea.vmem [#allocation5], %s622
        %s624 = smul.u32 2, %s36
        %s625 = smul.u32 2, %s36
        %v627 = vld [vmem:[%s13] sm:$0x7]
        %v628 = vld [vmem:[%s12] sm:$0xff]
        %v629 = vld [vmem:[%s12 + $0x8] sm:$0xff]
        %v630 = vld [vmem:[%s12 + $0x10] sm:$0xff]
        %v631 = vld [vmem:[%s12 + $0x18] sm:$0xff]
        %v632 = vld [vmem:[%s12 + $0x20] sm:$0xff]
        %v633 = vld [vmem:[%s12 + $0x28] sm:$0xff]
        %v634 = vld [vmem:[%s12 + $0x30] sm:$0xff]
        %v635 = vld [vmem:[%s12 + $0x38] sm:$0xff]
        %v636 = vld [vmem:[%s18] sm:$0x3]
        %v637 = vld [vmem:[%s568] sm:$0xff]
        %v638 = vld [vmem:[%s568 + $0x8] sm:$0xff]
        %v639 = vld [vmem:[%s568 + $0x10] sm:$0xff]
        %v640 = vld [vmem:[%s568 + $0x18] sm:$0xff]
        %v641 = vld [vmem:[%s568 + $0x20] sm:$0xff]
        %v642 = vld [vmem:[%s568 + $0x28] sm:$0xff]
        %v643 = vld [vmem:[%s568 + $0x30] sm:$0xff]
        %v644 = vld [vmem:[%s568 + $0x38] sm:$0xff]
        %v645 = vld [vmem:[%s568 + $0x40] sm:$0xff]
        %v646 = vld [vmem:[%s568 + $0x48] sm:$0xff]
        %v647 = vld [vmem:[%s568 + $0x50] sm:$0xff]
        %v648 = vld [vmem:[%s568 + $0x58] sm:$0xff]
        %v649 = vld [vmem:[%s568 + $0x60] sm:$0xff]
        %v650 = vld [vmem:[%s568 + $0x68] sm:$0xff]
        %v651 = vld [vmem:[%s568 + $0x70] sm:$0xff]
        %v652 = vld [vmem:[%s568 + $0x78] sm:$0xff]
        %v653 = vld [vmem:[%s1] sm:$0xf]
        %vm654 = vcmask 523264
        %v656 = vsel %vm654, %v653, 0
        %658 = vmatpush.msra.mxu0 0.0
        %659 = vmatpush.msra.mxu0 0.0
        %660 = vmatpush.msra.mxu0 0.0
        %661 = vmatpush.msra.mxu0 0.0
        %662 = vmatpush.msra.mxu0 0.0
        %663 = vmatpush.msra.mxu0 0.0
        %664 = vmatpush.msra.mxu0 0.0
        %665 = vmatpush.msra.mxu0 0.0
        %666 = vmatpush.msra.mxu0 %v651
        %667 = vmatpush.msra.mxu0 %v649
        %668 = vmatpush.msra.mxu0 %v647
        %669 = vmatpush.msra.mxu0 %v645
        %670 = vmatpush.msra.mxu0 %v643
        %671 = vmatpush.msra.mxu0 %v641
        %672 = vmatpush.msra.mxu0 %v639
        %673 = vmatpush.msra.mxu0 %v637
        %674 = vmatmul.f32.gmra.mxu0 %v656
        %v675 = vpop.f32.mrf.mxu0
        %v676 = vadd.f32 0.0, %v675
        %677 = vdwg.mxu0
        %678 = vmatpush.msra.mxu0 0.0
        %679 = vmatpush.msra.mxu0 0.0
        %680 = vmatpush.msra.mxu0 0.0
        %681 = vmatpush.msra.mxu0 0.0
        %682 = vmatpush.msra.mxu0 0.0
        %683 = vmatpush.msra.mxu0 0.0
        %684 = vmatpush.msra.mxu0 0.0
        %685 = vmatpush.msra.mxu0 0.0
        %686 = vmatpush.msra.mxu0 %v652
        %687 = vmatpush.msra.mxu0 %v650
        %688 = vmatpush.msra.mxu0 %v648
        %689 = vmatpush.msra.mxu0 %v646
        %690 = vmatpush.msra.mxu0 %v644
        %691 = vmatpush.msra.mxu0 %v642
        %692 = vmatpush.msra.mxu0 %v640
        %693 = vmatpush.msra.mxu0 %v638
        %694 = vmatmul.f32.gmra.mxu0 %v656
        %v695 = vpop.f32.mrf.mxu0
        %v696 = vadd.f32 0.0, %v695
        %697 = vdwg.mxu0
        %698 = vmatpush.xpose.msra.mxu0 0.0
        %699 = vmatpush.xpose.msra.mxu0 0.0
        %700 = vmatpush.xpose.msra.mxu0 0.0
        %701 = vmatpush.xpose.msra.mxu0 0.0
        %702 = vmatpush.xpose.msra.mxu0 0.0
        %703 = vmatpush.xpose.msra.mxu0 0.0
        %704 = vmatpush.xpose.msra.mxu0 0.0
        %705 = vmatpush.xpose.msra.mxu0 0.0
        %706 = vmatpush.xpose.msra.mxu0 0.0
        %707 = vmatpush.xpose.msra.mxu0 0.0
        %708 = vmatpush.xpose.msra.mxu0 0.0
        %709 = vmatpush.xpose.msra.mxu0 0.0
        %710 = vmatpush.xpose.msra.mxu0 0.0
        %711 = vmatpush.xpose.msra.mxu0 0.0
        %712 = vmatpush.xpose.msra.mxu0 0.0
        %713 = vmatpush.xpose.msra.mxu0 %v676
        %714 = vmatmul.f32.gmra.mxu0 %v637
        %v715 = vpop.f32.mrf.mxu0
        %v716 = vadd.f32 0.0, %v715
        %717 = vmatmul.f32.gmra.mxu0 %v639
        %v718 = vpop.f32.mrf.mxu0
        %v719 = vadd.f32 0.0, %v718
        %720 = vmatmul.f32.gmra.mxu0 %v641
        %v721 = vpop.f32.mrf.mxu0
        %v722 = vadd.f32 0.0, %v721
        %723 = vmatmul.f32.gmra.mxu0 %v643
        %v724 = vpop.f32.mrf.mxu0
        %v725 = vadd.f32 0.0, %v724
        %726 = vmatmul.f32.gmra.mxu0 %v645
        %v727 = vpop.f32.mrf.mxu0
        %v728 = vadd.f32 0.0, %v727
        %729 = vmatmul.f32.gmra.mxu0 %v647
        %v730 = vpop.f32.mrf.mxu0
        %v731 = vadd.f32 0.0, %v730
        %732 = vmatmul.f32.gmra.mxu0 %v649
        %v733 = vpop.f32.mrf.mxu0
        %v734 = vadd.f32 0.0, %v733
        %735 = vmatmul.f32.gmra.mxu0 %v651
        %v736 = vpop.f32.mrf.mxu0
        %v737 = vadd.f32 0.0, %v736
        %738 = vdwg.mxu0
        %739 = vmatpush.xpose.msra.mxu0 0.0
        %740 = vmatpush.xpose.msra.mxu0 0.0
        %741 = vmatpush.xpose.msra.mxu0 0.0
        %742 = vmatpush.xpose.msra.mxu0 0.0
        %743 = vmatpush.xpose.msra.mxu0 0.0
        %744 = vmatpush.xpose.msra.mxu0 0.0
        %745 = vmatpush.xpose.msra.mxu0 0.0
        %746 = vmatpush.xpose.msra.mxu0 0.0
        %747 = vmatpush.xpose.msra.mxu0 0.0
        %748 = vmatpush.xpose.msra.mxu0 0.0
        %749 = vmatpush.xpose.msra.mxu0 0.0
        %750 = vmatpush.xpose.msra.mxu0 0.0
        %751 = vmatpush.xpose.msra.mxu0 0.0
        %752 = vmatpush.xpose.msra.mxu0 0.0
        %753 = vmatpush.xpose.msra.mxu0 0.0
        %754 = vmatpush.xpose.msra.mxu0 %v696
        %755 = vmatmul.f32.gmra.mxu0 %v638
        %v756 = vpop.f32.mrf.mxu0
        %v757 = vadd.f32 %v716, %v756
        %758 = vmatmul.f32.gmra.mxu0 %v640
        %v759 = vpop.f32.mrf.mxu0
        %v760 = vadd.f32 %v719, %v759
        %761 = vmatmul.f32.gmra.mxu0 %v642
        %v762 = vpop.f32.mrf.mxu0
        %v763 = vadd.f32 %v722, %v762
        %764 = vmatmul.f32.gmra.mxu0 %v644
        %v765 = vpop.f32.mrf.mxu0
        %v766 = vadd.f32 %v725, %v765
        %767 = vmatmul.f32.gmra.mxu0 %v646
        %v768 = vpop.f32.mrf.mxu0
        %v769 = vadd.f32 %v728, %v768
        %770 = vmatmul.f32.gmra.mxu0 %v648
        %v771 = vpop.f32.mrf.mxu0
        %v772 = vadd.f32 %v731, %v771
        %773 = vmatmul.f32.gmra.mxu0 %v650
        %v774 = vpop.f32.mrf.mxu0
        %v775 = vadd.f32 %v734, %v774
        %776 = vmatmul.f32.gmra.mxu0 %v652
        %v777 = vpop.f32.mrf.mxu0
        %v778 = vadd.f32 %v737, %v777
        %779 = vdwg.mxu0
        %v780 = vld [vmem:[%s2] sm:$0xff]
        %v781 = vld [vmem:[%s2 + $0x8] sm:$0xff]
        %v782 = vld [vmem:[%s2 + $0x10] sm:$0xff]
        %v783 = vld [vmem:[%s2 + $0x18] sm:$0xff]
        %v784 = vld [vmem:[%s2 + $0x20] sm:$0xff]
        %v785 = vld [vmem:[%s2 + $0x28] sm:$0xff]
        %v786 = vld [vmem:[%s2 + $0x30] sm:$0xff]
        %v787 = vld [vmem:[%s2 + $0x38] sm:$0xff]
        %v788 = vmul.f32 %v757, %v780
        %v789 = vmul.f32 %v760, %v781
        %v790 = vmul.f32 %v763, %v782
        %v791 = vmul.f32 %v766, %v783
        %v792 = vmul.f32 %v769, %v784
        %v793 = vmul.f32 %v772, %v785
        %v794 = vmul.f32 %v775, %v786
        %v795 = vmul.f32 %v778, %v787
        %vm796 = vcmask 31744
        %v797 = vsel %vm796, %v788, 0.0
        %798 = vadd.xlane.f32.xlu0 %v797
        %v799 = vpop.xlane.xlu0 %798
        %v800 = vsel %vm796, %v789, 0.0
        %801 = vadd.xlane.f32.xlu0 %v800
        %v802 = vpop.xlane.xlu0 %801
        %v803 = vsel %vm796, %v790, 0.0
        %804 = vadd.xlane.f32.xlu0 %v803
        %v805 = vpop.xlane.xlu0 %804
        %v806 = vsel %vm796, %v791, 0.0
        %807 = vadd.xlane.f32.xlu0 %v806
        %v808 = vpop.xlane.xlu0 %807
        %v809 = vsel %vm796, %v792, 0.0
        %810 = vadd.xlane.f32.xlu0 %v809
        %v811 = vpop.xlane.xlu0 %810
        %v812 = vsel %vm796, %v793, 0.0
        %813 = vadd.xlane.f32.xlu0 %v812
        %v814 = vpop.xlane.xlu0 %813
        %v815 = vsel %vm796, %v794, 0.0
        %816 = vadd.xlane.f32.xlu0 %v815
        %v817 = vpop.xlane.xlu0 %816
        %v818 = vsel %vm796, %v795, 0.0
        %819 = vadd.xlane.f32.xlu0 %v818
        %v820 = vpop.xlane.xlu0 %819
        %v821 = vmul.f32 %v637, %v637
        %v822 = vmul.f32 %v638, %v638
        %v823 = vmul.f32 %v639, %v639
        %v824 = vmul.f32 %v640, %v640
        %v825 = vmul.f32 %v641, %v641
        %v826 = vmul.f32 %v642, %v642
        %v827 = vmul.f32 %v643, %v643
        %v828 = vmul.f32 %v644, %v644
        %v829 = vmul.f32 %v645, %v645
        %v830 = vmul.f32 %v646, %v646
        %v831 = vmul.f32 %v647, %v647
        %v832 = vmul.f32 %v648, %v648
        %v833 = vmul.f32 %v649, %v649
        %v834 = vmul.f32 %v650, %v650
        %v835 = vmul.f32 %v651, %v651
        %v836 = vmul.f32 %v652, %v652
        %v837 = vadd.f32 %v821, %v822
        %838 = vadd.xlane.f32.xlu0 %v837
        %v839 = vpop.xlane.xlu0 %838
        %v840 = vadd.f32 %v823, %v824
        %841 = vadd.xlane.f32.xlu0 %v840
        %v842 = vpop.xlane.xlu0 %841
        %v843 = vadd.f32 %v825, %v826
        %844 = vadd.xlane.f32.xlu0 %v843
        %v845 = vpop.xlane.xlu0 %844
        %v846 = vadd.f32 %v827, %v828
        %847 = vadd.xlane.f32.xlu0 %v846
        %v848 = vpop.xlane.xlu0 %847
        %v849 = vadd.f32 %v829, %v830
        %850 = vadd.xlane.f32.xlu0 %v849
        %v851 = vpop.xlane.xlu0 %850
        %v852 = vadd.f32 %v831, %v832
        %853 = vadd.xlane.f32.xlu0 %v852
        %v854 = vpop.xlane.xlu0 %853
        %v855 = vadd.f32 %v833, %v834
        %856 = vadd.xlane.f32.xlu0 %v855
        %v857 = vpop.xlane.xlu0 %856
        %v858 = vadd.f32 %v835, %v836
        %859 = vadd.xlane.f32.xlu0 %v858
        %v860 = vpop.xlane.xlu0 %859
        %v861 = vmul.f32 %v676, %v676
        %v862 = vmul.f32 %v696, %v696
        %vm863 = vcmask 1043456
        %v864 = vsel %vm863, %v861, 0.0
        %v865 = vsel %vm863, %v862, 0.0
        %v866 = vadd.f32 %v864, %v865
        %867 = vadd.xlane.f32.xlu0 %v866
        %v868 = vpop.xlane.xlu0 %867
        %v870 = vsel %vm796, %v780, 0
        %v873 = vsel %vm796, %v781, 0
        %v876 = vsel %vm796, %v782, 0
        %v879 = vsel %vm796, %v783, 0
        %v882 = vsel %vm796, %v784, 0
        %v885 = vsel %vm796, %v785, 0
        %v888 = vsel %vm796, %v786, 0
        %v891 = vsel %vm796, %v787, 0
        %v894 = vsel %vm863, %v868, 0
        %896 = vmatpush.msra.mxu0 0.0
        %897 = vmatpush.msra.mxu0 0.0
        %898 = vmatpush.msra.mxu0 0.0
        %899 = vmatpush.msra.mxu0 0.0
        %900 = vmatpush.msra.mxu0 0.0
        %901 = vmatpush.msra.mxu0 0.0
        %902 = vmatpush.msra.mxu0 0.0
        %903 = vmatpush.msra.mxu0 0.0
        %904 = vmatpush.msra.mxu0 0.0
        %905 = vmatpush.msra.mxu0 0.0
        %906 = vmatpush.msra.mxu0 0.0
        %907 = vmatpush.msra.mxu0 0.0
        %908 = vmatpush.msra.mxu0 0.0
        %909 = vmatpush.msra.mxu0 0.0
        %910 = vmatpush.msra.mxu0 0.0
        %911 = vmatpush.msra.mxu0 %v894
        %912 = vmatmul.f32.gmra.mxu0 %v870
        %v913 = vpop.f32.mrf.mxu0
        %v914 = vadd.f32 0.0, %v913
        %915 = vmatmul.f32.gmra.mxu0 %v873
        %v916 = vpop.f32.mrf.mxu0
        %v917 = vadd.f32 0.0, %v916
        %918 = vmatmul.f32.gmra.mxu0 %v876
        %v919 = vpop.f32.mrf.mxu0
        %v920 = vadd.f32 0.0, %v919
        %921 = vmatmul.f32.gmra.mxu0 %v879
        %v922 = vpop.f32.mrf.mxu0
        %v923 = vadd.f32 0.0, %v922
        %924 = vmatmul.f32.gmra.mxu0 %v882
        %v925 = vpop.f32.mrf.mxu0
        %v926 = vadd.f32 0.0, %v925
        %927 = vmatmul.f32.gmra.mxu0 %v885
        %v928 = vpop.f32.mrf.mxu0
        %v929 = vadd.f32 0.0, %v928
        %930 = vmatmul.f32.gmra.mxu0 %v888
        %v931 = vpop.f32.mrf.mxu0
        %v932 = vadd.f32 0.0, %v931
        %933 = vmatmul.f32.gmra.mxu0 %v891
        %v934 = vpop.f32.mrf.mxu0
        %v935 = vadd.f32 0.0, %v934
        %936 = vdwg.mxu0
        %v937 = vmax.f32 %v839, 1e-24
        %v938 = vmax.f32 %v842, 1e-24
        %v939 = vmax.f32 %v845, 1e-24
        %v940 = vmax.f32 %v848, 1e-24
        %v941 = vmax.f32 %v851, 1e-24
        %v942 = vmax.f32 %v854, 1e-24
        %v943 = vmax.f32 %v857, 1e-24
        %v944 = vmax.f32 %v860, 1e-24
        %v945 = vrsqrt.pop %v937
        %v946 = vmul.f32 %v945, %v937
        %v947 = vmul.f32 %v946, %v945
        %v948 = vmul.f32 0.5, %v947
        %v949 = vsub.f32 1.5, %v948
        %v950 = vmul.f32 %v945, %v949
        %vm951 = vweird.f32 %v937
        %vm952 = vweird.f32 %v945
        %vm953 = vmor %vm951, %vm952
        %v954 = vsel %vm953, %v945, %v950
        %v955 = vrsqrt.pop %v938
        %v956 = vmul.f32 %v955, %v938
        %v957 = vmul.f32 %v956, %v955
        %v958 = vmul.f32 0.5, %v957
        %v959 = vsub.f32 1.5, %v958
        %v960 = vmul.f32 %v955, %v959
        %vm961 = vweird.f32 %v938
        %vm962 = vweird.f32 %v955
        %vm963 = vmor %vm961, %vm962
        %v964 = vsel %vm963, %v955, %v960
        %v965 = vrsqrt.pop %v939
        %v966 = vmul.f32 %v965, %v939
        %v967 = vmul.f32 %v966, %v965
        %v968 = vmul.f32 0.5, %v967
        %v969 = vsub.f32 1.5, %v968
        %v970 = vmul.f32 %v965, %v969
        %vm971 = vweird.f32 %v939
        %vm972 = vweird.f32 %v965
        %vm973 = vmor %vm971, %vm972
        %v974 = vsel %vm973, %v965, %v970
        %v975 = vrsqrt.pop %v940
        %v976 = vmul.f32 %v975, %v940
        %v977 = vmul.f32 %v976, %v975
        %v978 = vmul.f32 0.5, %v977
        %v979 = vsub.f32 1.5, %v978
        %v980 = vmul.f32 %v975, %v979
        %vm981 = vweird.f32 %v940
        %vm982 = vweird.f32 %v975
        %vm983 = vmor %vm981, %vm982
        %v984 = vsel %vm983, %v975, %v980
        %v985 = vrsqrt.pop %v941
        %v986 = vmul.f32 %v985, %v941
        %v987 = vmul.f32 %v986, %v985
        %v988 = vmul.f32 0.5, %v987
        %v989 = vsub.f32 1.5, %v988
        %v990 = vmul.f32 %v985, %v989
        %vm991 = vweird.f32 %v941
        %vm992 = vweird.f32 %v985
        %vm993 = vmor %vm991, %vm992
        %v994 = vsel %vm993, %v985, %v990
        %v995 = vrsqrt.pop %v942
        %v996 = vmul.f32 %v995, %v942
        %v997 = vmul.f32 %v996, %v995
        %v998 = vmul.f32 0.5, %v997
        %v999 = vsub.f32 1.5, %v998
        %v1000 = vmul.f32 %v995, %v999
        %vm1001 = vweird.f32 %v942
        %vm1002 = vweird.f32 %v995
        %vm1003 = vmor %vm1001, %vm1002
        %v1004 = vsel %vm1003, %v995, %v1000
        %v1005 = vrsqrt.pop %v943
        %v1006 = vmul.f32 %v1005, %v943
        %v1007 = vmul.f32 %v1006, %v1005
        %v1008 = vmul.f32 0.5, %v1007
        %v1009 = vsub.f32 1.5, %v1008
        %v1010 = vmul.f32 %v1005, %v1009
        %vm1011 = vweird.f32 %v943
        %vm1012 = vweird.f32 %v1005
        %vm1013 = vmor %vm1011, %vm1012
        %v1014 = vsel %vm1013, %v1005, %v1010
        %v1015 = vrsqrt.pop %v944
        %v1016 = vmul.f32 %v1015, %v944
        %v1017 = vmul.f32 %v1016, %v1015
        %v1018 = vmul.f32 0.5, %v1017
        %v1019 = vsub.f32 1.5, %v1018
        %v1020 = vmul.f32 %v1015, %v1019
        %vm1021 = vweird.f32 %v944
        %vm1022 = vweird.f32 %v1015
        %vm1023 = vmor %vm1021, %vm1022
        %v1024 = vsel %vm1023, %v1015, %v1020
        %v1025 = vmax.f32 %v914, 1e-24
        %v1026 = vmax.f32 %v917, 1e-24
        %v1027 = vmax.f32 %v920, 1e-24
        %v1028 = vmax.f32 %v923, 1e-24
        %v1029 = vmax.f32 %v926, 1e-24
        %v1030 = vmax.f32 %v929, 1e-24
        %v1031 = vmax.f32 %v932, 1e-24
        %v1032 = vmax.f32 %v935, 1e-24
        %v1033 = vrsqrt.pop %v1025
        %v1034 = vmul.f32 %v1033, %v1025
        %v1035 = vmul.f32 %v1034, %v1033
        %v1036 = vmul.f32 0.5, %v1035
        %v1037 = vsub.f32 1.5, %v1036
        %v1038 = vmul.f32 %v1033, %v1037
        %vm1039 = vweird.f32 %v1025
        %vm1040 = vweird.f32 %v1033
        %vm1041 = vmor %vm1039, %vm1040
        %v1042 = vsel %vm1041, %v1033, %v1038
        %v1043 = vrsqrt.pop %v1026
        %v1044 = vmul.f32 %v1043, %v1026
        %v1045 = vmul.f32 %v1044, %v1043
        %v1046 = vmul.f32 0.5, %v1045
        %v1047 = vsub.f32 1.5, %v1046
        %v1048 = vmul.f32 %v1043, %v1047
        %vm1049 = vweird.f32 %v1026
        %vm1050 = vweird.f32 %v1043
        %vm1051 = vmor %vm1049, %vm1050
        %v1052 = vsel %vm1051, %v1043, %v1048
        %v1053 = vrsqrt.pop %v1027
        %v1054 = vmul.f32 %v1053, %v1027
        %v1055 = vmul.f32 %v1054, %v1053
        %v1056 = vmul.f32 0.5, %v1055
        %v1057 = vsub.f32 1.5, %v1056
        %v1058 = vmul.f32 %v1053, %v1057
        %vm1059 = vweird.f32 %v1027
        %vm1060 = vweird.f32 %v1053
        %vm1061 = vmor %vm1059, %vm1060
        %v1062 = vsel %vm1061, %v1053, %v1058
        %v1063 = vrsqrt.pop %v1028
        %v1064 = vmul.f32 %v1063, %v1028
        %v1065 = vmul.f32 %v1064, %v1063
        %v1066 = vmul.f32 0.5, %v1065
        %v1067 = vsub.f32 1.5, %v1066
        %v1068 = vmul.f32 %v1063, %v1067
        %vm1069 = vweird.f32 %v1028
        %vm1070 = vweird.f32 %v1063
        %vm1071 = vmor %vm1069, %vm1070
        %v1072 = vsel %vm1071, %v1063, %v1068
        %v1073 = vrsqrt.pop %v1029
        %v1074 = vmul.f32 %v1073, %v1029
        %v1075 = vmul.f32 %v1074, %v1073
        %v1076 = vmul.f32 0.5, %v1075
        %v1077 = vsub.f32 1.5, %v1076
        %v1078 = vmul.f32 %v1073, %v1077
        %vm1079 = vweird.f32 %v1029
        %vm1080 = vweird.f32 %v1073
        %vm1081 = vmor %vm1079, %vm1080
        %v1082 = vsel %vm1081, %v1073, %v1078
        %v1083 = vrsqrt.pop %v1030
        %v1084 = vmul.f32 %v1083, %v1030
        %v1085 = vmul.f32 %v1084, %v1083
        %v1086 = vmul.f32 0.5, %v1085
        %v1087 = vsub.f32 1.5, %v1086
        %v1088 = vmul.f32 %v1083, %v1087
        %vm1089 = vweird.f32 %v1030
        %vm1090 = vweird.f32 %v1083
        %vm1091 = vmor %vm1089, %vm1090
        %v1092 = vsel %vm1091, %v1083, %v1088
        %v1093 = vrsqrt.pop %v1031
        %v1094 = vmul.f32 %v1093, %v1031
        %v1095 = vmul.f32 %v1094, %v1093
        %v1096 = vmul.f32 0.5, %v1095
        %v1097 = vsub.f32 1.5, %v1096
        %v1098 = vmul.f32 %v1093, %v1097
        %vm1099 = vweird.f32 %v1031
        %vm1100 = vweird.f32 %v1093
        %vm1101 = vmor %vm1099, %vm1100
        %v1102 = vsel %vm1101, %v1093, %v1098
        %v1103 = vrsqrt.pop %v1032
        %v1104 = vmul.f32 %v1103, %v1032
        %v1105 = vmul.f32 %v1104, %v1103
        %v1106 = vmul.f32 0.5, %v1105
        %v1107 = vsub.f32 1.5, %v1106
        %v1108 = vmul.f32 %v1103, %v1107
        %vm1109 = vweird.f32 %v1032
        %vm1110 = vweird.f32 %v1103
        %vm1111 = vmor %vm1109, %vm1110
        %v1112 = vsel %vm1111, %v1103, %v1108
        %v1113 = vmul.f32 %v954, %v1042
        %v1114 = vmul.f32 %v964, %v1052
        %v1115 = vmul.f32 %v974, %v1062
        %v1116 = vmul.f32 %v984, %v1072
        %v1117 = vmul.f32 %v994, %v1082
        %v1118 = vmul.f32 %v1004, %v1092
        %v1119 = vmul.f32 %v1014, %v1102
        %v1120 = vmul.f32 %v1024, %v1112
        %v1121 = vmul.f32 %v799, %v1113
        %v1122 = vmul.f32 %v802, %v1114
        %v1123 = vmul.f32 %v805, %v1115
        %v1124 = vmul.f32 %v808, %v1116
        %v1125 = vmul.f32 %v811, %v1117
        %v1126 = vmul.f32 %v814, %v1118
        %v1127 = vmul.f32 %v817, %v1119
        %v1128 = vmul.f32 %v820, %v1120
        %v1129 = vld [vmem:[%s3] sm:$0xf]
        %v1130 = vld [vmem:[%s4] sm:$0xff]
        %v1131 = vld [vmem:[%s4 + $0x8] sm:$0xff]
        %v1132 = vld [vmem:[%s4 + $0x10] sm:$0xff]
        %v1133 = vld [vmem:[%s4 + $0x18] sm:$0xff]
        %v1134 = vld [vmem:[%s4 + $0x20] sm:$0xff]
        %v1135 = vld [vmem:[%s4 + $0x28] sm:$0xff]
        %v1136 = vld [vmem:[%s4 + $0x30] sm:$0xff]
        %v1137 = vld [vmem:[%s4 + $0x38] sm:$0xff]
        %1139 = vset.pattern.permute.xlu0 0
        %1140 = vperm.xlu0 %1139, %v1121
        %v1141 = vpop.permute.xlu0 %1140
        %1144 = vset.pattern.permute.xlu0 0
        %1145 = vperm.xlu0 %1144, %v1122
        %v1146 = vpop.permute.xlu0 %1145
        %1149 = vset.pattern.permute.xlu0 0
        %1150 = vperm.xlu0 %1149, %v1123
        %v1151 = vpop.permute.xlu0 %1150
        %1154 = vset.pattern.permute.xlu0 0
        %1155 = vperm.xlu0 %1154, %v1124
        %v1156 = vpop.permute.xlu0 %1155
        %1159 = vset.pattern.permute.xlu0 0
        %1160 = vperm.xlu0 %1159, %v1125
        %v1161 = vpop.permute.xlu0 %1160
        %1164 = vset.pattern.permute.xlu0 0
        %1165 = vperm.xlu0 %1164, %v1126
        %v1166 = vpop.permute.xlu0 %1165
        %1169 = vset.pattern.permute.xlu0 0
        %1170 = vperm.xlu0 %1169, %v1127
        %v1171 = vpop.permute.xlu0 %1170
        %1174 = vset.pattern.permute.xlu0 0
        %1175 = vperm.xlu0 %1174, %v1128
        %v1176 = vpop.permute.xlu0 %1175
        %v1178 = vmul.f32 %v1141, %v1130
        %v1179 = vmul.f32 %v1146, %v1131
        %v1180 = vmul.f32 %v1151, %v1132
        %v1181 = vmul.f32 %v1156, %v1133
        %v1182 = vmul.f32 %v1161, %v1134
        %v1183 = vmul.f32 %v1166, %v1135
        %v1184 = vmul.f32 %v1171, %v1136
        %v1185 = vmul.f32 %v1176, %v1137
        %v1187 = vsel %vm654, %v1129, 0
        %1189 = vmatpush.msra.mxu0 0.0
        %1190 = vmatpush.msra.mxu0 0.0
        %1191 = vmatpush.msra.mxu0 0.0
        %1192 = vmatpush.msra.mxu0 0.0
        %1193 = vmatpush.msra.mxu0 0.0
        %1194 = vmatpush.msra.mxu0 0.0
        %1195 = vmatpush.msra.mxu0 0.0
        %1196 = vmatpush.msra.mxu0 0.0
        %1197 = vmatpush.msra.mxu0 %v1185
        %1198 = vmatpush.msra.mxu0 %v1184
        %1199 = vmatpush.msra.mxu0 %v1183
        %1200 = vmatpush.msra.mxu0 %v1182
        %1201 = vmatpush.msra.mxu0 %v1181
        %1202 = vmatpush.msra.mxu0 %v1180
        %1203 = vmatpush.msra.mxu0 %v1179
        %1204 = vmatpush.msra.mxu0 %v1178
        %1205 = vmatmul.f32.gmra.mxu0 %v1187
        %v1206 = vpop.f32.mrf.mxu0
        %v1207 = vadd.f32 0.0, %v1206
        %1208 = vdwg.mxu0
        %vm1209 = vcmask 125952
        %v1210 = vsel %vm1209, %v1207, inf
        %1211 = vmin.xlane.f32.xlu0 %v1210
        %v1212 = vpop.xlane.xlu0 %1211
        %v1213 = vsel %vm1209, %v1207, -inf
        %1214 = vmax.xlane.f32.xlu0 %v1213
        %v1215 = vpop.xlane.xlu0 %1214
        %v1216 = vsub.f32 %v1215, %v1212
        %v1217 = vmul.f32 %v1216, 0.25
        %v1218 = vsub.f32 1.0, %v1217
        %v1219 = vld [vmem:[%s6] sm:$0xff]
        %v1220 = vld [vmem:[%s6 + $0x8] sm:$0xff]
        %v1222 = vsel %vm796, %v1219, 0
        %v1225 = vsel %vm796, %v1220, 0
        %v1228 = vsel %vm863, %v1207, 0
        %1230 = vmatpush.msra.mxu0 0.0
        %1231 = vmatpush.msra.mxu0 0.0
        %1232 = vmatpush.msra.mxu0 0.0
        %1233 = vmatpush.msra.mxu0 0.0
        %1234 = vmatpush.msra.mxu0 0.0
        %1235 = vmatpush.msra.mxu0 0.0
        %1236 = vmatpush.msra.mxu0 0.0
        %1237 = vmatpush.msra.mxu0 0.0
        %1238 = vmatpush.msra.mxu0 0.0
        %1239 = vmatpush.msra.mxu0 0.0
        %1240 = vmatpush.msra.mxu0 0.0
        %1241 = vmatpush.msra.mxu0 0.0
        %1242 = vmatpush.msra.mxu0 0.0
        %1243 = vmatpush.msra.mxu0 0.0
        %1244 = vmatpush.msra.mxu0 0.0
        %1245 = vmatpush.msra.mxu0 %v1228
        %1246 = vmatmul.f32.gmra.mxu0 %v1222
        %v1247 = vpop.f32.mrf.mxu0
        %v1248 = vadd.f32 0.0, %v1247
        %1249 = vmatmul.f32.gmra.mxu0 %v1225
        %v1250 = vpop.f32.mrf.mxu0
        %v1251 = vadd.f32 0.0, %v1250
        %1252 = vdwg.mxu0
        %v1254 = vsel %vm863, %v1216, 0
        %1256 = vmatpush.msra.mxu0 0.0
        %1257 = vmatpush.msra.mxu0 0.0
        %1258 = vmatpush.msra.mxu0 0.0
        %1259 = vmatpush.msra.mxu0 0.0
        %1260 = vmatpush.msra.mxu0 0.0
        %1261 = vmatpush.msra.mxu0 0.0
        %1262 = vmatpush.msra.mxu0 0.0
        %1263 = vmatpush.msra.mxu0 0.0
        %1264 = vmatpush.msra.mxu0 0.0
        %1265 = vmatpush.msra.mxu0 0.0
        %1266 = vmatpush.msra.mxu0 0.0
        %1267 = vmatpush.msra.mxu0 0.0
        %1268 = vmatpush.msra.mxu0 0.0
        %1269 = vmatpush.msra.mxu0 0.0
        %1270 = vmatpush.msra.mxu0 0.0
        %1271 = vmatpush.msra.mxu0 %v1254
        %1272 = vmatmul.f32.gmra.mxu0 %v1222
        %v1273 = vpop.f32.mrf.mxu0
        %v1274 = vadd.f32 0.0, %v1273
        %1275 = vmatmul.f32.gmra.mxu0 %v1225
        %v1276 = vpop.f32.mrf.mxu0
        %v1277 = vadd.f32 0.0, %v1276
        %1278 = vdwg.mxu0
        %v1280 = vsel %vm863, %v1218, 0
        %1282 = vmatpush.msra.mxu0 0.0
        %1283 = vmatpush.msra.mxu0 0.0
        %1284 = vmatpush.msra.mxu0 0.0
        %1285 = vmatpush.msra.mxu0 0.0
        %1286 = vmatpush.msra.mxu0 0.0
        %1287 = vmatpush.msra.mxu0 0.0
        %1288 = vmatpush.msra.mxu0 0.0
        %1289 = vmatpush.msra.mxu0 0.0
        %1290 = vmatpush.msra.mxu0 0.0
        %1291 = vmatpush.msra.mxu0 0.0
        %1292 = vmatpush.msra.mxu0 0.0
        %1293 = vmatpush.msra.mxu0 0.0
        %1294 = vmatpush.msra.mxu0 0.0
        %1295 = vmatpush.msra.mxu0 0.0
        %1296 = vmatpush.msra.mxu0 0.0
        %1297 = vmatpush.msra.mxu0 %v1280
        %1298 = vmatmul.f32.gmra.mxu0 %v1222
        %v1299 = vpop.f32.mrf.mxu0
        %v1300 = vadd.f32 0.0, %v1299
        %1301 = vmatmul.f32.gmra.mxu0 %v1225
        %v1302 = vpop.f32.mrf.mxu0
        %v1303 = vadd.f32 0.0, %v1302
        %1304 = vdwg.mxu0
        %v1305 = vld [vmem:[%s11] sm:$0xff]
        %v1306 = vld [vmem:[%s11 + $0x8] sm:$0xff]
        %v1307 = vmul.f32 %v1305, %v1274
        %v1308 = vmul.f32 %v1306, %v1277
        %v1310 = vsel %vm863, %v1212, 0
        %1312 = vmatpush.msra.mxu0 0.0
        %1313 = vmatpush.msra.mxu0 0.0
        %1314 = vmatpush.msra.mxu0 0.0
        %1315 = vmatpush.msra.mxu0 0.0
        %1316 = vmatpush.msra.mxu0 0.0
        %1317 = vmatpush.msra.mxu0 0.0
        %1318 = vmatpush.msra.mxu0 0.0
        %1319 = vmatpush.msra.mxu0 0.0
        %1320 = vmatpush.msra.mxu0 0.0
        %1321 = vmatpush.msra.mxu0 0.0
        %1322 = vmatpush.msra.mxu0 0.0
        %1323 = vmatpush.msra.mxu0 0.0
        %1324 = vmatpush.msra.mxu0 0.0
        %1325 = vmatpush.msra.mxu0 0.0
        %1326 = vmatpush.msra.mxu0 0.0
        %1327 = vmatpush.msra.mxu0 %v1310
        %1328 = vmatmul.f32.gmra.mxu0 %v1222
        %v1329 = vpop.f32.mrf.mxu0
        %v1330 = vadd.f32 %v1307, %v1329
        %1331 = vmatmul.f32.gmra.mxu0 %v1225
        %v1332 = vpop.f32.mrf.mxu0
        %v1333 = vadd.f32 %v1308, %v1332
        %1334 = vdwg.mxu0
        %1336 = vset.pattern.permute.xlu0 0
        %1337 = vperm.xlu0 %1336, %v1330
        %v1338 = vpop.permute.xlu0 %1337
        %1341 = vset.pattern.permute.xlu0 0
        %1342 = vperm.xlu0 %1341, %v1333
        %v1343 = vpop.permute.xlu0 %1342
        %v1345 = vsub.f32 %v1338, %v1248
        %v1346 = vsub.f32 %v1343, %v1251
        %v1347 = vand.u32 2147483647, %v1345
        %v1348 = vand.u32 2147483647, %v1346
        %v1349 = vsub.f32 1.0, %v1347
        %v1350 = vsub.f32 1.0, %v1348
        %1352 = vset.pattern.permute.xlu0 0
        %1353 = vperm.xlu0 %1352, %v1300
        %v1354 = vpop.permute.xlu0 %1353
        %1357 = vset.pattern.permute.xlu0 0
        %1358 = vperm.xlu0 %1357, %v1303
        %v1359 = vpop.permute.xlu0 %1358
        %vm1361 = vcmp.gt.f32.partialorder %v1349, %v1354
        %vm1362 = vcmp.gt.f32.partialorder %v1350, %v1359
        %v1363 = vsel %vm1361, %v1349, 0.0
        %v1364 = vsel %vm1362, %v1350, 0.0
        %1367 = vrot.lane.b32.xlu0 %v1363, 123
        %v1368 = vpop.permute.xlu0 %1367
        %1369 = vrot.lane.b32.xlu0 %v1364, 123
        %v1370 = vpop.permute.xlu0 %1369
        %vm1373 = vcmask 89088
        %v1374 = vsel %vm1373, %v1368, 0.0
        %v1375 = vsel %vm1373, %v1370, 0.0
        %v1376 = vld [vmem:[%s5] sm:$0x1]
        %v1378 = vperm.slane %v1376, 0
        %v1380 = vmul.f32 %v1374, %v1378
        %v1381 = vmul.f32 %v1375, %v1378
        %v1382 = vld [vmem:[%s8] sm:$0xff]
        %v1383 = vld [vmem:[%s8 + $0x8] sm:$0xff]
        %v1384 = vld [vmem:[%s8 + $0x10] sm:$0xff]
        %v1385 = vld [vmem:[%s8 + $0x18] sm:$0xff]
        %v1386 = vld [vmem:[%s8 + $0x20] sm:$0xff]
        %v1387 = vld [vmem:[%s8 + $0x28] sm:$0xff]
        %v1388 = vld [vmem:[%s8 + $0x30] sm:$0xff]
        %v1389 = vld [vmem:[%s8 + $0x38] sm:$0xff]
        %vm1390 = vcmask 130048
        %v1392 = vsel %vm1390, %v1382, 0
        %v1395 = vsel %vm1390, %v1383, 0
        %v1398 = vsel %vm1390, %v1384, 0
        %v1401 = vsel %vm1390, %v1385, 0
        %v1404 = vsel %vm1390, %v1386, 0
        %v1407 = vsel %vm1390, %v1387, 0
        %v1410 = vsel %vm1390, %v1388, 0
        %v1413 = vsel %vm1390, %v1389, 0
        %1415 = vmatpush.msra.mxu0 0.0
        %1416 = vmatpush.msra.mxu0 0.0
        %1417 = vmatpush.msra.mxu0 0.0
        %1418 = vmatpush.msra.mxu0 0.0
        %1419 = vmatpush.msra.mxu0 0.0
        %1420 = vmatpush.msra.mxu0 0.0
        %1421 = vmatpush.msra.mxu0 0.0
        %1422 = vmatpush.msra.mxu0 0.0
        %1423 = vmatpush.msra.mxu0 0.0
        %1424 = vmatpush.msra.mxu0 0.0
        %1425 = vmatpush.msra.mxu0 0.0
        %1426 = vmatpush.msra.mxu0 0.0
        %1427 = vmatpush.msra.mxu0 0.0
        %1428 = vmatpush.msra.mxu0 0.0
        %1429 = vmatpush.msra.mxu0 %v1364
        %1430 = vmatpush.msra.mxu0 %v1363
        %1431 = vmatmul.f32.gmra.mxu0 %v1392
        %v1432 = vpop.f32.mrf.mxu0
        %v1433 = vadd.f32 0.0, %v1432
        %1434 = vmatmul.f32.gmra.mxu0 %v1395
        %v1435 = vpop.f32.mrf.mxu0
        %v1436 = vadd.f32 0.0, %v1435
        %1437 = vmatmul.f32.gmra.mxu0 %v1398
        %v1438 = vpop.f32.mrf.mxu0
        %v1439 = vadd.f32 0.0, %v1438
        %1440 = vmatmul.f32.gmra.mxu0 %v1401
        %v1441 = vpop.f32.mrf.mxu0
        %v1442 = vadd.f32 0.0, %v1441
        %1443 = vmatmul.f32.gmra.mxu0 %v1404
        %v1444 = vpop.f32.mrf.mxu0
        %v1445 = vadd.f32 0.0, %v1444
        %1446 = vmatmul.f32.gmra.mxu0 %v1407
        %v1447 = vpop.f32.mrf.mxu0
        %v1448 = vadd.f32 0.0, %v1447
        %1449 = vmatmul.f32.gmra.mxu0 %v1410
        %v1450 = vpop.f32.mrf.mxu0
        %v1451 = vadd.f32 0.0, %v1450
        %1452 = vmatmul.f32.gmra.mxu0 %v1413
        %v1453 = vpop.f32.mrf.mxu0
        %v1454 = vadd.f32 0.0, %v1453
        %1455 = vdwg.mxu0
        %v1456 = vld [vmem:[%s9] sm:$0xff]
        %v1457 = vld [vmem:[%s9 + $0x8] sm:$0xff]
        %v1458 = vld [vmem:[%s9 + $0x10] sm:$0xff]
        %v1459 = vld [vmem:[%s9 + $0x18] sm:$0xff]
        %v1460 = vld [vmem:[%s9 + $0x20] sm:$0xff]
        %v1461 = vld [vmem:[%s9 + $0x28] sm:$0xff]
        %v1462 = vld [vmem:[%s9 + $0x30] sm:$0xff]
        %v1463 = vld [vmem:[%s9 + $0x38] sm:$0xff]
        %v1465 = vsel %vm1390, %v1456, 0
        %v1468 = vsel %vm1390, %v1457, 0
        %v1471 = vsel %vm1390, %v1458, 0
        %v1474 = vsel %vm1390, %v1459, 0
        %v1477 = vsel %vm1390, %v1460, 0
        %v1480 = vsel %vm1390, %v1461, 0
        %v1483 = vsel %vm1390, %v1462, 0
        %v1486 = vsel %vm1390, %v1463, 0
        %1488 = vmatpush.msra.mxu0 0.0
        %1489 = vmatpush.msra.mxu0 0.0
        %1490 = vmatpush.msra.mxu0 0.0
        %1491 = vmatpush.msra.mxu0 0.0
        %1492 = vmatpush.msra.mxu0 0.0
        %1493 = vmatpush.msra.mxu0 0.0
        %1494 = vmatpush.msra.mxu0 0.0
        %1495 = vmatpush.msra.mxu0 0.0
        %1496 = vmatpush.msra.mxu0 0.0
        %1497 = vmatpush.msra.mxu0 0.0
        %1498 = vmatpush.msra.mxu0 0.0
        %1499 = vmatpush.msra.mxu0 0.0
        %1500 = vmatpush.msra.mxu0 0.0
        %1501 = vmatpush.msra.mxu0 0.0
        %1502 = vmatpush.msra.mxu0 %v1381
        %1503 = vmatpush.msra.mxu0 %v1380
        %1504 = vmatmul.f32.gmra.mxu0 %v1465
        %v1505 = vpop.f32.mrf.mxu0
        %v1506 = vadd.f32 0.0, %v1505
        %1507 = vmatmul.f32.gmra.mxu0 %v1468
        %v1508 = vpop.f32.mrf.mxu0
        %v1509 = vadd.f32 0.0, %v1508
        %1510 = vmatmul.f32.gmra.mxu0 %v1471
        %v1511 = vpop.f32.mrf.mxu0
        %v1512 = vadd.f32 0.0, %v1511
        %1513 = vmatmul.f32.gmra.mxu0 %v1474
        %v1514 = vpop.f32.mrf.mxu0
        %v1515 = vadd.f32 0.0, %v1514
        %1516 = vmatmul.f32.gmra.mxu0 %v1477
        %v1517 = vpop.f32.mrf.mxu0
        %v1518 = vadd.f32 0.0, %v1517
        %1519 = vmatmul.f32.gmra.mxu0 %v1480
        %v1520 = vpop.f32.mrf.mxu0
        %v1521 = vadd.f32 0.0, %v1520
        %1522 = vmatmul.f32.gmra.mxu0 %v1483
        %v1523 = vpop.f32.mrf.mxu0
        %v1524 = vadd.f32 0.0, %v1523
        %1525 = vmatmul.f32.gmra.mxu0 %v1486
        %v1526 = vpop.f32.mrf.mxu0
        %v1527 = vadd.f32 0.0, %v1526
        %1528 = vdwg.mxu0
        %v1529 = vmul.f32 %v1433, %v1506
        %v1530 = vmul.f32 %v1436, %v1509
        %v1531 = vmul.f32 %v1439, %v1512
        %v1532 = vmul.f32 %v1442, %v1515
        %v1533 = vmul.f32 %v1445, %v1518
        %v1534 = vmul.f32 %v1448, %v1521
        %v1535 = vmul.f32 %v1451, %v1524
        %v1536 = vmul.f32 %v1454, %v1527
        %v1537 = vsel %vm1390, %v1529, 0.0
        %1538 = vadd.xlane.f32.xlu0 %v1537
        %v1539 = vpop.xlane.xlu0 %1538
        %v1540 = vsel %vm1390, %v1530, 0.0
        %1541 = vadd.xlane.f32.xlu0 %v1540
        %v1542 = vpop.xlane.xlu0 %1541
        %v1543 = vsel %vm1390, %v1531, 0.0
        %1544 = vadd.xlane.f32.xlu0 %v1543
        %v1545 = vpop.xlane.xlu0 %1544
        %v1546 = vsel %vm1390, %v1532, 0.0
        %1547 = vadd.xlane.f32.xlu0 %v1546
        %v1548 = vpop.xlane.xlu0 %1547
        %v1549 = vsel %vm1390, %v1533, 0.0
        %1550 = vadd.xlane.f32.xlu0 %v1549
        %v1551 = vpop.xlane.xlu0 %1550
        %v1552 = vsel %vm1390, %v1534, 0.0
        %1553 = vadd.xlane.f32.xlu0 %v1552
        %v1554 = vpop.xlane.xlu0 %1553
        %v1555 = vsel %vm1390, %v1535, 0.0
        %1556 = vadd.xlane.f32.xlu0 %v1555
        %v1557 = vpop.xlane.xlu0 %1556
        %v1558 = vsel %vm1390, %v1536, 0.0
        %1559 = vadd.xlane.f32.xlu0 %v1558
        %v1560 = vpop.xlane.xlu0 %1559
        %v1561 = vld [vmem:[%s10] sm:$0xf]
        %v1563 = vsel %vm654, %v1561, 0
        %1565 = vmatpush.msra.mxu0 0.0
        %1566 = vmatpush.msra.mxu0 0.0
        %1567 = vmatpush.msra.mxu0 0.0
        %1568 = vmatpush.msra.mxu0 0.0
        %1569 = vmatpush.msra.mxu0 0.0
        %1570 = vmatpush.msra.mxu0 0.0
        %1571 = vmatpush.msra.mxu0 0.0
        %1572 = vmatpush.msra.mxu0 0.0
        %1573 = vmatpush.msra.mxu0 %v1560
        %1574 = vmatpush.msra.mxu0 %v1557
        %1575 = vmatpush.msra.mxu0 %v1554
        %1576 = vmatpush.msra.mxu0 %v1551
        %1577 = vmatpush.msra.mxu0 %v1548
        %1578 = vmatpush.msra.mxu0 %v1545
        %1579 = vmatpush.msra.mxu0 %v1542
        %1580 = vmatpush.msra.mxu0 %v1539
        %1581 = vmatmul.f32.gmra.mxu0 %v1563
        %v1582 = vpop.f32.mrf.mxu0
        %v1583 = vadd.f32 0.0, %v1582
        %1584 = vdwg.mxu0
        %v1585 = vld [vmem:[%s7] sm:$0xff]
        %v1586 = vld [vmem:[%s7 + $0x8] sm:$0xff]
        %v1587 = vld [vmem:[%s7 + $0x10] sm:$0xff]
        %v1588 = vld [vmem:[%s7 + $0x18] sm:$0xff]
        %v1589 = vld [vmem:[%s7 + $0x20] sm:$0xff]
        %v1590 = vld [vmem:[%s7 + $0x28] sm:$0xff]
        %v1591 = vld [vmem:[%s7 + $0x30] sm:$0xff]
        %v1592 = vld [vmem:[%s7 + $0x38] sm:$0xff]
        %v1594 = vsel %vm796, %v1585, 0
        %v1597 = vsel %vm796, %v1586, 0
        %v1600 = vsel %vm796, %v1587, 0
        %v1603 = vsel %vm796, %v1588, 0
        %v1606 = vsel %vm796, %v1589, 0
        %v1609 = vsel %vm796, %v1590, 0
        %v1612 = vsel %vm796, %v1591, 0
        %v1615 = vsel %vm796, %v1592, 0
        %v1618 = vsel %vm863, %v1583, 0
        %1620 = vmatpush.msra.mxu0 0.0
        %1621 = vmatpush.msra.mxu0 0.0
        %1622 = vmatpush.msra.mxu0 0.0
        %1623 = vmatpush.msra.mxu0 0.0
        %1624 = vmatpush.msra.mxu0 0.0
        %1625 = vmatpush.msra.mxu0 0.0
        %1626 = vmatpush.msra.mxu0 0.0
        %1627 = vmatpush.msra.mxu0 0.0
        %1628 = vmatpush.msra.mxu0 0.0
        %1629 = vmatpush.msra.mxu0 0.0
        %1630 = vmatpush.msra.mxu0 0.0
        %1631 = vmatpush.msra.mxu0 0.0
        %1632 = vmatpush.msra.mxu0 0.0
        %1633 = vmatpush.msra.mxu0 0.0
        %1634 = vmatpush.msra.mxu0 0.0
        %1635 = vmatpush.msra.mxu0 %v1618
        %1636 = vmatmul.f32.gmra.mxu0 %v1594
        %v1637 = vpop.f32.mrf.mxu0
        %v1638 = vadd.f32 1e-06, %v1637
        %1639 = vmatmul.f32.gmra.mxu0 %v1597
        %v1640 = vpop.f32.mrf.mxu0
        %v1641 = vadd.f32 1e-06, %v1640
        %1642 = vmatmul.f32.gmra.mxu0 %v1600
        %v1643 = vpop.f32.mrf.mxu0
        %v1644 = vadd.f32 1e-06, %v1643
        %1645 = vmatmul.f32.gmra.mxu0 %v1603
        %v1646 = vpop.f32.mrf.mxu0
        %v1647 = vadd.f32 1e-06, %v1646
        %1648 = vmatmul.f32.gmra.mxu0 %v1606
        %v1649 = vpop.f32.mrf.mxu0
        %v1650 = vadd.f32 1e-06, %v1649
        %1651 = vmatmul.f32.gmra.mxu0 %v1609
        %v1652 = vpop.f32.mrf.mxu0
        %v1653 = vadd.f32 1e-06, %v1652
        %1654 = vmatmul.f32.gmra.mxu0 %v1612
        %v1655 = vpop.f32.mrf.mxu0
        %v1656 = vadd.f32 1e-06, %v1655
        %1657 = vmatmul.f32.gmra.mxu0 %v1615
        %v1658 = vpop.f32.mrf.mxu0
        %v1659 = vadd.f32 1e-06, %v1658
        %1660 = vdwg.mxu0
        %v1661 = vrcp.pop %v1638
        %v1662 = vmul.f32 %v1638, %v1661
        %v1663 = vsub.f32 1.0, %v1662
        %v1664 = vmul.f32 %v1661, %v1663
        %v1665 = vadd.f32 %v1661, %v1664
        %vm1666 = vweird.f32 %v1638
        %vm1667 = vweird.f32 %v1661
        %vm1668 = vmor %vm1666, %vm1667
        %v1669 = vsel %vm1668, %v1661, %v1665
        %v1670 = vand.u32 2147483647, %v1638
        %vm1671 = vcmp.eq.f32.partialorder %v1670, 8.507059e+37
        %v1672 = vand.u32 %v1638, 2147483648
        %v1673 = vor.u32 1.1754944e-38, %v1672
        %v1674 = vsel %vm1671, %v1673, %v1669
        %v1675 = vmul.f32 %v1539, %v1674
        %v1676 = vrcp.pop %v1641
        %v1677 = vmul.f32 %v1641, %v1676
        %v1678 = vsub.f32 1.0, %v1677
        %v1679 = vmul.f32 %v1676, %v1678
        %v1680 = vadd.f32 %v1676, %v1679
        %vm1681 = vweird.f32 %v1641
        %vm1682 = vweird.f32 %v1676
        %vm1683 = vmor %vm1681, %vm1682
        %v1684 = vsel %vm1683, %v1676, %v1680
        %v1685 = vand.u32 2147483647, %v1641
        %vm1686 = vcmp.eq.f32.partialorder %v1685, 8.507059e+37
        %v1687 = vand.u32 %v1641, 2147483648
        %v1688 = vor.u32 1.1754944e-38, %v1687
        %v1689 = vsel %vm1686, %v1688, %v1684
        %v1690 = vmul.f32 %v1542, %v1689
        %v1691 = vrcp.pop %v1644
        %v1692 = vmul.f32 %v1644, %v1691
        %v1693 = vsub.f32 1.0, %v1692
        %v1694 = vmul.f32 %v1691, %v1693
        %v1695 = vadd.f32 %v1691, %v1694
        %vm1696 = vweird.f32 %v1644
        %vm1697 = vweird.f32 %v1691
        %vm1698 = vmor %vm1696, %vm1697
        %v1699 = vsel %vm1698, %v1691, %v1695
        %v1700 = vand.u32 2147483647, %v1644
        %vm1701 = vcmp.eq.f32.partialorder %v1700, 8.507059e+37
        %v1702 = vand.u32 %v1644, 2147483648
        %v1703 = vor.u32 1.1754944e-38, %v1702
        %v1704 = vsel %vm1701, %v1703, %v1699
        %v1705 = vmul.f32 %v1545, %v1704
        %v1706 = vrcp.pop %v1647
        %v1707 = vmul.f32 %v1647, %v1706
        %v1708 = vsub.f32 1.0, %v1707
        %v1709 = vmul.f32 %v1706, %v1708
        %v1710 = vadd.f32 %v1706, %v1709
        %vm1711 = vweird.f32 %v1647
        %vm1712 = vweird.f32 %v1706
        %vm1713 = vmor %vm1711, %vm1712
        %v1714 = vsel %vm1713, %v1706, %v1710
        %v1715 = vand.u32 2147483647, %v1647
        %vm1716 = vcmp.eq.f32.partialorder %v1715, 8.507059e+37
        %v1717 = vand.u32 %v1647, 2147483648
        %v1718 = vor.u32 1.1754944e-38, %v1717
        %v1719 = vsel %vm1716, %v1718, %v1714
        %v1720 = vmul.f32 %v1548, %v1719
        %v1721 = vrcp.pop %v1650
        %v1722 = vmul.f32 %v1650, %v1721
        %v1723 = vsub.f32 1.0, %v1722
        %v1724 = vmul.f32 %v1721, %v1723
        %v1725 = vadd.f32 %v1721, %v1724
        %vm1726 = vweird.f32 %v1650
        %vm1727 = vweird.f32 %v1721
        %vm1728 = vmor %vm1726, %vm1727
        %v1729 = vsel %vm1728, %v1721, %v1725
        %v1730 = vand.u32 2147483647, %v1650
        %vm1731 = vcmp.eq.f32.partialorder %v1730, 8.507059e+37
        %v1732 = vand.u32 %v1650, 2147483648
        %v1733 = vor.u32 1.1754944e-38, %v1732
        %v1734 = vsel %vm1731, %v1733, %v1729
        %v1735 = vmul.f32 %v1551, %v1734
        %v1736 = vrcp.pop %v1653
        %v1737 = vmul.f32 %v1653, %v1736
        %v1738 = vsub.f32 1.0, %v1737
        %v1739 = vmul.f32 %v1736, %v1738
        %v1740 = vadd.f32 %v1736, %v1739
        %vm1741 = vweird.f32 %v1653
        %vm1742 = vweird.f32 %v1736
        %vm1743 = vmor %vm1741, %vm1742
        %v1744 = vsel %vm1743, %v1736, %v1740
        %v1745 = vand.u32 2147483647, %v1653
        %vm1746 = vcmp.eq.f32.partialorder %v1745, 8.507059e+37
        %v1747 = vand.u32 %v1653, 2147483648
        %v1748 = vor.u32 1.1754944e-38, %v1747
        %v1749 = vsel %vm1746, %v1748, %v1744
        %v1750 = vmul.f32 %v1554, %v1749
        %v1751 = vrcp.pop %v1656
        %v1752 = vmul.f32 %v1656, %v1751
        %v1753 = vsub.f32 1.0, %v1752
        %v1754 = vmul.f32 %v1751, %v1753
        %v1755 = vadd.f32 %v1751, %v1754
        %vm1756 = vweird.f32 %v1656
        %vm1757 = vweird.f32 %v1751
        %vm1758 = vmor %vm1756, %vm1757
        %v1759 = vsel %vm1758, %v1751, %v1755
        %v1760 = vand.u32 2147483647, %v1656
        %vm1761 = vcmp.eq.f32.partialorder %v1760, 8.507059e+37
        %v1762 = vand.u32 %v1656, 2147483648
        %v1763 = vor.u32 1.1754944e-38, %v1762
        %v1764 = vsel %vm1761, %v1763, %v1759
        %v1765 = vmul.f32 %v1557, %v1764
        %v1766 = vrcp.pop %v1659
        %v1767 = vmul.f32 %v1659, %v1766
        %v1768 = vsub.f32 1.0, %v1767
        %v1769 = vmul.f32 %v1766, %v1768
        %v1770 = vadd.f32 %v1766, %v1769
        %vm1771 = vweird.f32 %v1659
        %vm1772 = vweird.f32 %v1766
        %vm1773 = vmor %vm1771, %vm1772
        %v1774 = vsel %vm1773, %v1766, %v1770
        %v1775 = vand.u32 2147483647, %v1659
        %vm1776 = vcmp.eq.f32.partialorder %v1775, 8.507059e+37
        %v1777 = vand.u32 %v1659, 2147483648
        %v1778 = vor.u32 1.1754944e-38, %v1777
        %v1779 = vsel %vm1776, %v1778, %v1774
        %v1780 = vmul.f32 %v1560, %v1779
        %1781 = vmatpush.msra.mxu0 0.0
        %1782 = vmatpush.msra.mxu0 0.0
        %1783 = vmatpush.msra.mxu0 0.0
        %1784 = vmatpush.msra.mxu0 0.0
        %1785 = vmatpush.msra.mxu0 0.0
        %1786 = vmatpush.msra.mxu0 0.0
        %1787 = vmatpush.msra.mxu0 0.0
        %1788 = vmatpush.msra.mxu0 0.0
        %1789 = vmatpush.msra.mxu0 0.0
        %1790 = vmatpush.msra.mxu0 0.0
        %1791 = vmatpush.msra.mxu0 0.0
        %1792 = vmatpush.msra.mxu0 0.0
        %1793 = vmatpush.msra.mxu0 0.0
        %1794 = vmatpush.msra.mxu0 0.0
        %1795 = vmatpush.msra.mxu0 0.0
        %1796 = vmatpush.msra.mxu0 %v1310
        %1797 = vmatmul.f32.gmra.mxu0 %v1594
        %v1798 = vpop.f32.mrf.mxu0
        %v1799 = vadd.f32 0.0, %v1798
        %1800 = vmatmul.f32.gmra.mxu0 %v1597
        %v1801 = vpop.f32.mrf.mxu0
        %v1802 = vadd.f32 0.0, %v1801
        %1803 = vmatmul.f32.gmra.mxu0 %v1600
        %v1804 = vpop.f32.mrf.mxu0
        %v1805 = vadd.f32 0.0, %v1804
        %1806 = vmatmul.f32.gmra.mxu0 %v1603
        %v1807 = vpop.f32.mrf.mxu0
        %v1808 = vadd.f32 0.0, %v1807
        %1809 = vmatmul.f32.gmra.mxu0 %v1606
        %v1810 = vpop.f32.mrf.mxu0
        %v1811 = vadd.f32 0.0, %v1810
        %1812 = vmatmul.f32.gmra.mxu0 %v1609
        %v1813 = vpop.f32.mrf.mxu0
        %v1814 = vadd.f32 0.0, %v1813
        %1815 = vmatmul.f32.gmra.mxu0 %v1612
        %v1816 = vpop.f32.mrf.mxu0
        %v1817 = vadd.f32 0.0, %v1816
        %1818 = vmatmul.f32.gmra.mxu0 %v1615
        %v1819 = vpop.f32.mrf.mxu0
        %v1820 = vadd.f32 0.0, %v1819
        %1821 = vdwg.mxu0
        %1822 = vmatpush.msra.mxu0 0.0
        %1823 = vmatpush.msra.mxu0 0.0
        %1824 = vmatpush.msra.mxu0 0.0
        %1825 = vmatpush.msra.mxu0 0.0
        %1826 = vmatpush.msra.mxu0 0.0
        %1827 = vmatpush.msra.mxu0 0.0
        %1828 = vmatpush.msra.mxu0 0.0
        %1829 = vmatpush.msra.mxu0 0.0
        %1830 = vmatpush.msra.mxu0 0.0
        %1831 = vmatpush.msra.mxu0 0.0
        %1832 = vmatpush.msra.mxu0 0.0
        %1833 = vmatpush.msra.mxu0 0.0
        %1834 = vmatpush.msra.mxu0 0.0
        %1835 = vmatpush.msra.mxu0 0.0
        %1836 = vmatpush.msra.mxu0 0.0
        %1837 = vmatpush.msra.mxu0 %v1254
        %1838 = vmatmul.f32.gmra.mxu0 %v1594
        %v1839 = vpop.f32.mrf.mxu0
        %v1840 = vadd.f32 0.0, %v1839
        %1841 = vmatmul.f32.gmra.mxu0 %v1597
        %v1842 = vpop.f32.mrf.mxu0
        %v1843 = vadd.f32 0.0, %v1842
        %1844 = vmatmul.f32.gmra.mxu0 %v1600
        %v1845 = vpop.f32.mrf.mxu0
        %v1846 = vadd.f32 0.0, %v1845
        %1847 = vmatmul.f32.gmra.mxu0 %v1603
        %v1848 = vpop.f32.mrf.mxu0
        %v1849 = vadd.f32 0.0, %v1848
        %1850 = vmatmul.f32.gmra.mxu0 %v1606
        %v1851 = vpop.f32.mrf.mxu0
        %v1852 = vadd.f32 0.0, %v1851
        %1853 = vmatmul.f32.gmra.mxu0 %v1609
        %v1854 = vpop.f32.mrf.mxu0
        %v1855 = vadd.f32 0.0, %v1854
        %1856 = vmatmul.f32.gmra.mxu0 %v1612
        %v1857 = vpop.f32.mrf.mxu0
        %v1858 = vadd.f32 0.0, %v1857
        %1859 = vmatmul.f32.gmra.mxu0 %v1615
        %v1860 = vpop.f32.mrf.mxu0
        %v1861 = vadd.f32 0.0, %v1860
        %1862 = vdwg.mxu0
        %v1863 = vmul.f32 %v628, %v1840
        %v1864 = vmul.f32 %v629, %v1843
        %v1865 = vmul.f32 %v630, %v1846
        %v1866 = vmul.f32 %v631, %v1849
        %v1867 = vmul.f32 %v632, %v1852
        %v1868 = vmul.f32 %v633, %v1855
        %v1869 = vmul.f32 %v634, %v1858
        %v1870 = vmul.f32 %v635, %v1861
        %v1871 = vadd.f32 %v1799, %v1863
        %v1872 = vadd.f32 %v1802, %v1864
        %v1873 = vadd.f32 %v1805, %v1865
        %v1874 = vadd.f32 %v1808, %v1866
        %v1875 = vadd.f32 %v1811, %v1867
        %v1876 = vadd.f32 %v1814, %v1868
        %v1877 = vadd.f32 %v1817, %v1869
        %v1878 = vadd.f32 %v1820, %v1870
        %1887 = vrot.lane.b32.xlu0 %v1840, 1
        %v1888 = vpop.permute.xlu0 %1887
        %1889 = vrot.lane.b32.xlu0 %v1843, 1
        %v1890 = vpop.permute.xlu0 %1889
        %1891 = vrot.lane.b32.xlu0 %v1846, 1
        %v1892 = vpop.permute.xlu0 %1891
        %1893 = vrot.lane.b32.xlu0 %v1849, 1
        %v1894 = vpop.permute.xlu0 %1893
        %1895 = vrot.lane.b32.xlu0 %v1852, 1
        %v1896 = vpop.permute.xlu0 %1895
        %1897 = vrot.lane.b32.xlu0 %v1855, 1
        %v1898 = vpop.permute.xlu0 %1897
        %1899 = vrot.lane.b32.xlu0 %v1858, 1
        %v1900 = vpop.permute.xlu0 %1899
        %1901 = vrot.lane.b32.xlu0 %v1861, 1
        %v1902 = vpop.permute.xlu0 %1901
        %v1911 = vmul.f32 %v628, %v1888
        %v1912 = vmul.f32 %v629, %v1890
        %v1913 = vmul.f32 %v630, %v1892
        %v1914 = vmul.f32 %v631, %v1894
        %v1915 = vmul.f32 %v632, %v1896
        %v1916 = vmul.f32 %v633, %v1898
        %v1917 = vmul.f32 %v634, %v1900
        %v1918 = vmul.f32 %v635, %v1902
        %1927 = vrot.lane.b32.xlu0 %v1911, 127
        %v1928 = vpop.permute.xlu0 %1927
        %1929 = vrot.lane.b32.xlu0 %v1912, 127
        %v1930 = vpop.permute.xlu0 %1929
        %1931 = vrot.lane.b32.xlu0 %v1913, 127
        %v1932 = vpop.permute.xlu0 %1931
        %1933 = vrot.lane.b32.xlu0 %v1914, 127
        %v1934 = vpop.permute.xlu0 %1933
        %1935 = vrot.lane.b32.xlu0 %v1915, 127
        %v1936 = vpop.permute.xlu0 %1935
        %1937 = vrot.lane.b32.xlu0 %v1916, 127
        %v1938 = vpop.permute.xlu0 %1937
        %1939 = vrot.lane.b32.xlu0 %v1917, 127
        %v1940 = vpop.permute.xlu0 %1939
        %1941 = vrot.lane.b32.xlu0 %v1918, 127
        %v1942 = vpop.permute.xlu0 %1941
        %v1951 = vadd.f32 %v1799, %v1928
        %v1952 = vadd.f32 %v1802, %v1930
        %v1953 = vadd.f32 %v1805, %v1932
        %v1954 = vadd.f32 %v1808, %v1934
        %v1955 = vadd.f32 %v1811, %v1936
        %v1956 = vadd.f32 %v1814, %v1938
        %v1957 = vadd.f32 %v1817, %v1940
        %v1958 = vadd.f32 %v1820, %v1942
        %1960 = vset.pattern.permute.xlu0 0
        %1961 = vperm.xlu0 %1960, %v1951
        %v1962 = vpop.permute.xlu0 %1961
        %1965 = vset.pattern.permute.xlu0 0
        %1966 = vperm.xlu0 %1965, %v1952
        %v1967 = vpop.permute.xlu0 %1966
        %1970 = vset.pattern.permute.xlu0 0
        %1971 = vperm.xlu0 %1970, %v1953
        %v1972 = vpop.permute.xlu0 %1971
        %1975 = vset.pattern.permute.xlu0 0
        %1976 = vperm.xlu0 %1975, %v1954
        %v1977 = vpop.permute.xlu0 %1976
        %1980 = vset.pattern.permute.xlu0 0
        %1981 = vperm.xlu0 %1980, %v1955
        %v1982 = vpop.permute.xlu0 %1981
        %1985 = vset.pattern.permute.xlu0 0
        %1986 = vperm.xlu0 %1985, %v1956
        %v1987 = vpop.permute.xlu0 %1986
        %1990 = vset.pattern.permute.xlu0 0
        %1991 = vperm.xlu0 %1990, %v1957
        %v1992 = vpop.permute.xlu0 %1991
        %1995 = vset.pattern.permute.xlu0 0
        %1996 = vperm.xlu0 %1995, %v1958
        %v1997 = vpop.permute.xlu0 %1996
        %v1999 = vperm.slane %v627, 0
        %v2000 = vmul.f32 %v1962, %v1999
        %v2001 = vmul.f32 %v1967, %v1999
        %v2002 = vmul.f32 %v1972, %v1999
        %v2003 = vmul.f32 %v1977, %v1999
        %v2004 = vmul.f32 %v1982, %v1999
        %v2005 = vmul.f32 %v1987, %v1999
        %v2006 = vmul.f32 %v1992, %v1999
        %v2007 = vmul.f32 %v1997, %v1999
        %2009 = vset.pattern.permute.xlu0 0
        %2010 = vperm.xlu0 %2009, %v1871
        %v2011 = vpop.permute.xlu0 %2010
        %2014 = vset.pattern.permute.xlu0 0
        %2015 = vperm.xlu0 %2014, %v1872
        %v2016 = vpop.permute.xlu0 %2015
        %2019 = vset.pattern.permute.xlu0 0
        %2020 = vperm.xlu0 %2019, %v1873
        %v2021 = vpop.permute.xlu0 %2020
        %2024 = vset.pattern.permute.xlu0 0
        %2025 = vperm.xlu0 %2024, %v1874
        %v2026 = vpop.permute.xlu0 %2025
        %2029 = vset.pattern.permute.xlu0 0
        %2030 = vperm.xlu0 %2029, %v1875
        %v2031 = vpop.permute.xlu0 %2030
        %2034 = vset.pattern.permute.xlu0 0
        %2035 = vperm.xlu0 %2034, %v1876
        %v2036 = vpop.permute.xlu0 %2035
        %2039 = vset.pattern.permute.xlu0 0
        %2040 = vperm.xlu0 %2039, %v1877
        %v2041 = vpop.permute.xlu0 %2040
        %2044 = vset.pattern.permute.xlu0 0
        %2045 = vperm.xlu0 %2044, %v1878
        %v2046 = vpop.permute.xlu0 %2045
        %v2048 = vperm.slane %v627, 1
        %v2049 = vmul.f32 %v2011, %v2048
        %v2050 = vmul.f32 %v2016, %v2048
        %v2051 = vmul.f32 %v2021, %v2048
        %v2052 = vmul.f32 %v2026, %v2048
        %v2053 = vmul.f32 %v2031, %v2048
        %v2054 = vmul.f32 %v2036, %v2048
        %v2055 = vmul.f32 %v2041, %v2048
        %v2056 = vmul.f32 %v2046, %v2048
        %v2057 = vadd.f32 %v2000, %v2049
        %v2058 = vadd.f32 %v2001, %v2050
        %v2059 = vadd.f32 %v2002, %v2051
        %v2060 = vadd.f32 %v2003, %v2052
        %v2061 = vadd.f32 %v2004, %v2053
        %v2062 = vadd.f32 %v2005, %v2054
        %v2063 = vadd.f32 %v2006, %v2055
        %v2064 = vadd.f32 %v2007, %v2056
        %2066 = vset.pattern.permute.xlu0 0
        %2067 = vperm.xlu0 %2066, %v1675
        %v2068 = vpop.permute.xlu0 %2067
        %2071 = vset.pattern.permute.xlu0 0
        %2072 = vperm.xlu0 %2071, %v1690
        %v2073 = vpop.permute.xlu0 %2072
        %2076 = vset.pattern.permute.xlu0 0
        %2077 = vperm.xlu0 %2076, %v1705
        %v2078 = vpop.permute.xlu0 %2077
        %2081 = vset.pattern.permute.xlu0 0
        %2082 = vperm.xlu0 %2081, %v1720
        %v2083 = vpop.permute.xlu0 %2082
        %2086 = vset.pattern.permute.xlu0 0
        %2087 = vperm.xlu0 %2086, %v1735
        %v2088 = vpop.permute.xlu0 %2087
        %2091 = vset.pattern.permute.xlu0 0
        %2092 = vperm.xlu0 %2091, %v1750
        %v2093 = vpop.permute.xlu0 %2092
        %2096 = vset.pattern.permute.xlu0 0
        %2097 = vperm.xlu0 %2096, %v1765
        %v2098 = vpop.permute.xlu0 %2097
        %2101 = vset.pattern.permute.xlu0 0
        %2102 = vperm.xlu0 %2101, %v1780
        %v2103 = vpop.permute.xlu0 %2102
        %v2105 = vperm.slane %v627, 2
        %v2106 = vmul.f32 %v2068, %v2105
        %v2107 = vmul.f32 %v2073, %v2105
        %v2108 = vmul.f32 %v2078, %v2105
        %v2109 = vmul.f32 %v2083, %v2105
        %v2110 = vmul.f32 %v2088, %v2105
        %v2111 = vmul.f32 %v2093, %v2105
        %v2112 = vmul.f32 %v2098, %v2105
        %v2113 = vmul.f32 %v2103, %v2105
        %v2114 = vadd.f32 %v2057, %v2106
        %v2115 = vadd.f32 %v2058, %v2107
        %v2116 = vadd.f32 %v2059, %v2108
        %v2117 = vadd.f32 %v2060, %v2109
        %v2118 = vadd.f32 %v2061, %v2110
        %v2119 = vadd.f32 %v2062, %v2111
        %v2120 = vadd.f32 %v2063, %v2112
        %v2121 = vadd.f32 %v2064, %v2113
        %vm2122 = vcmp.ge.f32.partialorder %v2114, 0.0
        %vm2123 = vcmp.ge.f32.partialorder %v2115, 0.0
        %vm2124 = vcmp.ge.f32.partialorder %v2116, 0.0
        %vm2125 = vcmp.ge.f32.partialorder %v2117, 0.0
        %vm2126 = vcmp.ge.f32.partialorder %v2118, 0.0
        %vm2127 = vcmp.ge.f32.partialorder %v2119, 0.0
        %vm2128 = vcmp.ge.f32.partialorder %v2120, 0.0
        %vm2129 = vcmp.ge.f32.partialorder %v2121, 0.0
        %v2130 = vmul.f32 %v2114, 0.01
        %v2131 = vmul.f32 %v2115, 0.01
        %v2132 = vmul.f32 %v2116, 0.01
        %v2133 = vmul.f32 %v2117, 0.01
        %v2134 = vmul.f32 %v2118, 0.01
        %v2135 = vmul.f32 %v2119, 0.01
        %v2136 = vmul.f32 %v2120, 0.01
        %v2137 = vmul.f32 %v2121, 0.01
        %v2138 = vsel %vm2122, %v2114, %v2130
        %v2139 = vsel %vm2123, %v2115, %v2131
        %v2140 = vsel %vm2124, %v2116, %v2132
        %v2141 = vsel %vm2125, %v2117, %v2133
        %v2142 = vsel %vm2126, %v2118, %v2134
        %v2143 = vsel %vm2127, %v2119, %v2135
        %v2144 = vsel %vm2128, %v2120, %v2136
        %v2145 = vsel %vm2129, %v2121, %v2137
        %v2146 = vpack.c.bf16 %v676, %v676
        %v2147 = vpack.c.bf16 %v696, %v696
        %v2148 = vld [vmem:[%s15] sm:$0xf]
        %v2149 = vld [vmem:[%s15 + $0x4] sm:$0xf]
        %v2150 = vld [vmem:[%s15 + $0x8] sm:$0xf]
        %v2151 = vld [vmem:[%s15 + $0xc] sm:$0xf]
        %v2152 = vld [vmem:[%s15 + $0x10] sm:$0xf]
        %v2153 = vld [vmem:[%s15 + $0x14] sm:$0xf]
        %v2154 = vld [vmem:[%s15 + $0x18] sm:$0xf]
        %v2155 = vld [vmem:[%s15 + $0x1c] sm:$0xf]
        %v2156 = vld [vmem:[%s15 + $0x20] sm:$0xf]
        %v2157 = vld [vmem:[%s15 + $0x24] sm:$0xf]
        %v2158 = vld [vmem:[%s15 + $0x28] sm:$0xf]
        %v2159 = vld [vmem:[%s15 + $0x2c] sm:$0xf]
        %v2160 = vld [vmem:[%s15 + $0x30] sm:$0xf]
        %v2161 = vld [vmem:[%s15 + $0x34] sm:$0xf]
        %v2162 = vld [vmem:[%s15 + $0x38] sm:$0xf]
        %v2163 = vld [vmem:[%s15 + $0x3c] sm:$0xf]
        %v2164 = vld [vmem:[%s15 + $0x40] sm:$0xf]
        %v2165 = vld [vmem:[%s15 + $0x44] sm:$0xf]
        %v2166 = vld [vmem:[%s15 + $0x48] sm:$0xf]
        %v2167 = vld [vmem:[%s15 + $0x4c] sm:$0xf]
        %v2168 = vld [vmem:[%s15 + $0x50] sm:$0xf]
        %v2169 = vld [vmem:[%s15 + $0x54] sm:$0xf]
        %v2170 = vld [vmem:[%s15 + $0x58] sm:$0xf]
        %v2171 = vld [vmem:[%s15 + $0x5c] sm:$0xf]
        %v2172 = vld [vmem:[%s15 + $0x60] sm:$0xf]
        %v2173 = vld [vmem:[%s15 + $0x64] sm:$0xf]
        %v2174 = vld [vmem:[%s15 + $0x68] sm:$0xf]
        %v2175 = vld [vmem:[%s15 + $0x6c] sm:$0xf]
        %v2176 = vld [vmem:[%s15 + $0x70] sm:$0xf]
        %v2177 = vld [vmem:[%s15 + $0x74] sm:$0xf]
        %v2178 = vld [vmem:[%s15 + $0x78] sm:$0xf]
        %v2179 = vld [vmem:[%s15 + $0x7c] sm:$0xf]
        %v2212 = vunpack.c.l.b16 %v2148
        %v2213 = vunpack.c.l.b16 %v2149
        %v2214 = vunpack.c.l.b16 %v2150
        %v2215 = vunpack.c.l.b16 %v2151
        %v2216 = vunpack.c.l.b16 %v2152
        %v2217 = vunpack.c.l.b16 %v2153
        %v2218 = vunpack.c.l.b16 %v2154
        %v2219 = vunpack.c.l.b16 %v2155
        %v2220 = vunpack.c.l.b16 %v2156
        %v2221 = vunpack.c.l.b16 %v2157
        %v2222 = vunpack.c.l.b16 %v2158
        %v2223 = vunpack.c.l.b16 %v2159
        %v2224 = vunpack.c.l.b16 %v2160
        %v2225 = vunpack.c.l.b16 %v2161
        %v2226 = vunpack.c.l.b16 %v2162
        %v2227 = vunpack.c.l.b16 %v2163
        %v2228 = vunpack.c.l.b16 %v2164
        %v2229 = vunpack.c.l.b16 %v2165
        %v2230 = vunpack.c.l.b16 %v2166
        %v2231 = vunpack.c.l.b16 %v2167
        %v2232 = vunpack.c.l.b16 %v2168
        %v2233 = vunpack.c.l.b16 %v2169
        %v2234 = vunpack.c.l.b16 %v2170
        %v2235 = vunpack.c.l.b16 %v2171
        %v2236 = vunpack.c.l.b16 %v2172
        %v2237 = vunpack.c.l.b16 %v2173
        %v2238 = vunpack.c.l.b16 %v2174
        %v2239 = vunpack.c.l.b16 %v2175
        %v2240 = vunpack.c.l.b16 %v2176
        %v2241 = vunpack.c.l.b16 %v2177
        %v2242 = vunpack.c.l.b16 %v2178
        %v2243 = vunpack.c.l.b16 %v2179
        %v2244 = vpack.c.b16 %v2213, %v2212
        %v2245 = vpack.c.b16 %v2215, %v2214
        %v2246 = vpack.c.b16 %v2217, %v2216
        %v2247 = vpack.c.b16 %v2219, %v2218
        %v2248 = vpack.c.b16 %v2221, %v2220
        %v2249 = vpack.c.b16 %v2223, %v2222
        %v2250 = vpack.c.b16 %v2225, %v2224
        %v2251 = vpack.c.b16 %v2227, %v2226
        %v2252 = vpack.c.b16 %v2229, %v2228
        %v2253 = vpack.c.b16 %v2231, %v2230
        %v2254 = vpack.c.b16 %v2233, %v2232
        %v2255 = vpack.c.b16 %v2235, %v2234
        %v2256 = vpack.c.b16 %v2237, %v2236
        %v2257 = vpack.c.b16 %v2239, %v2238
        %v2258 = vpack.c.b16 %v2241, %v2240
        %v2259 = vpack.c.b16 %v2243, %v2242
        %2276 = vmatpush.bf16.msra.mxu0 %v2251
        %2277 = vmatpush.bf16.msra.mxu0 %v2250
        %2278 = vmatpush.bf16.msra.mxu0 %v2249
        %2279 = vmatpush.bf16.msra.mxu0 %v2248
        %2280 = vmatpush.bf16.msra.mxu0 %v2247
        %2281 = vmatpush.bf16.msra.mxu0 %v2246
        %2282 = vmatpush.bf16.msra.mxu0 %v2245
        %2283 = vmatpush.bf16.msra.mxu0 %v2244
        %2284 = vmatmul.bf16.gmra.mxu0 %v2146
        %v2285 = vpop.f32.mrf.mxu0
        %v2286 = vadd.f32 0.0, %v2285
        %v2287 = vpop.f32.mrf.mxu0
        %2288 = vdwg.mxu0
        %2289 = vmatpush.bf16.msra.mxu0 %v2259
        %2290 = vmatpush.bf16.msra.mxu0 %v2258
        %2291 = vmatpush.bf16.msra.mxu0 %v2257
        %2292 = vmatpush.bf16.msra.mxu0 %v2256
        %2293 = vmatpush.bf16.msra.mxu0 %v2255
        %2294 = vmatpush.bf16.msra.mxu0 %v2254
        %2295 = vmatpush.bf16.msra.mxu0 %v2253
        %2296 = vmatpush.bf16.msra.mxu0 %v2252
        %2297 = vmatmul.bf16.gmra.mxu0 %v2147
        %v2298 = vpop.f32.mrf.mxu0
        %v2299 = vadd.f32 %v2286, %v2298
        %v2300 = vpop.f32.mrf.mxu0
        %2301 = vdwg.mxu0
        %v2303 = vsel %vm863, %v2299, 0
        %2305 = vmatpush.msra.mxu0 0.0
        %2306 = vmatpush.msra.mxu0 0.0
        %2307 = vmatpush.msra.mxu0 0.0
        %2308 = vmatpush.msra.mxu0 0.0
        %2309 = vmatpush.msra.mxu0 0.0
        %2310 = vmatpush.msra.mxu0 0.0
        %2311 = vmatpush.msra.mxu0 0.0
        %2312 = vmatpush.msra.mxu0 0.0
        %2313 = vmatpush.msra.mxu0 0.0
        %2314 = vmatpush.msra.mxu0 0.0
        %2315 = vmatpush.msra.mxu0 0.0
        %2316 = vmatpush.msra.mxu0 0.0
        %2317 = vmatpush.msra.mxu0 0.0
        %2318 = vmatpush.msra.mxu0 0.0
        %2319 = vmatpush.msra.mxu0 0.0
        %2320 = vmatpush.msra.mxu0 %v2303
        %2321 = vmatmul.f32.gmra.mxu0 %v1594
        %v2322 = vpop.f32.mrf.mxu0
        %v2323 = vadd.f32 0.0, %v2322
        %2324 = vmatmul.f32.gmra.mxu0 %v1597
        %v2325 = vpop.f32.mrf.mxu0
        %v2326 = vadd.f32 0.0, %v2325
        %2327 = vmatmul.f32.gmra.mxu0 %v1600
        %v2328 = vpop.f32.mrf.mxu0
        %v2329 = vadd.f32 0.0, %v2328
        %2330 = vmatmul.f32.gmra.mxu0 %v1603
        %v2331 = vpop.f32.mrf.mxu0
        %v2332 = vadd.f32 0.0, %v2331
        %2333 = vmatmul.f32.gmra.mxu0 %v1606
        %v2334 = vpop.f32.mrf.mxu0
        %v2335 = vadd.f32 0.0, %v2334
        %2336 = vmatmul.f32.gmra.mxu0 %v1609
        %v2337 = vpop.f32.mrf.mxu0
        %v2338 = vadd.f32 0.0, %v2337
        %2339 = vmatmul.f32.gmra.mxu0 %v1612
        %v2340 = vpop.f32.mrf.mxu0
        %v2341 = vadd.f32 0.0, %v2340
        %2342 = vmatmul.f32.gmra.mxu0 %v1615
        %v2343 = vpop.f32.mrf.mxu0
        %v2344 = vadd.f32 0.0, %v2343
        %2345 = vdwg.mxu0
        %s2346 = scalar_lea.vmem %s568, 128 [#allocation2]
        %v2347 = vld [vmem:[%s2346] sm:$0xff]
        %v2348 = vld [vmem:[%s2346 + $0x8] sm:$0xff]
        %v2349 = vld [vmem:[%s2346 + $0x10] sm:$0xff]
        %v2350 = vld [vmem:[%s2346 + $0x18] sm:$0xff]
        %v2351 = vld [vmem:[%s2346 + $0x20] sm:$0xff]
        %v2352 = vld [vmem:[%s2346 + $0x28] sm:$0xff]
        %v2353 = vld [vmem:[%s2346 + $0x30] sm:$0xff]
        %v2354 = vld [vmem:[%s2346 + $0x38] sm:$0xff]
        %v2355 = vld [vmem:[%s2346 + $0x40] sm:$0xff]
        %v2356 = vld [vmem:[%s2346 + $0x48] sm:$0xff]
        %v2357 = vld [vmem:[%s2346 + $0x50] sm:$0xff]
        %v2358 = vld [vmem:[%s2346 + $0x58] sm:$0xff]
        %v2359 = vld [vmem:[%s2346 + $0x60] sm:$0xff]
        %v2360 = vld [vmem:[%s2346 + $0x68] sm:$0xff]
        %v2361 = vld [vmem:[%s2346 + $0x70] sm:$0xff]
        %v2362 = vld [vmem:[%s2346 + $0x78] sm:$0xff]
        %2363 = vmatpush.msra.mxu0 0.0
        %2364 = vmatpush.msra.mxu0 0.0
        %2365 = vmatpush.msra.mxu0 0.0
        %2366 = vmatpush.msra.mxu0 0.0
        %2367 = vmatpush.msra.mxu0 0.0
        %2368 = vmatpush.msra.mxu0 0.0
        %2369 = vmatpush.msra.mxu0 0.0
        %2370 = vmatpush.msra.mxu0 0.0
        %2371 = vmatpush.msra.mxu0 %v2361
        %2372 = vmatpush.msra.mxu0 %v2359
        %2373 = vmatpush.msra.mxu0 %v2357
        %2374 = vmatpush.msra.mxu0 %v2355
        %2375 = vmatpush.msra.mxu0 %v2353
        %2376 = vmatpush.msra.mxu0 %v2351
        %2377 = vmatpush.msra.mxu0 %v2349
        %2378 = vmatpush.msra.mxu0 %v2347
        %2379 = vmatmul.f32.gmra.mxu0 %v656
        %v2380 = vpop.f32.mrf.mxu0
        %v2381 = vadd.f32 0.0, %v2380
        %2382 = vdwg.mxu0
        %2383 = vmatpush.msra.mxu0 0.0
        %2384 = vmatpush.msra.mxu0 0.0
        %2385 = vmatpush.msra.mxu0 0.0
        %2386 = vmatpush.msra.mxu0 0.0
        %2387 = vmatpush.msra.mxu0 0.0
        %2388 = vmatpush.msra.mxu0 0.0
        %2389 = vmatpush.msra.mxu0 0.0
        %2390 = vmatpush.msra.mxu0 0.0
        %2391 = vmatpush.msra.mxu0 %v2362
        %2392 = vmatpush.msra.mxu0 %v2360
        %2393 = vmatpush.msra.mxu0 %v2358
        %2394 = vmatpush.msra.mxu0 %v2356
        %2395 = vmatpush.msra.mxu0 %v2354
        %2396 = vmatpush.msra.mxu0 %v2352
        %2397 = vmatpush.msra.mxu0 %v2350
        %2398 = vmatpush.msra.mxu0 %v2348
        %2399 = vmatmul.f32.gmra.mxu0 %v656
        %v2400 = vpop.f32.mrf.mxu0
        %v2401 = vadd.f32 0.0, %v2400
        %2402 = vdwg.mxu0
        %2403 = vmatpush.xpose.msra.mxu0 0.0
        %2404 = vmatpush.xpose.msra.mxu0 0.0
        %2405 = vmatpush.xpose.msra.mxu0 0.0
        %2406 = vmatpush.xpose.msra.mxu0 0.0
        %2407 = vmatpush.xpose.msra.mxu0 0.0
        %2408 = vmatpush.xpose.msra.mxu0 0.0
        %2409 = vmatpush.xpose.msra.mxu0 0.0
        %2410 = vmatpush.xpose.msra.mxu0 0.0
        %2411 = vmatpush.xpose.msra.mxu0 0.0
        %2412 = vmatpush.xpose.msra.mxu0 0.0
        %2413 = vmatpush.xpose.msra.mxu0 0.0
        %2414 = vmatpush.xpose.msra.mxu0 0.0
        %2415 = vmatpush.xpose.msra.mxu0 0.0
        %2416 = vmatpush.xpose.msra.mxu0 0.0
        %2417 = vmatpush.xpose.msra.mxu0 0.0
        %2418 = vmatpush.xpose.msra.mxu0 %v2381
        %2419 = vmatmul.f32.gmra.mxu0 %v2347
        %v2420 = vpop.f32.mrf.mxu0
        %v2421 = vadd.f32 0.0, %v2420
        %2422 = vmatmul.f32.gmra.mxu0 %v2349
        %v2423 = vpop.f32.mrf.mxu0
        %v2424 = vadd.f32 0.0, %v2423
        %2425 = vmatmul.f32.gmra.mxu0 %v2351
        %v2426 = vpop.f32.mrf.mxu0
        %v2427 = vadd.f32 0.0, %v2426
        %2428 = vmatmul.f32.gmra.mxu0 %v2353
        %v2429 = vpop.f32.mrf.mxu0
        %v2430 = vadd.f32 0.0, %v2429
        %2431 = vmatmul.f32.gmra.mxu0 %v2355
        %v2432 = vpop.f32.mrf.mxu0
        %v2433 = vadd.f32 0.0, %v2432
        %2434 = vmatmul.f32.gmra.mxu0 %v2357
        %v2435 = vpop.f32.mrf.mxu0
        %v2436 = vadd.f32 0.0, %v2435
        %2437 = vmatmul.f32.gmra.mxu0 %v2359
        %v2438 = vpop.f32.mrf.mxu0
        %v2439 = vadd.f32 0.0, %v2438
        %2440 = vmatmul.f32.gmra.mxu0 %v2361
        %v2441 = vpop.f32.mrf.mxu0
        %v2442 = vadd.f32 0.0, %v2441
        %2443 = vdwg.mxu0
        %2444 = vmatpush.xpose.msra.mxu0 0.0
        %2445 = vmatpush.xpose.msra.mxu0 0.0
        %2446 = vmatpush.xpose.msra.mxu0 0.0
        %2447 = vmatpush.xpose.msra.mxu0 0.0
        %2448 = vmatpush.xpose.msra.mxu0 0.0
        %2449 = vmatpush.xpose.msra.mxu0 0.0
        %2450 = vmatpush.xpose.msra.mxu0 0.0
        %2451 = vmatpush.xpose.msra.mxu0 0.0
        %2452 = vmatpush.xpose.msra.mxu0 0.0
        %2453 = vmatpush.xpose.msra.mxu0 0.0
        %2454 = vmatpush.xpose.msra.mxu0 0.0
        %2455 = vmatpush.xpose.msra.mxu0 0.0
        %2456 = vmatpush.xpose.msra.mxu0 0.0
        %2457 = vmatpush.xpose.msra.mxu0 0.0
        %2458 = vmatpush.xpose.msra.mxu0 0.0
        %2459 = vmatpush.xpose.msra.mxu0 %v2401
        %2460 = vmatmul.f32.gmra.mxu0 %v2348
        %v2461 = vpop.f32.mrf.mxu0
        %v2462 = vadd.f32 %v2421, %v2461
        %2463 = vmatmul.f32.gmra.mxu0 %v2350
        %v2464 = vpop.f32.mrf.mxu0
        %v2465 = vadd.f32 %v2424, %v2464
        %2466 = vmatmul.f32.gmra.mxu0 %v2352
        %v2467 = vpop.f32.mrf.mxu0
        %v2468 = vadd.f32 %v2427, %v2467
        %2469 = vmatmul.f32.gmra.mxu0 %v2354
        %v2470 = vpop.f32.mrf.mxu0
        %v2471 = vadd.f32 %v2430, %v2470
        %2472 = vmatmul.f32.gmra.mxu0 %v2356
        %v2473 = vpop.f32.mrf.mxu0
        %v2474 = vadd.f32 %v2433, %v2473
        %2475 = vmatmul.f32.gmra.mxu0 %v2358
        %v2476 = vpop.f32.mrf.mxu0
        %v2477 = vadd.f32 %v2436, %v2476
        %2478 = vmatmul.f32.gmra.mxu0 %v2360
        %v2479 = vpop.f32.mrf.mxu0
        %v2480 = vadd.f32 %v2439, %v2479
        %2481 = vmatmul.f32.gmra.mxu0 %v2362
        %v2482 = vpop.f32.mrf.mxu0
        %v2483 = vadd.f32 %v2442, %v2482
        %2484 = vdwg.mxu0
        %v2485 = vmul.f32 %v2462, %v780
        %v2486 = vmul.f32 %v2465, %v781
        %v2487 = vmul.f32 %v2468, %v782
        %v2488 = vmul.f32 %v2471, %v783
        %v2489 = vmul.f32 %v2474, %v784
        %v2490 = vmul.f32 %v2477, %v785
        %v2491 = vmul.f32 %v2480, %v786
        %v2492 = vmul.f32 %v2483, %v787
        %v2493 = vsel %vm796, %v2485, 0.0
        %2494 = vadd.xlane.f32.xlu0 %v2493
        %v2495 = vpop.xlane.xlu0 %2494
        %v2496 = vsel %vm796, %v2486, 0.0
        %2497 = vadd.xlane.f32.xlu0 %v2496
        %v2498 = vpop.xlane.xlu0 %2497
        %v2499 = vsel %vm796, %v2487, 0.0
        %2500 = vadd.xlane.f32.xlu0 %v2499
        %v2501 = vpop.xlane.xlu0 %2500
        %v2502 = vsel %vm796, %v2488, 0.0
        %2503 = vadd.xlane.f32.xlu0 %v2502
        %v2504 = vpop.xlane.xlu0 %2503
        %v2505 = vsel %vm796, %v2489, 0.0
        %2506 = vadd.xlane.f32.xlu0 %v2505
        %v2507 = vpop.xlane.xlu0 %2506
        %v2508 = vsel %vm796, %v2490, 0.0
        %2509 = vadd.xlane.f32.xlu0 %v2508
        %v2510 = vpop.xlane.xlu0 %2509
        %v2511 = vsel %vm796, %v2491, 0.0
        %2512 = vadd.xlane.f32.xlu0 %v2511
        %v2513 = vpop.xlane.xlu0 %2512
        %v2514 = vsel %vm796, %v2492, 0.0
        %2515 = vadd.xlane.f32.xlu0 %v2514
        %v2516 = vpop.xlane.xlu0 %2515
        %v2517 = vmul.f32 %v2347, %v2347
        %v2518 = vmul.f32 %v2348, %v2348
        %v2519 = vmul.f32 %v2349, %v2349
        %v2520 = vmul.f32 %v2350, %v2350
        %v2521 = vmul.f32 %v2351, %v2351
        %v2522 = vmul.f32 %v2352, %v2352
        %v2523 = vmul.f32 %v2353, %v2353
        %v2524 = vmul.f32 %v2354, %v2354
        %v2525 = vmul.f32 %v2355, %v2355
        %v2526 = vmul.f32 %v2356, %v2356
        %v2527 = vmul.f32 %v2357, %v2357
        %v2528 = vmul.f32 %v2358, %v2358
        %v2529 = vmul.f32 %v2359, %v2359
        %v2530 = vmul.f32 %v2360, %v2360
        %v2531 = vmul.f32 %v2361, %v2361
        %v2532 = vmul.f32 %v2362, %v2362
        %v2533 = vadd.f32 %v2517, %v2518
        %2534 = vadd.xlane.f32.xlu0 %v2533
        %v2535 = vpop.xlane.xlu0 %2534
        %v2536 = vadd.f32 %v2519, %v2520
        %2537 = vadd.xlane.f32.xlu0 %v2536
        %v2538 = vpop.xlane.xlu0 %2537
        %v2539 = vadd.f32 %v2521, %v2522
        %2540 = vadd.xlane.f32.xlu0 %v2539
        %v2541 = vpop.xlane.xlu0 %2540
        %v2542 = vadd.f32 %v2523, %v2524
        %2543 = vadd.xlane.f32.xlu0 %v2542
        %v2544 = vpop.xlane.xlu0 %2543
        %v2545 = vadd.f32 %v2525, %v2526
        %2546 = vadd.xlane.f32.xlu0 %v2545
        %v2547 = vpop.xlane.xlu0 %2546
        %v2548 = vadd.f32 %v2527, %v2528
        %2549 = vadd.xlane.f32.xlu0 %v2548
        %v2550 = vpop.xlane.xlu0 %2549
        %v2551 = vadd.f32 %v2529, %v2530
        %2552 = vadd.xlane.f32.xlu0 %v2551
        %v2553 = vpop.xlane.xlu0 %2552
        %v2554 = vadd.f32 %v2531, %v2532
        %2555 = vadd.xlane.f32.xlu0 %v2554
        %v2556 = vpop.xlane.xlu0 %2555
        %v2557 = vmul.f32 %v2381, %v2381
        %v2558 = vmul.f32 %v2401, %v2401
        %v2559 = vsel %vm863, %v2557, 0.0
        %v2560 = vsel %vm863, %v2558, 0.0
        %v2561 = vadd.f32 %v2559, %v2560
        %2562 = vadd.xlane.f32.xlu0 %v2561
        %v2563 = vpop.xlane.xlu0 %2562
        %v2565 = vsel %vm863, %v2563, 0
        %2567 = vmatpush.msra.mxu0 0.0
        %2568 = vmatpush.msra.mxu0 0.0
        %2569 = vmatpush.msra.mxu0 0.0
        %2570 = vmatpush.msra.mxu0 0.0
        %2571 = vmatpush.msra.mxu0 0.0
        %2572 = vmatpush.msra.mxu0 0.0
        %2573 = vmatpush.msra.mxu0 0.0
        %2574 = vmatpush.msra.mxu0 0.0
        %2575 = vmatpush.msra.mxu0 0.0
        %2576 = vmatpush.msra.mxu0 0.0
        %2577 = vmatpush.msra.mxu0 0.0
        %2578 = vmatpush.msra.mxu0 0.0
        %2579 = vmatpush.msra.mxu0 0.0
        %2580 = vmatpush.msra.mxu0 0.0
        %2581 = vmatpush.msra.mxu0 0.0
        %2582 = vmatpush.msra.mxu0 %v2565
        %2583 = vmatmul.f32.gmra.mxu0 %v870
        %v2584 = vpop.f32.mrf.mxu0
        %v2585 = vadd.f32 0.0, %v2584
        %2586 = vmatmul.f32.gmra.mxu0 %v873
        %v2587 = vpop.f32.mrf.mxu0
        %v2588 = vadd.f32 0.0, %v2587
        %2589 = vmatmul.f32.gmra.mxu0 %v876
        %v2590 = vpop.f32.mrf.mxu0
        %v2591 = vadd.f32 0.0, %v2590
        %2592 = vmatmul.f32.gmra.mxu0 %v879
        %v2593 = vpop.f32.mrf.mxu0
        %v2594 = vadd.f32 0.0, %v2593
        %2595 = vmatmul.f32.gmra.mxu0 %v882
        %v2596 = vpop.f32.mrf.mxu0
        %v2597 = vadd.f32 0.0, %v2596
        %2598 = vmatmul.f32.gmra.mxu0 %v885
        %v2599 = vpop.f32.mrf.mxu0
        %v2600 = vadd.f32 0.0, %v2599
        %2601 = vmatmul.f32.gmra.mxu0 %v888
        %v2602 = vpop.f32.mrf.mxu0
        %v2603 = vadd.f32 0.0, %v2602
        %2604 = vmatmul.f32.gmra.mxu0 %v891
        %v2605 = vpop.f32.mrf.mxu0
        %v2606 = vadd.f32 0.0, %v2605
        %2607 = vdwg.mxu0
        %v2608 = vmax.f32 %v2535, 1e-24
        %v2609 = vmax.f32 %v2538, 1e-24
        %v2610 = vmax.f32 %v2541, 1e-24
        %v2611 = vmax.f32 %v2544, 1e-24
        %v2612 = vmax.f32 %v2547, 1e-24
        %v2613 = vmax.f32 %v2550, 1e-24
        %v2614 = vmax.f32 %v2553, 1e-24
        %v2615 = vmax.f32 %v2556, 1e-24
        %v2616 = vrsqrt.pop %v2608
        %v2617 = vmul.f32 %v2616, %v2608
        %v2618 = vmul.f32 %v2617, %v2616
        %v2619 = vmul.f32 0.5, %v2618
        %v2620 = vsub.f32 1.5, %v2619
        %v2621 = vmul.f32 %v2616, %v2620
        %vm2622 = vweird.f32 %v2608
        %vm2623 = vweird.f32 %v2616
        %vm2624 = vmor %vm2622, %vm2623
        %v2625 = vsel %vm2624, %v2616, %v2621
        %v2626 = vrsqrt.pop %v2609
        %v2627 = vmul.f32 %v2626, %v2609
        %v2628 = vmul.f32 %v2627, %v2626
        %v2629 = vmul.f32 0.5, %v2628
        %v2630 = vsub.f32 1.5, %v2629
        %v2631 = vmul.f32 %v2626, %v2630
        %vm2632 = vweird.f32 %v2609
        %vm2633 = vweird.f32 %v2626
        %vm2634 = vmor %vm2632, %vm2633
        %v2635 = vsel %vm2634, %v2626, %v2631
        %v2636 = vrsqrt.pop %v2610
        %v2637 = vmul.f32 %v2636, %v2610
        %v2638 = vmul.f32 %v2637, %v2636
        %v2639 = vmul.f32 0.5, %v2638
        %v2640 = vsub.f32 1.5, %v2639
        %v2641 = vmul.f32 %v2636, %v2640
        %vm2642 = vweird.f32 %v2610
        %vm2643 = vweird.f32 %v2636
        %vm2644 = vmor %vm2642, %vm2643
        %v2645 = vsel %vm2644, %v2636, %v2641
        %v2646 = vrsqrt.pop %v2611
        %v2647 = vmul.f32 %v2646, %v2611
        %v2648 = vmul.f32 %v2647, %v2646
        %v2649 = vmul.f32 0.5, %v2648
        %v2650 = vsub.f32 1.5, %v2649
        %v2651 = vmul.f32 %v2646, %v2650
        %vm2652 = vweird.f32 %v2611
        %vm2653 = vweird.f32 %v2646
        %vm2654 = vmor %vm2652, %vm2653
        %v2655 = vsel %vm2654, %v2646, %v2651
        %v2656 = vrsqrt.pop %v2612
        %v2657 = vmul.f32 %v2656, %v2612
        %v2658 = vmul.f32 %v2657, %v2656
        %v2659 = vmul.f32 0.5, %v2658
        %v2660 = vsub.f32 1.5, %v2659
        %v2661 = vmul.f32 %v2656, %v2660
        %vm2662 = vweird.f32 %v2612
        %vm2663 = vweird.f32 %v2656
        %vm2664 = vmor %vm2662, %vm2663
        %v2665 = vsel %vm2664, %v2656, %v2661
        %v2666 = vrsqrt.pop %v2613
        %v2667 = vmul.f32 %v2666, %v2613
        %v2668 = vmul.f32 %v2667, %v2666
        %v2669 = vmul.f32 0.5, %v2668
        %v2670 = vsub.f32 1.5, %v2669
        %v2671 = vmul.f32 %v2666, %v2670
        %vm2672 = vweird.f32 %v2613
        %vm2673 = vweird.f32 %v2666
        %vm2674 = vmor %vm2672, %vm2673
        %v2675 = vsel %vm2674, %v2666, %v2671
        %v2676 = vrsqrt.pop %v2614
        %v2677 = vmul.f32 %v2676, %v2614
        %v2678 = vmul.f32 %v2677, %v2676
        %v2679 = vmul.f32 0.5, %v2678
        %v2680 = vsub.f32 1.5, %v2679
        %v2681 = vmul.f32 %v2676, %v2680
        %vm2682 = vweird.f32 %v2614
        %vm2683 = vweird.f32 %v2676
        %vm2684 = vmor %vm2682, %vm2683
        %v2685 = vsel %vm2684, %v2676, %v2681
        %v2686 = vrsqrt.pop %v2615
        %v2687 = vmul.f32 %v2686, %v2615
        %v2688 = vmul.f32 %v2687, %v2686
        %v2689 = vmul.f32 0.5, %v2688
        %v2690 = vsub.f32 1.5, %v2689
        %v2691 = vmul.f32 %v2686, %v2690
        %vm2692 = vweird.f32 %v2615
        %vm2693 = vweird.f32 %v2686
        %vm2694 = vmor %vm2692, %vm2693
        %v2695 = vsel %vm2694, %v2686, %v2691
        %v2696 = vmax.f32 %v2585, 1e-24
        %v2697 = vmax.f32 %v2588, 1e-24
        %v2698 = vmax.f32 %v2591, 1e-24
        %v2699 = vmax.f32 %v2594, 1e-24
        %v2700 = vmax.f32 %v2597, 1e-24
        %v2701 = vmax.f32 %v2600, 1e-24
        %v2702 = vmax.f32 %v2603, 1e-24
        %v2703 = vmax.f32 %v2606, 1e-24
        %v2704 = vrsqrt.pop %v2696
        %v2705 = vmul.f32 %v2704, %v2696
        %v2706 = vmul.f32 %v2705, %v2704
        %v2707 = vmul.f32 0.5, %v2706
        %v2708 = vsub.f32 1.5, %v2707
        %v2709 = vmul.f32 %v2704, %v2708
        %vm2710 = vweird.f32 %v2696
        %vm2711 = vweird.f32 %v2704
        %vm2712 = vmor %vm2710, %vm2711
        %v2713 = vsel %vm2712, %v2704, %v2709
        %v2714 = vrsqrt.pop %v2697
        %v2715 = vmul.f32 %v2714, %v2697
        %v2716 = vmul.f32 %v2715, %v2714
        %v2717 = vmul.f32 0.5, %v2716
        %v2718 = vsub.f32 1.5, %v2717
        %v2719 = vmul.f32 %v2714, %v2718
        %vm2720 = vweird.f32 %v2697
        %vm2721 = vweird.f32 %v2714
        %vm2722 = vmor %vm2720, %vm2721
        %v2723 = vsel %vm2722, %v2714, %v2719
        %v2724 = vrsqrt.pop %v2698
        %v2725 = vmul.f32 %v2724, %v2698
        %v2726 = vmul.f32 %v2725, %v2724
        %v2727 = vmul.f32 0.5, %v2726
        %v2728 = vsub.f32 1.5, %v2727
        %v2729 = vmul.f32 %v2724, %v2728
        %vm2730 = vweird.f32 %v2698
        %vm2731 = vweird.f32 %v2724
        %vm2732 = vmor %vm2730, %vm2731
        %v2733 = vsel %vm2732, %v2724, %v2729
        %v2734 = vrsqrt.pop %v2699
        %v2735 = vmul.f32 %v2734, %v2699
        %v2736 = vmul.f32 %v2735, %v2734
        %v2737 = vmul.f32 0.5, %v2736
        %v2738 = vsub.f32 1.5, %v2737
        %v2739 = vmul.f32 %v2734, %v2738
        %vm2740 = vweird.f32 %v2699
        %vm2741 = vweird.f32 %v2734
        %vm2742 = vmor %vm2740, %vm2741
        %v2743 = vsel %vm2742, %v2734, %v2739
        %v2744 = vrsqrt.pop %v2700
        %v2745 = vmul.f32 %v2744, %v2700
        %v2746 = vmul.f32 %v2745, %v2744
        %v2747 = vmul.f32 0.5, %v2746
        %v2748 = vsub.f32 1.5, %v2747
        %v2749 = vmul.f32 %v2744, %v2748
        %vm2750 = vweird.f32 %v2700
        %vm2751 = vweird.f32 %v2744
        %vm2752 = vmor %vm2750, %vm2751
        %v2753 = vsel %vm2752, %v2744, %v2749
        %v2754 = vrsqrt.pop %v2701
        %v2755 = vmul.f32 %v2754, %v2701
        %v2756 = vmul.f32 %v2755, %v2754
        %v2757 = vmul.f32 0.5, %v2756
        %v2758 = vsub.f32 1.5, %v2757
        %v2759 = vmul.f32 %v2754, %v2758
        %vm2760 = vweird.f32 %v2701
        %vm2761 = vweird.f32 %v2754
        %vm2762 = vmor %vm2760, %vm2761
        %v2763 = vsel %vm2762, %v2754, %v2759
        %v2764 = vrsqrt.pop %v2702
        %v2765 = vmul.f32 %v2764, %v2702
        %v2766 = vmul.f32 %v2765, %v2764
        %v2767 = vmul.f32 0.5, %v2766
        %v2768 = vsub.f32 1.5, %v2767
        %v2769 = vmul.f32 %v2764, %v2768
        %vm2770 = vweird.f32 %v2702
        %vm2771 = vweird.f32 %v2764
        %vm2772 = vmor %vm2770, %vm2771
        %v2773 = vsel %vm2772, %v2764, %v2769
        %v2774 = vrsqrt.pop %v2703
        %v2775 = vmul.f32 %v2774, %v2703
        %v2776 = vmul.f32 %v2775, %v2774
        %v2777 = vmul.f32 0.5, %v2776
        %v2778 = vsub.f32 1.5, %v2777
        %v2779 = vmul.f32 %v2774, %v2778
        %vm2780 = vweird.f32 %v2703
        %vm2781 = vweird.f32 %v2774
        %vm2782 = vmor %vm2780, %vm2781
        %v2783 = vsel %vm2782, %v2774, %v2779
        %v2784 = vmul.f32 %v2625, %v2713
        %v2785 = vmul.f32 %v2635, %v2723
        %v2786 = vmul.f32 %v2645, %v2733
        %v2787 = vmul.f32 %v2655, %v2743
        %v2788 = vmul.f32 %v2665, %v2753
        %v2789 = vmul.f32 %v2675, %v2763
        %v2790 = vmul.f32 %v2685, %v2773
        %v2791 = vmul.f32 %v2695, %v2783
        %v2792 = vmul.f32 %v2495, %v2784
        %v2793 = vmul.f32 %v2498, %v2785
        %v2794 = vmul.f32 %v2501, %v2786
        %v2795 = vmul.f32 %v2504, %v2787
        %v2796 = vmul.f32 %v2507, %v2788
        %v2797 = vmul.f32 %v2510, %v2789
        %v2798 = vmul.f32 %v2513, %v2790
        %v2799 = vmul.f32 %v2516, %v2791
        %2801 = vset.pattern.permute.xlu0 0
        %2802 = vperm.xlu0 %2801, %v2792
        %v2803 = vpop.permute.xlu0 %2802
        %2806 = vset.pattern.permute.xlu0 0
        %2807 = vperm.xlu0 %2806, %v2793
        %v2808 = vpop.permute.xlu0 %2807
        %2811 = vset.pattern.permute.xlu0 0
        %2812 = vperm.xlu0 %2811, %v2794
        %v2813 = vpop.permute.xlu0 %2812
        %2816 = vset.pattern.permute.xlu0 0
        %2817 = vperm.xlu0 %2816, %v2795
        %v2818 = vpop.permute.xlu0 %2817
        %2821 = vset.pattern.permute.xlu0 0
        %2822 = vperm.xlu0 %2821, %v2796
        %v2823 = vpop.permute.xlu0 %2822
        %2826 = vset.pattern.permute.xlu0 0
        %2827 = vperm.xlu0 %2826, %v2797
        %v2828 = vpop.permute.xlu0 %2827
        %2831 = vset.pattern.permute.xlu0 0
        %2832 = vperm.xlu0 %2831, %v2798
        %v2833 = vpop.permute.xlu0 %2832
        %2836 = vset.pattern.permute.xlu0 0
        %2837 = vperm.xlu0 %2836, %v2799
        %v2838 = vpop.permute.xlu0 %2837
        %v2840 = vmul.f32 %v2803, %v1130
        %v2841 = vmul.f32 %v2808, %v1131
        %v2842 = vmul.f32 %v2813, %v1132
        %v2843 = vmul.f32 %v2818, %v1133
        %v2844 = vmul.f32 %v2823, %v1134
        %v2845 = vmul.f32 %v2828, %v1135
        %v2846 = vmul.f32 %v2833, %v1136
        %v2847 = vmul.f32 %v2838, %v1137
        %2848 = vmatpush.msra.mxu0 0.0
        %2849 = vmatpush.msra.mxu0 0.0
        %2850 = vmatpush.msra.mxu0 0.0
        %2851 = vmatpush.msra.mxu0 0.0
        %2852 = vmatpush.msra.mxu0 0.0
        %2853 = vmatpush.msra.mxu0 0.0
        %2854 = vmatpush.msra.mxu0 0.0
        %2855 = vmatpush.msra.mxu0 0.0
        %2856 = vmatpush.msra.mxu0 %v2847
        %2857 = vmatpush.msra.mxu0 %v2846
        %2858 = vmatpush.msra.mxu0 %v2845
        %2859 = vmatpush.msra.mxu0 %v2844
        %2860 = vmatpush.msra.mxu0 %v2843
        %2861 = vmatpush.msra.mxu0 %v2842
        %2862 = vmatpush.msra.mxu0 %v2841
        %2863 = vmatpush.msra.mxu0 %v2840
        %2864 = vmatmul.f32.gmra.mxu0 %v1187
        %v2865 = vpop.f32.mrf.mxu0
        %v2866 = vadd.f32 0.0, %v2865
        %2867 = vdwg.mxu0
        %v2868 = vsel %vm1209, %v2866, inf
        %2869 = vmin.xlane.f32.xlu0 %v2868
        %v2870 = vpop.xlane.xlu0 %2869
        %v2871 = vsel %vm1209, %v2866, -inf
        %2872 = vmax.xlane.f32.xlu0 %v2871
        %v2873 = vpop.xlane.xlu0 %2872
        %v2874 = vsub.f32 %v2873, %v2870
        %v2875 = vmul.f32 %v2874, 0.25
        %v2876 = vsub.f32 1.0, %v2875
        %v2878 = vsel %vm863, %v2866, 0
        %2880 = vmatpush.msra.mxu0 0.0
        %2881 = vmatpush.msra.mxu0 0.0
        %2882 = vmatpush.msra.mxu0 0.0
        %2883 = vmatpush.msra.mxu0 0.0
        %2884 = vmatpush.msra.mxu0 0.0
        %2885 = vmatpush.msra.mxu0 0.0
        %2886 = vmatpush.msra.mxu0 0.0
        %2887 = vmatpush.msra.mxu0 0.0
        %2888 = vmatpush.msra.mxu0 0.0
        %2889 = vmatpush.msra.mxu0 0.0
        %2890 = vmatpush.msra.mxu0 0.0
        %2891 = vmatpush.msra.mxu0 0.0
        %2892 = vmatpush.msra.mxu0 0.0
        %2893 = vmatpush.msra.mxu0 0.0
        %2894 = vmatpush.msra.mxu0 0.0
        %2895 = vmatpush.msra.mxu0 %v2878
        %2896 = vmatmul.f32.gmra.mxu0 %v1222
        %v2897 = vpop.f32.mrf.mxu0
        %v2898 = vadd.f32 0.0, %v2897
        %2899 = vmatmul.f32.gmra.mxu0 %v1225
        %v2900 = vpop.f32.mrf.mxu0
        %v2901 = vadd.f32 0.0, %v2900
        %2902 = vdwg.mxu0
        %v2904 = vsel %vm863, %v2874, 0
        %2906 = vmatpush.msra.mxu0 0.0
        %2907 = vmatpush.msra.mxu0 0.0
        %2908 = vmatpush.msra.mxu0 0.0
        %2909 = vmatpush.msra.mxu0 0.0
        %2910 = vmatpush.msra.mxu0 0.0
        %2911 = vmatpush.msra.mxu0 0.0
        %2912 = vmatpush.msra.mxu0 0.0
        %2913 = vmatpush.msra.mxu0 0.0
        %2914 = vmatpush.msra.mxu0 0.0
        %2915 = vmatpush.msra.mxu0 0.0
        %2916 = vmatpush.msra.mxu0 0.0
        %2917 = vmatpush.msra.mxu0 0.0
        %2918 = vmatpush.msra.mxu0 0.0
        %2919 = vmatpush.msra.mxu0 0.0
        %2920 = vmatpush.msra.mxu0 0.0
        %2921 = vmatpush.msra.mxu0 %v2904
        %2922 = vmatmul.f32.gmra.mxu0 %v1222
        %v2923 = vpop.f32.mrf.mxu0
        %v2924 = vadd.f32 0.0, %v2923
        %2925 = vmatmul.f32.gmra.mxu0 %v1225
        %v2926 = vpop.f32.mrf.mxu0
        %v2927 = vadd.f32 0.0, %v2926
        %2928 = vdwg.mxu0
        %v2930 = vsel %vm863, %v2876, 0
        %2932 = vmatpush.msra.mxu0 0.0
        %2933 = vmatpush.msra.mxu0 0.0
        %2934 = vmatpush.msra.mxu0 0.0
        %2935 = vmatpush.msra.mxu0 0.0
        %2936 = vmatpush.msra.mxu0 0.0
        %2937 = vmatpush.msra.mxu0 0.0
        %2938 = vmatpush.msra.mxu0 0.0
        %2939 = vmatpush.msra.mxu0 0.0
        %2940 = vmatpush.msra.mxu0 0.0
        %2941 = vmatpush.msra.mxu0 0.0
        %2942 = vmatpush.msra.mxu0 0.0
        %2943 = vmatpush.msra.mxu0 0.0
        %2944 = vmatpush.msra.mxu0 0.0
        %2945 = vmatpush.msra.mxu0 0.0
        %2946 = vmatpush.msra.mxu0 0.0
        %2947 = vmatpush.msra.mxu0 %v2930
        %2948 = vmatmul.f32.gmra.mxu0 %v1222
        %v2949 = vpop.f32.mrf.mxu0
        %v2950 = vadd.f32 0.0, %v2949
        %2951 = vmatmul.f32.gmra.mxu0 %v1225
        %v2952 = vpop.f32.mrf.mxu0
        %v2953 = vadd.f32 0.0, %v2952
        %2954 = vdwg.mxu0
        %v2955 = vmul.f32 %v1305, %v2924
        %v2956 = vmul.f32 %v1306, %v2927
        %v2958 = vsel %vm863, %v2870, 0
        %2960 = vmatpush.msra.mxu0 0.0
        %2961 = vmatpush.msra.mxu0 0.0
        %2962 = vmatpush.msra.mxu0 0.0
        %2963 = vmatpush.msra.mxu0 0.0
        %2964 = vmatpush.msra.mxu0 0.0
        %2965 = vmatpush.msra.mxu0 0.0
        %2966 = vmatpush.msra.mxu0 0.0
        %2967 = vmatpush.msra.mxu0 0.0
        %2968 = vmatpush.msra.mxu0 0.0
        %2969 = vmatpush.msra.mxu0 0.0
        %2970 = vmatpush.msra.mxu0 0.0
        %2971 = vmatpush.msra.mxu0 0.0
        %2972 = vmatpush.msra.mxu0 0.0
        %2973 = vmatpush.msra.mxu0 0.0
        %2974 = vmatpush.msra.mxu0 0.0
        %2975 = vmatpush.msra.mxu0 %v2958
        %2976 = vmatmul.f32.gmra.mxu0 %v1222
        %v2977 = vpop.f32.mrf.mxu0
        %v2978 = vadd.f32 %v2955, %v2977
        %2979 = vmatmul.f32.gmra.mxu0 %v1225
        %v2980 = vpop.f32.mrf.mxu0
        %v2981 = vadd.f32 %v2956, %v2980
        %2982 = vdwg.mxu0
        %2984 = vset.pattern.permute.xlu0 0
        %2985 = vperm.xlu0 %2984, %v2978
        %v2986 = vpop.permute.xlu0 %2985
        %2989 = vset.pattern.permute.xlu0 0
        %2990 = vperm.xlu0 %2989, %v2981
        %v2991 = vpop.permute.xlu0 %2990
        %v2993 = vsub.f32 %v2986, %v2898
        %v2994 = vsub.f32 %v2991, %v2901
        %v2995 = vand.u32 2147483647, %v2993
        %v2996 = vand.u32 2147483647, %v2994
        %v2997 = vsub.f32 1.0, %v2995
        %v2998 = vsub.f32 1.0, %v2996
        %3000 = vset.pattern.permute.xlu0 0
        %3001 = vperm.xlu0 %3000, %v2950
        %v3002 = vpop.permute.xlu0 %3001
        %3005 = vset.pattern.permute.xlu0 0
        %3006 = vperm.xlu0 %3005, %v2953
        %v3007 = vpop.permute.xlu0 %3006
        %vm3009 = vcmp.gt.f32.partialorder %v2997, %v3002
        %vm3010 = vcmp.gt.f32.partialorder %v2998, %v3007
        %v3011 = vsel %vm3009, %v2997, 0.0
        %v3012 = vsel %vm3010, %v2998, 0.0
        %3015 = vrot.lane.b32.xlu0 %v3011, 123
        %v3016 = vpop.permute.xlu0 %3015
        %3017 = vrot.lane.b32.xlu0 %v3012, 123
        %v3018 = vpop.permute.xlu0 %3017
        %v3021 = vsel %vm1373, %v3016, 0.0
        %v3022 = vsel %vm1373, %v3018, 0.0
        %v3023 = vmul.f32 %v3021, %v1378
        %v3024 = vmul.f32 %v3022, %v1378
        %3025 = vmatpush.msra.mxu0 0.0
        %3026 = vmatpush.msra.mxu0 0.0
        %3027 = vmatpush.msra.mxu0 0.0
        %3028 = vmatpush.msra.mxu0 0.0
        %3029 = vmatpush.msra.mxu0 0.0
        %3030 = vmatpush.msra.mxu0 0.0
        %3031 = vmatpush.msra.mxu0 0.0
        %3032 = vmatpush.msra.mxu0 0.0
        %3033 = vmatpush.msra.mxu0 0.0
        %3034 = vmatpush.msra.mxu0 0.0
        %3035 = vmatpush.msra.mxu0 0.0
        %3036 = vmatpush.msra.mxu0 0.0
        %3037 = vmatpush.msra.mxu0 0.0
        %3038 = vmatpush.msra.mxu0 0.0
        %3039 = vmatpush.msra.mxu0 %v3012
        %3040 = vmatpush.msra.mxu0 %v3011
        %3041 = vmatmul.f32.gmra.mxu0 %v1392
        %v3042 = vpop.f32.mrf.mxu0
        %v3043 = vadd.f32 0.0, %v3042
        %3044 = vmatmul.f32.gmra.mxu0 %v1395
        %v3045 = vpop.f32.mrf.mxu0
        %v3046 = vadd.f32 0.0, %v3045
        %3047 = vmatmul.f32.gmra.mxu0 %v1398
        %v3048 = vpop.f32.mrf.mxu0
        %v3049 = vadd.f32 0.0, %v3048
        %3050 = vmatmul.f32.gmra.mxu0 %v1401
        %v3051 = vpop.f32.mrf.mxu0
        %v3052 = vadd.f32 0.0, %v3051
        %3053 = vmatmul.f32.gmra.mxu0 %v1404
        %v3054 = vpop.f32.mrf.mxu0
        %v3055 = vadd.f32 0.0, %v3054
        %3056 = vmatmul.f32.gmra.mxu0 %v1407
        %v3057 = vpop.f32.mrf.mxu0
        %v3058 = vadd.f32 0.0, %v3057
        %3059 = vmatmul.f32.gmra.mxu0 %v1410
        %v3060 = vpop.f32.mrf.mxu0
        %v3061 = vadd.f32 0.0, %v3060
        %3062 = vmatmul.f32.gmra.mxu0 %v1413
        %v3063 = vpop.f32.mrf.mxu0
        %v3064 = vadd.f32 0.0, %v3063
        %3065 = vdwg.mxu0
        %3066 = vmatpush.msra.mxu0 0.0
        %3067 = vmatpush.msra.mxu0 0.0
        %3068 = vmatpush.msra.mxu0 0.0
        %3069 = vmatpush.msra.mxu0 0.0
        %3070 = vmatpush.msra.mxu0 0.0
        %3071 = vmatpush.msra.mxu0 0.0
        %3072 = vmatpush.msra.mxu0 0.0
        %3073 = vmatpush.msra.mxu0 0.0
        %3074 = vmatpush.msra.mxu0 0.0
        %3075 = vmatpush.msra.mxu0 0.0
        %3076 = vmatpush.msra.mxu0 0.0
        %3077 = vmatpush.msra.mxu0 0.0
        %3078 = vmatpush.msra.mxu0 0.0
        %3079 = vmatpush.msra.mxu0 0.0
        %3080 = vmatpush.msra.mxu0 %v3024
        %3081 = vmatpush.msra.mxu0 %v3023
        %3082 = vmatmul.f32.gmra.mxu0 %v1465
        %v3083 = vpop.f32.mrf.mxu0
        %v3084 = vadd.f32 0.0, %v3083
        %3085 = vmatmul.f32.gmra.mxu0 %v1468
        %v3086 = vpop.f32.mrf.mxu0
        %v3087 = vadd.f32 0.0, %v3086
        %3088 = vmatmul.f32.gmra.mxu0 %v1471
        %v3089 = vpop.f32.mrf.mxu0
        %v3090 = vadd.f32 0.0, %v3089
        %3091 = vmatmul.f32.gmra.mxu0 %v1474
        %v3092 = vpop.f32.mrf.mxu0
        %v3093 = vadd.f32 0.0, %v3092
        %3094 = vmatmul.f32.gmra.mxu0 %v1477
        %v3095 = vpop.f32.mrf.mxu0
        %v3096 = vadd.f32 0.0, %v3095
        %3097 = vmatmul.f32.gmra.mxu0 %v1480
        %v3098 = vpop.f32.mrf.mxu0
        %v3099 = vadd.f32 0.0, %v3098
        %3100 = vmatmul.f32.gmra.mxu0 %v1483
        %v3101 = vpop.f32.mrf.mxu0
        %v3102 = vadd.f32 0.0, %v3101
        %3103 = vmatmul.f32.gmra.mxu0 %v1486
        %v3104 = vpop.f32.mrf.mxu0
        %v3105 = vadd.f32 0.0, %v3104
        %3106 = vdwg.mxu0
        %v3107 = vmul.f32 %v3043, %v3084
        %v3108 = vmul.f32 %v3046, %v3087
        %v3109 = vmul.f32 %v3049, %v3090
        %v3110 = vmul.f32 %v3052, %v3093
        %v3111 = vmul.f32 %v3055, %v3096
        %v3112 = vmul.f32 %v3058, %v3099
        %v3113 = vmul.f32 %v3061, %v3102
        %v3114 = vmul.f32 %v3064, %v3105
        %v3115 = vsel %vm1390, %v3107, 0.0
        %3116 = vadd.xlane.f32.xlu0 %v3115
        %v3117 = vpop.xlane.xlu0 %3116
        %v3118 = vsel %vm1390, %v3108, 0.0
        %3119 = vadd.xlane.f32.xlu0 %v3118
        %v3120 = vpop.xlane.xlu0 %3119
        %v3121 = vsel %vm1390, %v3109, 0.0
        %3122 = vadd.xlane.f32.xlu0 %v3121
        %v3123 = vpop.xlane.xlu0 %3122
        %v3124 = vsel %vm1390, %v3110, 0.0
        %3125 = vadd.xlane.f32.xlu0 %v3124
        %v3126 = vpop.xlane.xlu0 %3125
        %v3127 = vsel %vm1390, %v3111, 0.0
        %3128 = vadd.xlane.f32.xlu0 %v3127
        %v3129 = vpop.xlane.xlu0 %3128
        %v3130 = vsel %vm1390, %v3112, 0.0
        %3131 = vadd.xlane.f32.xlu0 %v3130
        %v3132 = vpop.xlane.xlu0 %3131
        %v3133 = vsel %vm1390, %v3113, 0.0
        %3134 = vadd.xlane.f32.xlu0 %v3133
        %v3135 = vpop.xlane.xlu0 %3134
        %v3136 = vsel %vm1390, %v3114, 0.0
        %3137 = vadd.xlane.f32.xlu0 %v3136
        %v3138 = vpop.xlane.xlu0 %3137
        %3139 = vmatpush.msra.mxu0 0.0
        %3140 = vmatpush.msra.mxu0 0.0
        %3141 = vmatpush.msra.mxu0 0.0
        %3142 = vmatpush.msra.mxu0 0.0
        %3143 = vmatpush.msra.mxu0 0.0
        %3144 = vmatpush.msra.mxu0 0.0
        %3145 = vmatpush.msra.mxu0 0.0
        %3146 = vmatpush.msra.mxu0 0.0
        %3147 = vmatpush.msra.mxu0 %v3138
        %3148 = vmatpush.msra.mxu0 %v3135
        %3149 = vmatpush.msra.mxu0 %v3132
        %3150 = vmatpush.msra.mxu0 %v3129
        %3151 = vmatpush.msra.mxu0 %v3126
        %3152 = vmatpush.msra.mxu0 %v3123
        %3153 = vmatpush.msra.mxu0 %v3120
        %3154 = vmatpush.msra.mxu0 %v3117
        %3155 = vmatmul.f32.gmra.mxu0 %v1563
        %v3156 = vpop.f32.mrf.mxu0
        %v3157 = vadd.f32 0.0, %v3156
        %3158 = vdwg.mxu0
        %v3160 = vsel %vm863, %v3157, 0
        %3162 = vmatpush.msra.mxu0 0.0
        %3163 = vmatpush.msra.mxu0 0.0
        %3164 = vmatpush.msra.mxu0 0.0
        %3165 = vmatpush.msra.mxu0 0.0
        %3166 = vmatpush.msra.mxu0 0.0
        %3167 = vmatpush.msra.mxu0 0.0
        %3168 = vmatpush.msra.mxu0 0.0
        %3169 = vmatpush.msra.mxu0 0.0
        %3170 = vmatpush.msra.mxu0 0.0
        %3171 = vmatpush.msra.mxu0 0.0
        %3172 = vmatpush.msra.mxu0 0.0
        %3173 = vmatpush.msra.mxu0 0.0
        %3174 = vmatpush.msra.mxu0 0.0
        %3175 = vmatpush.msra.mxu0 0.0
        %3176 = vmatpush.msra.mxu0 0.0
        %3177 = vmatpush.msra.mxu0 %v3160
        %3178 = vmatmul.f32.gmra.mxu0 %v1594
        %v3179 = vpop.f32.mrf.mxu0
        %v3180 = vadd.f32 1e-06, %v3179
        %3181 = vmatmul.f32.gmra.mxu0 %v1597
        %v3182 = vpop.f32.mrf.mxu0
        %v3183 = vadd.f32 1e-06, %v3182
        %3184 = vmatmul.f32.gmra.mxu0 %v1600
        %v3185 = vpop.f32.mrf.mxu0
        %v3186 = vadd.f32 1e-06, %v3185
        %3187 = vmatmul.f32.gmra.mxu0 %v1603
        %v3188 = vpop.f32.mrf.mxu0
        %v3189 = vadd.f32 1e-06, %v3188
        %3190 = vmatmul.f32.gmra.mxu0 %v1606
        %v3191 = vpop.f32.mrf.mxu0
        %v3192 = vadd.f32 1e-06, %v3191
        %3193 = vmatmul.f32.gmra.mxu0 %v1609
        %v3194 = vpop.f32.mrf.mxu0
        %v3195 = vadd.f32 1e-06, %v3194
        %3196 = vmatmul.f32.gmra.mxu0 %v1612
        %v3197 = vpop.f32.mrf.mxu0
        %v3198 = vadd.f32 1e-06, %v3197
        %3199 = vmatmul.f32.gmra.mxu0 %v1615
        %v3200 = vpop.f32.mrf.mxu0
        %v3201 = vadd.f32 1e-06, %v3200
        %3202 = vdwg.mxu0
        %v3203 = vrcp.pop %v3180
        %v3204 = vmul.f32 %v3180, %v3203
        %v3205 = vsub.f32 1.0, %v3204
        %v3206 = vmul.f32 %v3203, %v3205
        %v3207 = vadd.f32 %v3203, %v3206
        %vm3208 = vweird.f32 %v3180
        %vm3209 = vweird.f32 %v3203
        %vm3210 = vmor %vm3208, %vm3209
        %v3211 = vsel %vm3210, %v3203, %v3207
        %v3212 = vand.u32 2147483647, %v3180
        %vm3213 = vcmp.eq.f32.partialorder %v3212, 8.507059e+37
        %v3214 = vand.u32 %v3180, 2147483648
        %v3215 = vor.u32 1.1754944e-38, %v3214
        %v3216 = vsel %vm3213, %v3215, %v3211
        %v3217 = vmul.f32 %v3117, %v3216
        %v3218 = vrcp.pop %v3183
        %v3219 = vmul.f32 %v3183, %v3218
        %v3220 = vsub.f32 1.0, %v3219
        %v3221 = vmul.f32 %v3218, %v3220
        %v3222 = vadd.f32 %v3218, %v3221
        %vm3223 = vweird.f32 %v3183
        %vm3224 = vweird.f32 %v3218
        %vm3225 = vmor %vm3223, %vm3224
        %v3226 = vsel %vm3225, %v3218, %v3222
        %v3227 = vand.u32 2147483647, %v3183
        %vm3228 = vcmp.eq.f32.partialorder %v3227, 8.507059e+37
        %v3229 = vand.u32 %v3183, 2147483648
        %v3230 = vor.u32 1.1754944e-38, %v3229
        %v3231 = vsel %vm3228, %v3230, %v3226
        %v3232 = vmul.f32 %v3120, %v3231
        %v3233 = vrcp.pop %v3186
        %v3234 = vmul.f32 %v3186, %v3233
        %v3235 = vsub.f32 1.0, %v3234
        %v3236 = vmul.f32 %v3233, %v3235
        %v3237 = vadd.f32 %v3233, %v3236
        %vm3238 = vweird.f32 %v3186
        %vm3239 = vweird.f32 %v3233
        %vm3240 = vmor %vm3238, %vm3239
        %v3241 = vsel %vm3240, %v3233, %v3237
        %v3242 = vand.u32 2147483647, %v3186
        %vm3243 = vcmp.eq.f32.partialorder %v3242, 8.507059e+37
        %v3244 = vand.u32 %v3186, 2147483648
        %v3245 = vor.u32 1.1754944e-38, %v3244
        %v3246 = vsel %vm3243, %v3245, %v3241
        %v3247 = vmul.f32 %v3123, %v3246
        %v3248 = vrcp.pop %v3189
        %v3249 = vmul.f32 %v3189, %v3248
        %v3250 = vsub.f32 1.0, %v3249
        %v3251 = vmul.f32 %v3248, %v3250
        %v3252 = vadd.f32 %v3248, %v3251
        %vm3253 = vweird.f32 %v3189
        %vm3254 = vweird.f32 %v3248
        %vm3255 = vmor %vm3253, %vm3254
        %v3256 = vsel %vm3255, %v3248, %v3252
        %v3257 = vand.u32 2147483647, %v3189
        %vm3258 = vcmp.eq.f32.partialorder %v3257, 8.507059e+37
        %v3259 = vand.u32 %v3189, 2147483648
        %v3260 = vor.u32 1.1754944e-38, %v3259
        %v3261 = vsel %vm3258, %v3260, %v3256
        %v3262 = vmul.f32 %v3126, %v3261
        %v3263 = vrcp.pop %v3192
        %v3264 = vmul.f32 %v3192, %v3263
        %v3265 = vsub.f32 1.0, %v3264
        %v3266 = vmul.f32 %v3263, %v3265
        %v3267 = vadd.f32 %v3263, %v3266
        %vm3268 = vweird.f32 %v3192
        %vm3269 = vweird.f32 %v3263
        %vm3270 = vmor %vm3268, %vm3269
        %v3271 = vsel %vm3270, %v3263, %v3267
        %v3272 = vand.u32 2147483647, %v3192
        %vm3273 = vcmp.eq.f32.partialorder %v3272, 8.507059e+37
        %v3274 = vand.u32 %v3192, 2147483648
        %v3275 = vor.u32 1.1754944e-38, %v3274
        %v3276 = vsel %vm3273, %v3275, %v3271
        %v3277 = vmul.f32 %v3129, %v3276
        %v3278 = vrcp.pop %v3195
        %v3279 = vmul.f32 %v3195, %v3278
        %v3280 = vsub.f32 1.0, %v3279
        %v3281 = vmul.f32 %v3278, %v3280
        %v3282 = vadd.f32 %v3278, %v3281
        %vm3283 = vweird.f32 %v3195
        %vm3284 = vweird.f32 %v3278
        %vm3285 = vmor %vm3283, %vm3284
        %v3286 = vsel %vm3285, %v3278, %v3282
        %v3287 = vand.u32 2147483647, %v3195
        %vm3288 = vcmp.eq.f32.partialorder %v3287, 8.507059e+37
        %v3289 = vand.u32 %v3195, 2147483648
        %v3290 = vor.u32 1.1754944e-38, %v3289
        %v3291 = vsel %vm3288, %v3290, %v3286
        %v3292 = vmul.f32 %v3132, %v3291
        %v3293 = vrcp.pop %v3198
        %v3294 = vmul.f32 %v3198, %v3293
        %v3295 = vsub.f32 1.0, %v3294
        %v3296 = vmul.f32 %v3293, %v3295
        %v3297 = vadd.f32 %v3293, %v3296
        %vm3298 = vweird.f32 %v3198
        %vm3299 = vweird.f32 %v3293
        %vm3300 = vmor %vm3298, %vm3299
        %v3301 = vsel %vm3300, %v3293, %v3297
        %v3302 = vand.u32 2147483647, %v3198
        %vm3303 = vcmp.eq.f32.partialorder %v3302, 8.507059e+37
        %v3304 = vand.u32 %v3198, 2147483648
        %v3305 = vor.u32 1.1754944e-38, %v3304
        %v3306 = vsel %vm3303, %v3305, %v3301
        %v3307 = vmul.f32 %v3135, %v3306
        %v3308 = vrcp.pop %v3201
        %v3309 = vmul.f32 %v3201, %v3308
        %v3310 = vsub.f32 1.0, %v3309
        %v3311 = vmul.f32 %v3308, %v3310
        %v3312 = vadd.f32 %v3308, %v3311
        %vm3313 = vweird.f32 %v3201
        %vm3314 = vweird.f32 %v3308
        %vm3315 = vmor %vm3313, %vm3314
        %v3316 = vsel %vm3315, %v3308, %v3312
        %v3317 = vand.u32 2147483647, %v3201
        %vm3318 = vcmp.eq.f32.partialorder %v3317, 8.507059e+37
        %v3319 = vand.u32 %v3201, 2147483648
        %v3320 = vor.u32 1.1754944e-38, %v3319
        %v3321 = vsel %vm3318, %v3320, %v3316
        %v3322 = vmul.f32 %v3138, %v3321
        %3323 = vmatpush.msra.mxu0 0.0
        %3324 = vmatpush.msra.mxu0 0.0
        %3325 = vmatpush.msra.mxu0 0.0
        %3326 = vmatpush.msra.mxu0 0.0
        %3327 = vmatpush.msra.mxu0 0.0
        %3328 = vmatpush.msra.mxu0 0.0
        %3329 = vmatpush.msra.mxu0 0.0
        %3330 = vmatpush.msra.mxu0 0.0
        %3331 = vmatpush.msra.mxu0 0.0
        %3332 = vmatpush.msra.mxu0 0.0
        %3333 = vmatpush.msra.mxu0 0.0
        %3334 = vmatpush.msra.mxu0 0.0
        %3335 = vmatpush.msra.mxu0 0.0
        %3336 = vmatpush.msra.mxu0 0.0
        %3337 = vmatpush.msra.mxu0 0.0
        %3338 = vmatpush.msra.mxu0 %v2958
        %3339 = vmatmul.f32.gmra.mxu0 %v1594
        %v3340 = vpop.f32.mrf.mxu0
        %v3341 = vadd.f32 0.0, %v3340
        %3342 = vmatmul.f32.gmra.mxu0 %v1597
        %v3343 = vpop.f32.mrf.mxu0
        %v3344 = vadd.f32 0.0, %v3343
        %3345 = vmatmul.f32.gmra.mxu0 %v1600
        %v3346 = vpop.f32.mrf.mxu0
        %v3347 = vadd.f32 0.0, %v3346
        %3348 = vmatmul.f32.gmra.mxu0 %v1603
        %v3349 = vpop.f32.mrf.mxu0
        %v3350 = vadd.f32 0.0, %v3349
        %3351 = vmatmul.f32.gmra.mxu0 %v1606
        %v3352 = vpop.f32.mrf.mxu0
        %v3353 = vadd.f32 0.0, %v3352
        %3354 = vmatmul.f32.gmra.mxu0 %v1609
        %v3355 = vpop.f32.mrf.mxu0
        %v3356 = vadd.f32 0.0, %v3355
        %3357 = vmatmul.f32.gmra.mxu0 %v1612
        %v3358 = vpop.f32.mrf.mxu0
        %v3359 = vadd.f32 0.0, %v3358
        %3360 = vmatmul.f32.gmra.mxu0 %v1615
        %v3361 = vpop.f32.mrf.mxu0
        %v3362 = vadd.f32 0.0, %v3361
        %3363 = vdwg.mxu0
        %3364 = vmatpush.msra.mxu0 0.0
        %3365 = vmatpush.msra.mxu0 0.0
        %3366 = vmatpush.msra.mxu0 0.0
        %3367 = vmatpush.msra.mxu0 0.0
        %3368 = vmatpush.msra.mxu0 0.0
        %3369 = vmatpush.msra.mxu0 0.0
        %3370 = vmatpush.msra.mxu0 0.0
        %3371 = vmatpush.msra.mxu0 0.0
        %3372 = vmatpush.msra.mxu0 0.0
        %3373 = vmatpush.msra.mxu0 0.0
        %3374 = vmatpush.msra.mxu0 0.0
        %3375 = vmatpush.msra.mxu0 0.0
        %3376 = vmatpush.msra.mxu0 0.0
        %3377 = vmatpush.msra.mxu0 0.0
        %3378 = vmatpush.msra.mxu0 0.0
        %3379 = vmatpush.msra.mxu0 %v2904
        %3380 = vmatmul.f32.gmra.mxu0 %v1594
        %v3381 = vpop.f32.mrf.mxu0
        %v3382 = vadd.f32 0.0, %v3381
        %3383 = vmatmul.f32.gmra.mxu0 %v1597
        %v3384 = vpop.f32.mrf.mxu0
        %v3385 = vadd.f32 0.0, %v3384
        %3386 = vmatmul.f32.gmra.mxu0 %v1600
        %v3387 = vpop.f32.mrf.mxu0
        %v3388 = vadd.f32 0.0, %v3387
        %3389 = vmatmul.f32.gmra.mxu0 %v1603
        %v3390 = vpop.f32.mrf.mxu0
        %v3391 = vadd.f32 0.0, %v3390
        %3392 = vmatmul.f32.gmra.mxu0 %v1606
        %v3393 = vpop.f32.mrf.mxu0
        %v3394 = vadd.f32 0.0, %v3393
        %3395 = vmatmul.f32.gmra.mxu0 %v1609
        %v3396 = vpop.f32.mrf.mxu0
        %v3397 = vadd.f32 0.0, %v3396
        %3398 = vmatmul.f32.gmra.mxu0 %v1612
        %v3399 = vpop.f32.mrf.mxu0
        %v3400 = vadd.f32 0.0, %v3399
        %3401 = vmatmul.f32.gmra.mxu0 %v1615
        %v3402 = vpop.f32.mrf.mxu0
        %v3403 = vadd.f32 0.0, %v3402
        %3404 = vdwg.mxu0
        %v3405 = vmul.f32 %v628, %v3382
        %v3406 = vmul.f32 %v629, %v3385
        %v3407 = vmul.f32 %v630, %v3388
        %v3408 = vmul.f32 %v631, %v3391
        %v3409 = vmul.f32 %v632, %v3394
        %v3410 = vmul.f32 %v633, %v3397
        %v3411 = vmul.f32 %v634, %v3400
        %v3412 = vmul.f32 %v635, %v3403
        %v3413 = vadd.f32 %v3341, %v3405
        %v3414 = vadd.f32 %v3344, %v3406
        %v3415 = vadd.f32 %v3347, %v3407
        %v3416 = vadd.f32 %v3350, %v3408
        %v3417 = vadd.f32 %v3353, %v3409
        %v3418 = vadd.f32 %v3356, %v3410
        %v3419 = vadd.f32 %v3359, %v3411
        %v3420 = vadd.f32 %v3362, %v3412
        %3429 = vrot.lane.b32.xlu0 %v3382, 1
        %v3430 = vpop.permute.xlu0 %3429
        %3431 = vrot.lane.b32.xlu0 %v3385, 1
        %v3432 = vpop.permute.xlu0 %3431
        %3433 = vrot.lane.b32.xlu0 %v3388, 1
        %v3434 = vpop.permute.xlu0 %3433
        %3435 = vrot.lane.b32.xlu0 %v3391, 1
        %v3436 = vpop.permute.xlu0 %3435
        %3437 = vrot.lane.b32.xlu0 %v3394, 1
        %v3438 = vpop.permute.xlu0 %3437
        %3439 = vrot.lane.b32.xlu0 %v3397, 1
        %v3440 = vpop.permute.xlu0 %3439
        %3441 = vrot.lane.b32.xlu0 %v3400, 1
        %v3442 = vpop.permute.xlu0 %3441
        %3443 = vrot.lane.b32.xlu0 %v3403, 1
        %v3444 = vpop.permute.xlu0 %3443
        %v3453 = vmul.f32 %v628, %v3430
        %v3454 = vmul.f32 %v629, %v3432
        %v3455 = vmul.f32 %v630, %v3434
        %v3456 = vmul.f32 %v631, %v3436
        %v3457 = vmul.f32 %v632, %v3438
        %v3458 = vmul.f32 %v633, %v3440
        %v3459 = vmul.f32 %v634, %v3442
        %v3460 = vmul.f32 %v635, %v3444
        %3469 = vrot.lane.b32.xlu0 %v3453, 127
        %v3470 = vpop.permute.xlu0 %3469
        %3471 = vrot.lane.b32.xlu0 %v3454, 127
        %v3472 = vpop.permute.xlu0 %3471
        %3473 = vrot.lane.b32.xlu0 %v3455, 127
        %v3474 = vpop.permute.xlu0 %3473
        %3475 = vrot.lane.b32.xlu0 %v3456, 127
        %v3476 = vpop.permute.xlu0 %3475
        %3477 = vrot.lane.b32.xlu0 %v3457, 127
        %v3478 = vpop.permute.xlu0 %3477
        %3479 = vrot.lane.b32.xlu0 %v3458, 127
        %v3480 = vpop.permute.xlu0 %3479
        %3481 = vrot.lane.b32.xlu0 %v3459, 127
        %v3482 = vpop.permute.xlu0 %3481
        %3483 = vrot.lane.b32.xlu0 %v3460, 127
        %v3484 = vpop.permute.xlu0 %3483
        %v3493 = vadd.f32 %v3341, %v3470
        %v3494 = vadd.f32 %v3344, %v3472
        %v3495 = vadd.f32 %v3347, %v3474
        %v3496 = vadd.f32 %v3350, %v3476
        %v3497 = vadd.f32 %v3353, %v3478
        %v3498 = vadd.f32 %v3356, %v3480
        %v3499 = vadd.f32 %v3359, %v3482
        %v3500 = vadd.f32 %v3362, %v3484
        %3502 = vset.pattern.permute.xlu0 0
        %3503 = vperm.xlu0 %3502, %v3493
        %v3504 = vpop.permute.xlu0 %3503
        %3507 = vset.pattern.permute.xlu0 0
        %3508 = vperm.xlu0 %3507, %v3494
        %v3509 = vpop.permute.xlu0 %3508
        %3512 = vset.pattern.permute.xlu0 0
        %3513 = vperm.xlu0 %3512, %v3495
        %v3514 = vpop.permute.xlu0 %3513
        %3517 = vset.pattern.permute.xlu0 0
        %3518 = vperm.xlu0 %3517, %v3496
        %v3519 = vpop.permute.xlu0 %3518
        %3522 = vset.pattern.permute.xlu0 0
        %3523 = vperm.xlu0 %3522, %v3497
        %v3524 = vpop.permute.xlu0 %3523
        %3527 = vset.pattern.permute.xlu0 0
        %3528 = vperm.xlu0 %3527, %v3498
        %v3529 = vpop.permute.xlu0 %3528
        %3532 = vset.pattern.permute.xlu0 0
        %3533 = vperm.xlu0 %3532, %v3499
        %v3534 = vpop.permute.xlu0 %3533
        %3537 = vset.pattern.permute.xlu0 0
        %3538 = vperm.xlu0 %3537, %v3500
        %v3539 = vpop.permute.xlu0 %3538
        %v3541 = vmul.f32 %v3504, %v1999
        %v3542 = vmul.f32 %v3509, %v1999
        %v3543 = vmul.f32 %v3514, %v1999
        %v3544 = vmul.f32 %v3519, %v1999
        %v3545 = vmul.f32 %v3524, %v1999
        %v3546 = vmul.f32 %v3529, %v1999
        %v3547 = vmul.f32 %v3534, %v1999
        %v3548 = vmul.f32 %v3539, %v1999
        %3550 = vset.pattern.permute.xlu0 0
        %3551 = vperm.xlu0 %3550, %v3413
        %v3552 = vpop.permute.xlu0 %3551
        %3555 = vset.pattern.permute.xlu0 0
        %3556 = vperm.xlu0 %3555, %v3414
        %v3557 = vpop.permute.xlu0 %3556
        %3560 = vset.pattern.permute.xlu0 0
        %3561 = vperm.xlu0 %3560, %v3415
        %v3562 = vpop.permute.xlu0 %3561
        %3565 = vset.pattern.permute.xlu0 0
        %3566 = vperm.xlu0 %3565, %v3416
        %v3567 = vpop.permute.xlu0 %3566
        %3570 = vset.pattern.permute.xlu0 0
        %3571 = vperm.xlu0 %3570, %v3417
        %v3572 = vpop.permute.xlu0 %3571
        %3575 = vset.pattern.permute.xlu0 0
        %3576 = vperm.xlu0 %3575, %v3418
        %v3577 = vpop.permute.xlu0 %3576
        %3580 = vset.pattern.permute.xlu0 0
        %3581 = vperm.xlu0 %3580, %v3419
        %v3582 = vpop.permute.xlu0 %3581
        %3585 = vset.pattern.permute.xlu0 0
        %3586 = vperm.xlu0 %3585, %v3420
        %v3587 = vpop.permute.xlu0 %3586
        %v3589 = vmul.f32 %v3552, %v2048
        %v3590 = vmul.f32 %v3557, %v2048
        %v3591 = vmul.f32 %v3562, %v2048
        %v3592 = vmul.f32 %v3567, %v2048
        %v3593 = vmul.f32 %v3572, %v2048
        %v3594 = vmul.f32 %v3577, %v2048
        %v3595 = vmul.f32 %v3582, %v2048
        %v3596 = vmul.f32 %v3587, %v2048
        %v3597 = vadd.f32 %v3541, %v3589
        %v3598 = vadd.f32 %v3542, %v3590
        %v3599 = vadd.f32 %v3543, %v3591
        %v3600 = vadd.f32 %v3544, %v3592
        %v3601 = vadd.f32 %v3545, %v3593
        %v3602 = vadd.f32 %v3546, %v3594
        %v3603 = vadd.f32 %v3547, %v3595
        %v3604 = vadd.f32 %v3548, %v3596
        %3606 = vset.pattern.permute.xlu0 0
        %3607 = vperm.xlu0 %3606, %v3217
        %v3608 = vpop.permute.xlu0 %3607
        %3611 = vset.pattern.permute.xlu0 0
        %3612 = vperm.xlu0 %3611, %v3232
        %v3613 = vpop.permute.xlu0 %3612
        %3616 = vset.pattern.permute.xlu0 0
        %3617 = vperm.xlu0 %3616, %v3247
        %v3618 = vpop.permute.xlu0 %3617
        %3621 = vset.pattern.permute.xlu0 0
        %3622 = vperm.xlu0 %3621, %v3262
        %v3623 = vpop.permute.xlu0 %3622
        %3626 = vset.pattern.permute.xlu0 0
        %3627 = vperm.xlu0 %3626, %v3277
        %v3628 = vpop.permute.xlu0 %3627
        %3631 = vset.pattern.permute.xlu0 0
        %3632 = vperm.xlu0 %3631, %v3292
        %v3633 = vpop.permute.xlu0 %3632
        %3636 = vset.pattern.permute.xlu0 0
        %3637 = vperm.xlu0 %3636, %v3307
        %v3638 = vpop.permute.xlu0 %3637
        %3641 = vset.pattern.permute.xlu0 0
        %3642 = vperm.xlu0 %3641, %v3322
        %v3643 = vpop.permute.xlu0 %3642
        %v3645 = vmul.f32 %v3608, %v2105
        %v3646 = vmul.f32 %v3613, %v2105
        %v3647 = vmul.f32 %v3618, %v2105
        %v3648 = vmul.f32 %v3623, %v2105
        %v3649 = vmul.f32 %v3628, %v2105
        %v3650 = vmul.f32 %v3633, %v2105
        %v3651 = vmul.f32 %v3638, %v2105
        %v3652 = vmul.f32 %v3643, %v2105
        %v3653 = vadd.f32 %v3597, %v3645
        %v3654 = vadd.f32 %v3598, %v3646
        %v3655 = vadd.f32 %v3599, %v3647
        %v3656 = vadd.f32 %v3600, %v3648
        %v3657 = vadd.f32 %v3601, %v3649
        %v3658 = vadd.f32 %v3602, %v3650
        %v3659 = vadd.f32 %v3603, %v3651
        %v3660 = vadd.f32 %v3604, %v3652
        %vm3661 = vcmp.ge.f32.partialorder %v3653, 0.0
        %vm3662 = vcmp.ge.f32.partialorder %v3654, 0.0
        %vm3663 = vcmp.ge.f32.partialorder %v3655, 0.0
        %vm3664 = vcmp.ge.f32.partialorder %v3656, 0.0
        %vm3665 = vcmp.ge.f32.partialorder %v3657, 0.0
        %vm3666 = vcmp.ge.f32.partialorder %v3658, 0.0
        %vm3667 = vcmp.ge.f32.partialorder %v3659, 0.0
        %vm3668 = vcmp.ge.f32.partialorder %v3660, 0.0
        %v3669 = vmul.f32 %v3653, 0.01
        %v3670 = vmul.f32 %v3654, 0.01
        %v3671 = vmul.f32 %v3655, 0.01
        %v3672 = vmul.f32 %v3656, 0.01
        %v3673 = vmul.f32 %v3657, 0.01
        %v3674 = vmul.f32 %v3658, 0.01
        %v3675 = vmul.f32 %v3659, 0.01
        %v3676 = vmul.f32 %v3660, 0.01
        %v3677 = vsel %vm3661, %v3653, %v3669
        %v3678 = vsel %vm3662, %v3654, %v3670
        %v3679 = vsel %vm3663, %v3655, %v3671
        %v3680 = vsel %vm3664, %v3656, %v3672
        %v3681 = vsel %vm3665, %v3657, %v3673
        %v3682 = vsel %vm3666, %v3658, %v3674
        %v3683 = vsel %vm3667, %v3659, %v3675
        %v3684 = vsel %vm3668, %v3660, %v3676
        %v3685 = vpack.c.bf16 %v2381, %v2381
        %v3686 = vpack.c.bf16 %v2401, %v2401
        %3687 = vmatpush.bf16.msra.mxu0 %v2251
        %3688 = vmatpush.bf16.msra.mxu0 %v2250
        %3689 = vmatpush.bf16.msra.mxu0 %v2249
        %3690 = vmatpush.bf16.msra.mxu0 %v2248
        %3691 = vmatpush.bf16.msra.mxu0 %v2247
        %3692 = vmatpush.bf16.msra.mxu0 %v2246
        %3693 = vmatpush.bf16.msra.mxu0 %v2245
        %3694 = vmatpush.bf16.msra.mxu0 %v2244
        %3695 = vmatmul.bf16.gmra.mxu0 %v3685
        %v3696 = vpop.f32.mrf.mxu0
        %v3697 = vadd.f32 0.0, %v3696
        %v3698 = vpop.f32.mrf.mxu0
        %3699 = vdwg.mxu0
        %3700 = vmatpush.bf16.msra.mxu0 %v2259
        %3701 = vmatpush.bf16.msra.mxu0 %v2258
        %3702 = vmatpush.bf16.msra.mxu0 %v2257
        %3703 = vmatpush.bf16.msra.mxu0 %v2256
        %3704 = vmatpush.bf16.msra.mxu0 %v2255
        %3705 = vmatpush.bf16.msra.mxu0 %v2254
        %3706 = vmatpush.bf16.msra.mxu0 %v2253
        %3707 = vmatpush.bf16.msra.mxu0 %v2252
        %3708 = vmatmul.bf16.gmra.mxu0 %v3686
        %v3709 = vpop.f32.mrf.mxu0
        %v3710 = vadd.f32 %v3697, %v3709
        %v3711 = vpop.f32.mrf.mxu0
        %3712 = vdwg.mxu0
        %v3714 = vsel %vm863, %v3710, 0
        %3716 = vmatpush.msra.mxu0 0.0
        %3717 = vmatpush.msra.mxu0 0.0
        %3718 = vmatpush.msra.mxu0 0.0
        %3719 = vmatpush.msra.mxu0 0.0
        %3720 = vmatpush.msra.mxu0 0.0
        %3721 = vmatpush.msra.mxu0 0.0
        %3722 = vmatpush.msra.mxu0 0.0
        %3723 = vmatpush.msra.mxu0 0.0
        %3724 = vmatpush.msra.mxu0 0.0
        %3725 = vmatpush.msra.mxu0 0.0
        %3726 = vmatpush.msra.mxu0 0.0
        %3727 = vmatpush.msra.mxu0 0.0
        %3728 = vmatpush.msra.mxu0 0.0
        %3729 = vmatpush.msra.mxu0 0.0
        %3730 = vmatpush.msra.mxu0 0.0
        %3731 = vmatpush.msra.mxu0 %v3714
        %3732 = vmatmul.f32.gmra.mxu0 %v1594
        %v3733 = vpop.f32.mrf.mxu0
        %v3734 = vadd.f32 0.0, %v3733
        %3735 = vmatmul.f32.gmra.mxu0 %v1597
        %v3736 = vpop.f32.mrf.mxu0
        %v3737 = vadd.f32 0.0, %v3736
        %3738 = vmatmul.f32.gmra.mxu0 %v1600
        %v3739 = vpop.f32.mrf.mxu0
        %v3740 = vadd.f32 0.0, %v3739
        %3741 = vmatmul.f32.gmra.mxu0 %v1603
        %v3742 = vpop.f32.mrf.mxu0
        %v3743 = vadd.f32 0.0, %v3742
        %3744 = vmatmul.f32.gmra.mxu0 %v1606
        %v3745 = vpop.f32.mrf.mxu0
        %v3746 = vadd.f32 0.0, %v3745
        %3747 = vmatmul.f32.gmra.mxu0 %v1609
        %v3748 = vpop.f32.mrf.mxu0
        %v3749 = vadd.f32 0.0, %v3748
        %3750 = vmatmul.f32.gmra.mxu0 %v1612
        %v3751 = vpop.f32.mrf.mxu0
        %v3752 = vadd.f32 0.0, %v3751
        %3753 = vmatmul.f32.gmra.mxu0 %v1615
        %v3754 = vpop.f32.mrf.mxu0
        %v3755 = vadd.f32 0.0, %v3754
        %3756 = vdwg.mxu0
        %v3757 = vpack.c.bf16 %v2139, %v2138
        %v3758 = vpack.c.bf16 %v2141, %v2140
        %v3759 = vpack.c.bf16 %v2143, %v2142
        %v3760 = vpack.c.bf16 %v2145, %v2144
        %v3761 = vpack.c.bf16 %v3678, %v3677
        %v3762 = vpack.c.bf16 %v3680, %v3679
        %v3763 = vpack.c.bf16 %v3682, %v3681
        %v3764 = vpack.c.bf16 %v3684, %v3683
        %v3765 = vld [vmem:[%s14] sm:$0xf]
        %v3766 = vld [vmem:[%s14 + $0x4] sm:$0xf]
        %v3767 = vld [vmem:[%s14 + $0x8] sm:$0xf]
        %v3768 = vld [vmem:[%s14 + $0xc] sm:$0xf]
        %v3769 = vld [vmem:[%s14 + $0x10] sm:$0xf]
        %v3770 = vld [vmem:[%s14 + $0x14] sm:$0xf]
        %v3771 = vld [vmem:[%s14 + $0x18] sm:$0xf]
        %v3772 = vld [vmem:[%s14 + $0x1c] sm:$0xf]
        %v3781 = vunpack.c.l.b16 %v3765
        %v3782 = vunpack.c.l.b16 %v3766
        %v3783 = vunpack.c.l.b16 %v3767
        %v3784 = vunpack.c.l.b16 %v3768
        %v3785 = vunpack.c.l.b16 %v3769
        %v3786 = vunpack.c.l.b16 %v3770
        %v3787 = vunpack.c.l.b16 %v3771
        %v3788 = vunpack.c.l.b16 %v3772
        %v3789 = vpack.c.b16 %v3782, %v3781
        %v3790 = vpack.c.b16 %v3784, %v3783
        %v3791 = vpack.c.b16 %v3786, %v3785
        %v3792 = vpack.c.b16 %v3788, %v3787
        %v3798 = vsel %vm654, %v3757, 0
        %v3801 = vsel %vm654, %v3758, 0
        %v3804 = vsel %vm654, %v3759, 0
        %v3807 = vsel %vm654, %v3760, 0
        %v3810 = vsel %vm654, %v3761, 0
        %v3813 = vsel %vm654, %v3762, 0
        %v3816 = vsel %vm654, %v3763, 0
        %v3819 = vsel %vm654, %v3764, 0
        %3821 = vmatpush.bf16.msra.mxu0 0
        %3822 = vmatpush.bf16.msra.mxu0 0
        %3823 = vmatpush.bf16.msra.mxu0 0
        %3824 = vmatpush.bf16.msra.mxu0 0
        %3825 = vmatpush.bf16.msra.mxu0 %v3792
        %3826 = vmatpush.bf16.msra.mxu0 %v3791
        %3827 = vmatpush.bf16.msra.mxu0 %v3790
        %3828 = vmatpush.bf16.msra.mxu0 %v3789
        %3829 = vmatmul.bf16.gmra.mxu0 %v3798
        %v3830 = vpop.f32.mrf.mxu0
        %v3831 = vadd.f32 0.0, %v3830
        %v3832 = vpop.f32.mrf.mxu0
        %v3833 = vadd.f32 0.0, %v3832
        %3834 = vmatmul.bf16.gmra.mxu0 %v3801
        %v3835 = vpop.f32.mrf.mxu0
        %v3836 = vadd.f32 0.0, %v3835
        %v3837 = vpop.f32.mrf.mxu0
        %v3838 = vadd.f32 0.0, %v3837
        %3839 = vmatmul.bf16.gmra.mxu0 %v3804
        %v3840 = vpop.f32.mrf.mxu0
        %v3841 = vadd.f32 0.0, %v3840
        %v3842 = vpop.f32.mrf.mxu0
        %v3843 = vadd.f32 0.0, %v3842
        %3844 = vmatmul.bf16.gmra.mxu0 %v3807
        %v3845 = vpop.f32.mrf.mxu0
        %v3846 = vadd.f32 0.0, %v3845
        %v3847 = vpop.f32.mrf.mxu0
        %v3848 = vadd.f32 0.0, %v3847
        %3849 = vmatmul.bf16.gmra.mxu0 %v3810
        %v3850 = vpop.f32.mrf.mxu0
        %v3851 = vadd.f32 0.0, %v3850
        %v3852 = vpop.f32.mrf.mxu0
        %v3853 = vadd.f32 0.0, %v3852
        %3854 = vmatmul.bf16.gmra.mxu0 %v3813
        %v3855 = vpop.f32.mrf.mxu0
        %v3856 = vadd.f32 0.0, %v3855
        %v3857 = vpop.f32.mrf.mxu0
        %v3858 = vadd.f32 0.0, %v3857
        %3859 = vmatmul.bf16.gmra.mxu0 %v3816
        %v3860 = vpop.f32.mrf.mxu0
        %v3861 = vadd.f32 0.0, %v3860
        %v3862 = vpop.f32.mrf.mxu0
        %v3863 = vadd.f32 0.0, %v3862
        %3864 = vmatmul.bf16.gmra.mxu0 %v3819
        %v3865 = vpop.f32.mrf.mxu0
        %v3866 = vadd.f32 0.0, %v3865
        %v3867 = vpop.f32.mrf.mxu0
        %v3868 = vadd.f32 0.0, %v3867
        %3869 = vdwg.mxu0
        %v3870 = vmax.f32 %v3831, 0.0
        %v3871 = vmax.f32 %v3833, 0.0
        %v3872 = vmax.f32 %v3836, 0.0
        %v3873 = vmax.f32 %v3838, 0.0
        %v3874 = vmax.f32 %v3841, 0.0
        %v3875 = vmax.f32 %v3843, 0.0
        %v3876 = vmax.f32 %v3846, 0.0
        %v3877 = vmax.f32 %v3848, 0.0
        %v3878 = vmax.f32 %v3851, 0.0
        %v3879 = vmax.f32 %v3853, 0.0
        %v3880 = vmax.f32 %v3856, 0.0
        %v3881 = vmax.f32 %v3858, 0.0
        %v3882 = vmax.f32 %v3861, 0.0
        %v3883 = vmax.f32 %v3863, 0.0
        %v3884 = vmax.f32 %v3866, 0.0
        %v3885 = vmax.f32 %v3868, 0.0
        %v3886 = vpack.c.bf16 %v3871, %v3870
        %v3887 = vpack.c.bf16 %v3873, %v3872
        %v3888 = vpack.c.bf16 %v3875, %v3874
        %v3889 = vpack.c.bf16 %v3877, %v3876
        %v3890 = vpack.c.bf16 %v3879, %v3878
        %v3891 = vpack.c.bf16 %v3881, %v3880
        %v3892 = vpack.c.bf16 %v3883, %v3882
        %v3893 = vpack.c.bf16 %v3885, %v3884
        %v3894 = vld [vmem:[%s16] sm:$0xf]
        %v3895 = vld [vmem:[%s16 + $0x4] sm:$0xf]
        %v3896 = vld [vmem:[%s16 + $0x8] sm:$0xf]
        %v3897 = vld [vmem:[%s16 + $0xc] sm:$0xf]
        %v3898 = vld [vmem:[%s16 + $0x10] sm:$0xf]
        %v3899 = vld [vmem:[%s16 + $0x14] sm:$0xf]
        %v3900 = vld [vmem:[%s16 + $0x18] sm:$0xf]
        %v3901 = vld [vmem:[%s16 + $0x1c] sm:$0xf]
        %v3902 = vld [vmem:[%s16 + $0x20] sm:$0xf]
        %v3903 = vld [vmem:[%s16 + $0x24] sm:$0xf]
        %v3904 = vld [vmem:[%s16 + $0x28] sm:$0xf]
        %v3905 = vld [vmem:[%s16 + $0x2c] sm:$0xf]
        %v3906 = vld [vmem:[%s16 + $0x30] sm:$0xf]
        %v3907 = vld [vmem:[%s16 + $0x34] sm:$0xf]
        %v3908 = vld [vmem:[%s16 + $0x38] sm:$0xf]
        %v3909 = vld [vmem:[%s16 + $0x3c] sm:$0xf]
        %v3926 = vunpack.c.l.b16 %v3894
        %v3927 = vunpack.c.l.b16 %v3895
        %v3928 = vunpack.c.l.b16 %v3896
        %v3929 = vunpack.c.l.b16 %v3897
        %v3930 = vunpack.c.l.b16 %v3898
        %v3931 = vunpack.c.l.b16 %v3899
        %v3932 = vunpack.c.l.b16 %v3900
        %v3933 = vunpack.c.l.b16 %v3901
        %v3934 = vunpack.c.l.b16 %v3902
        %v3935 = vunpack.c.l.b16 %v3903
        %v3936 = vunpack.c.l.b16 %v3904
        %v3937 = vunpack.c.l.b16 %v3905
        %v3938 = vunpack.c.l.b16 %v3906
        %v3939 = vunpack.c.l.b16 %v3907
        %v3940 = vunpack.c.l.b16 %v3908
        %v3941 = vunpack.c.l.b16 %v3909
        %v3942 = vpack.c.b16 %v3927, %v3926
        %v3943 = vpack.c.b16 %v3929, %v3928
        %v3944 = vpack.c.b16 %v3931, %v3930
        %v3945 = vpack.c.b16 %v3933, %v3932
        %v3946 = vpack.c.b16 %v3935, %v3934
        %v3947 = vpack.c.b16 %v3937, %v3936
        %v3948 = vpack.c.b16 %v3939, %v3938
        %v3949 = vpack.c.b16 %v3941, %v3940
        %3958 = vmatpush.bf16.msra.mxu0 %v3949
        %3959 = vmatpush.bf16.msra.mxu0 %v3948
        %3960 = vmatpush.bf16.msra.mxu0 %v3947
        %3961 = vmatpush.bf16.msra.mxu0 %v3946
        %3962 = vmatpush.bf16.msra.mxu0 %v3945
        %3963 = vmatpush.bf16.msra.mxu0 %v3944
        %3964 = vmatpush.bf16.msra.mxu0 %v3943
        %3965 = vmatpush.bf16.msra.mxu0 %v3942
        %3966 = vmatmul.bf16.gmra.mxu0 %v3886
        %v3967 = vpop.f32.mrf.mxu0
        %v3968 = vadd.f32 0.0, %v3967
        %v3969 = vpop.f32.mrf.mxu0
        %v3970 = vadd.f32 0.0, %v3969
        %3971 = vmatmul.bf16.gmra.mxu0 %v3887
        %v3972 = vpop.f32.mrf.mxu0
        %v3973 = vadd.f32 0.0, %v3972
        %v3974 = vpop.f32.mrf.mxu0
        %v3975 = vadd.f32 0.0, %v3974
        %3976 = vmatmul.bf16.gmra.mxu0 %v3888
        %v3977 = vpop.f32.mrf.mxu0
        %v3978 = vadd.f32 0.0, %v3977
        %v3979 = vpop.f32.mrf.mxu0
        %v3980 = vadd.f32 0.0, %v3979
        %3981 = vmatmul.bf16.gmra.mxu0 %v3889
        %v3982 = vpop.f32.mrf.mxu0
        %v3983 = vadd.f32 0.0, %v3982
        %v3984 = vpop.f32.mrf.mxu0
        %v3985 = vadd.f32 0.0, %v3984
        %3986 = vmatmul.bf16.gmra.mxu0 %v3890
        %v3987 = vpop.f32.mrf.mxu0
        %v3988 = vadd.f32 0.0, %v3987
        %v3989 = vpop.f32.mrf.mxu0
        %v3990 = vadd.f32 0.0, %v3989
        %3991 = vmatmul.bf16.gmra.mxu0 %v3891
        %v3992 = vpop.f32.mrf.mxu0
        %v3993 = vadd.f32 0.0, %v3992
        %v3994 = vpop.f32.mrf.mxu0
        %v3995 = vadd.f32 0.0, %v3994
        %3996 = vmatmul.bf16.gmra.mxu0 %v3892
        %v3997 = vpop.f32.mrf.mxu0
        %v3998 = vadd.f32 0.0, %v3997
        %v3999 = vpop.f32.mrf.mxu0
        %v4000 = vadd.f32 0.0, %v3999
        %4001 = vmatmul.bf16.gmra.mxu0 %v3893
        %v4002 = vpop.f32.mrf.mxu0
        %v4003 = vadd.f32 0.0, %v4002
        %v4004 = vpop.f32.mrf.mxu0
        %v4005 = vadd.f32 0.0, %v4004
        %4006 = vdwg.mxu0
        %v4007 = vadd.f32 %v2323, %v3968
        %v4008 = vadd.f32 %v2326, %v3970
        %v4009 = vadd.f32 %v2329, %v3973
        %v4010 = vadd.f32 %v2332, %v3975
        %v4011 = vadd.f32 %v2335, %v3978
        %v4012 = vadd.f32 %v2338, %v3980
        %v4013 = vadd.f32 %v2341, %v3983
        %v4014 = vadd.f32 %v2344, %v3985
        %v4015 = vadd.f32 %v3734, %v3988
        %v4016 = vadd.f32 %v3737, %v3990
        %v4017 = vadd.f32 %v3740, %v3993
        %v4018 = vadd.f32 %v3743, %v3995
        %v4019 = vadd.f32 %v3746, %v3998
        %v4020 = vadd.f32 %v3749, %v4000
        %v4021 = vadd.f32 %v3752, %v4003
        %v4022 = vadd.f32 %v3755, %v4005
        %v4023 = vperm.slane %v636, 0
        %v4024 = vadd.f32 %v4007, %v4023
        %v4025 = vadd.f32 %v4008, %v4023
        %v4026 = vadd.f32 %v4009, %v4023
        %v4027 = vadd.f32 %v4010, %v4023
        %v4028 = vadd.f32 %v4011, %v4023
        %v4029 = vadd.f32 %v4012, %v4023
        %v4030 = vadd.f32 %v4013, %v4023
        %v4031 = vadd.f32 %v4014, %v4023
        %v4032 = vadd.f32 %v4015, %v4023
        %v4033 = vadd.f32 %v4016, %v4023
        %v4034 = vadd.f32 %v4017, %v4023
        %v4035 = vadd.f32 %v4018, %v4023
        %v4036 = vadd.f32 %v4019, %v4023
        %v4037 = vadd.f32 %v4020, %v4023
        %v4038 = vadd.f32 %v4021, %v4023
        %v4039 = vadd.f32 %v4022, %v4023
        %v4040 = vmax.f32 %v4024, 0.0
        %v4041 = vmax.f32 %v4025, 0.0
        %v4042 = vmax.f32 %v4026, 0.0
        %v4043 = vmax.f32 %v4027, 0.0
        %v4044 = vmax.f32 %v4028, 0.0
        %v4045 = vmax.f32 %v4029, 0.0
        %v4046 = vmax.f32 %v4030, 0.0
        %v4047 = vmax.f32 %v4031, 0.0
        %v4048 = vmax.f32 %v4032, 0.0
        %v4049 = vmax.f32 %v4033, 0.0
        %v4050 = vmax.f32 %v4034, 0.0
        %v4051 = vmax.f32 %v4035, 0.0
        %v4052 = vmax.f32 %v4036, 0.0
        %v4053 = vmax.f32 %v4037, 0.0
        %v4054 = vmax.f32 %v4038, 0.0
        %v4055 = vmax.f32 %v4039, 0.0
        %4056 = vmatpush.msra.mxu0 0.0
        %4057 = vmatpush.msra.mxu0 0.0
        %4058 = vmatpush.msra.mxu0 0.0
        %4059 = vmatpush.msra.mxu0 0.0
        %4060 = vmatpush.msra.mxu0 0.0
        %4061 = vmatpush.msra.mxu0 0.0
        %4062 = vmatpush.msra.mxu0 0.0
        %4063 = vmatpush.msra.mxu0 0.0
        %4064 = vmatpush.msra.mxu0 %v4047
        %4065 = vmatpush.msra.mxu0 %v4046
        %4066 = vmatpush.msra.mxu0 %v4045
        %4067 = vmatpush.msra.mxu0 %v4044
        %4068 = vmatpush.msra.mxu0 %v4043
        %4069 = vmatpush.msra.mxu0 %v4042
        %4070 = vmatpush.msra.mxu0 %v4041
        %4071 = vmatpush.msra.mxu0 %v4040
        %4072 = vmatmul.f32.gmra.mxu0 %v1563
        %v4073 = vpop.f32.mrf.mxu0
        %v4074 = vadd.f32 0.0, %v4073
        %4075 = vdwg.mxu0
        %4076 = vmatpush.msra.mxu0 0.0
        %4077 = vmatpush.msra.mxu0 0.0
        %4078 = vmatpush.msra.mxu0 0.0
        %4079 = vmatpush.msra.mxu0 0.0
        %4080 = vmatpush.msra.mxu0 0.0
        %4081 = vmatpush.msra.mxu0 0.0
        %4082 = vmatpush.msra.mxu0 0.0
        %4083 = vmatpush.msra.mxu0 0.0
        %4084 = vmatpush.msra.mxu0 %v4055
        %4085 = vmatpush.msra.mxu0 %v4054
        %4086 = vmatpush.msra.mxu0 %v4053
        %4087 = vmatpush.msra.mxu0 %v4052
        %4088 = vmatpush.msra.mxu0 %v4051
        %4089 = vmatpush.msra.mxu0 %v4050
        %4090 = vmatpush.msra.mxu0 %v4049
        %4091 = vmatpush.msra.mxu0 %v4048
        %4092 = vmatmul.f32.gmra.mxu0 %v1563
        %v4093 = vpop.f32.mrf.mxu0
        %v4094 = vadd.f32 0.0, %v4093
        %4095 = vdwg.mxu0
        %v4097 = vrot.slane %v4094, 4
        %v4099 = vsel %vm863, %v4074, %v4097
        %v4100 = vmul.f32 %v4099, 0.0625
        %v4101 = vpack.c.bf16 %v4100, %v4100
        %v4102 = vld [vmem:[%s17] sm:$0xf]
        %v4103 = vld [vmem:[%s17 + $0x4] sm:$0xf]
        %v4104 = vld [vmem:[%s17 + $0x8] sm:$0xf]
        %v4105 = vld [vmem:[%s17 + $0xc] sm:$0xf]
        %v4106 = vld [vmem:[%s17 + $0x10] sm:$0xf]
        %v4107 = vld [vmem:[%s17 + $0x14] sm:$0xf]
        %v4108 = vld [vmem:[%s17 + $0x18] sm:$0xf]
        %v4109 = vld [vmem:[%s17 + $0x1c] sm:$0xf]
        %v4110 = vld [vmem:[%s17 + $0x20] sm:$0xf]
        %v4111 = vld [vmem:[%s17 + $0x24] sm:$0xf]
        %v4112 = vld [vmem:[%s17 + $0x28] sm:$0xf]
        %v4113 = vld [vmem:[%s17 + $0x2c] sm:$0xf]
        %v4114 = vld [vmem:[%s17 + $0x30] sm:$0xf]
        %v4115 = vld [vmem:[%s17 + $0x34] sm:$0xf]
        %v4116 = vld [vmem:[%s17 + $0x38] sm:$0xf]
        %v4117 = vld [vmem:[%s17 + $0x3c] sm:$0xf]
        %v4118 = vperm.slane %v636, 1
        %v4135 = vunpack.c.l.b16 %v4102
        %v4136 = vunpack.c.l.b16 %v4103
        %v4137 = vunpack.c.l.b16 %v4104
        %v4138 = vunpack.c.l.b16 %v4105
        %v4139 = vunpack.c.l.b16 %v4106
        %v4140 = vunpack.c.l.b16 %v4107
        %v4141 = vunpack.c.l.b16 %v4108
        %v4142 = vunpack.c.l.b16 %v4109
        %v4143 = vunpack.c.l.b16 %v4110
        %v4144 = vunpack.c.l.b16 %v4111
        %v4145 = vunpack.c.l.b16 %v4112
        %v4146 = vunpack.c.l.b16 %v4113
        %v4147 = vunpack.c.l.b16 %v4114
        %v4148 = vunpack.c.l.b16 %v4115
        %v4149 = vunpack.c.l.b16 %v4116
        %v4150 = vunpack.c.l.b16 %v4117
        %v4151 = vpack.c.b16 %v4136, %v4135
        %v4152 = vpack.c.b16 %v4138, %v4137
        %v4153 = vpack.c.b16 %v4140, %v4139
        %v4154 = vpack.c.b16 %v4142, %v4141
        %v4155 = vpack.c.b16 %v4144, %v4143
        %v4156 = vpack.c.b16 %v4146, %v4145
        %v4157 = vpack.c.b16 %v4148, %v4147
        %v4158 = vpack.c.b16 %v4150, %v4149
        %4167 = vmatpush.bf16.msra.mxu0 %v4158
        %4168 = vmatpush.bf16.msra.mxu0 %v4157
        %4169 = vmatpush.bf16.msra.mxu0 %v4156
        %4170 = vmatpush.bf16.msra.mxu0 %v4155
        %4171 = vmatpush.bf16.msra.mxu0 %v4154
        %4172 = vmatpush.bf16.msra.mxu0 %v4153
        %4173 = vmatpush.bf16.msra.mxu0 %v4152
        %4174 = vmatpush.bf16.msra.mxu0 %v4151
        %4175 = vmatmul.bf16.gmra.mxu0 %v4101
        %v4176 = vpop.f32.mrf.mxu0
        %v4177 = vadd.f32 %v4118, %v4176
        %v4178 = vpop.f32.mrf.mxu0
        %4179 = vdwg.mxu0
        %4180 = vst [vmem:[%s623] sm:$0xf] %v4177
        %s4181 = scalar_lea.vmem %s623, 4 [#allocation5]
        %4182 = vst [vmem:[%s4181 - $0x4] sm:$0xf0] %v4177
        %s4183 = sand.u32 %s448, 1
        %s4184 = scalar_lea.sflag [#allocation4], %s4183
        %s4185 = sand.u32 %s448, 1
        %s4186 = smul.addr %s4185, 8
        %s4187 = scalar_lea.vmem [#allocation5], %s4186
        // Predicated region
        $region101: #{tpu_custom_call.1} parent=95 // pred_check
          %p4188 = pneg %p458
        $region102: #{tpu_custom_call.1} parent=95 // pred_check_branch
          %4190 = sbr.rel (%p4188) target = $region104
        $region103: #{tpu_custom_call.1} parent=95 // pred_region
          %s4191 = smul.u32 2, %s36
          %4193 = vsyncadd %s4184, 0
          %s4194 = smul.addr %s4191, 4
          %s4195 = scalar_lea.hbm %s19, %s4194
          %s4196 = sshll.u32 %s4187, 4
          %s4197 = int_to_ptr.vmem [resolvable:$true] %s4196
          %s4198 = sshll.u32 %s4195, 4
          %s4199 = int_to_ptr.hbm [resolvable:$true] %s4198
          %4204 = dma.vmem_to_hbm [thread:$0]  %s4197, 128, %s4199, %s4184, 64, 64, 4
        $region104: #{tpu_custom_call.1} parent=95 // pred_fallthru
          _
      $region96: #{tpu_custom_call.1} parent=5 // pred_fallthru
        _
      %p4205 = scmp.le.s32.totalorder 2, %s31
      // Predicated region
      $region105: #{tpu_custom_call.1} parent=5 // pred_check
        %p4206 = pneg %p4205
      $region106: #{tpu_custom_call.1} parent=5 // pred_check_branch
        %4208 = sbr.rel (%p4206) target = $region108
      $region107: #{tpu_custom_call.1} parent=5 // pred_region
        %s4209 = ssub.s32 %s31, 2
        // Predicated region
        $region109: #{tpu_custom_call.1} parent=107 // pred_check
          %p4210 = pneg %p464
        $region110: #{tpu_custom_call.1} parent=107 // pred_check_branch
          %4212 = sbr.rel (%p4210) target = $region112
        $region111: #{tpu_custom_call.1} parent=107 // pred_region
          %s4213 = sand.u32 %s449, 1
          %s4214 = scalar_lea.sflag [#allocation4], %s4213
          %s4215 = sand.u32 %s449, 1
          %s4216 = smul.addr %s4215, 8
          %s4217 = scalar_lea.vmem [#allocation5], %s4216
          %4219 = dma.done %s4214, 128
        $region112: #{tpu_custom_call.1} parent=107 // pred_fallthru
          _
      $region108: #{tpu_custom_call.1} parent=5 // pred_fallthru
        _
    $region6: #{tpu_custom_call.1} parent=1 // loop_footer
      %s35 = sadd.s32 1, %s31
    $region7: #{tpu_custom_call.1} parent=1 // loop_footer_branch
      %30 = sbr.rel target = $region3
    $region8: #{tpu_custom_call.1} parent=1 // loop_exit
      _
    %4220 = vsyncpa [#allocation3], 1
    %s4221 = scalar_lea.sflag [#allocation3], 1
    %4222 = vsyncpa %s4221, 1
    %4223 = vsyncpa [#allocation4], 1
    %s4224 = scalar_lea.sflag [#allocation4], 1
    %4225 = vsyncpa %s4224, 1

</llo_original>
